<compile_context>
chip_gen: v6e
topology: v6e:2x2x1
jax: 0.10.0
libtpu: 0.0.40
codegen_flags: <defaults>
</compile_context>

<pallas_src>
import functools

import jax
import jax.numpy as jnp
from jax import lax
from jax.experimental import pallas as pl
from jax.experimental.pallas import tpu as pltpu


def _layernorm(x, gamma, beta, eps=1e-5):
    # x: (N, C) f32; gamma/beta: (1, C) f32
    mean = jnp.mean(x, axis=-1, keepdims=True)
    var = jnp.mean((x - mean) ** 2, axis=-1, keepdims=True)
    xn = (x - mean) * lax.rsqrt(var + eps)
    return xn * gamma + beta


def decoder_kernel(
    x_ref,
    ln1g_ref, ln1b_ref,
    wq_ref, wk_ref, wv_ref,
    wproj_ref, bproj_ref,
    ln2g_ref, ln2b_ref,
    w1_ref, b1_ref, w2_ref, b2_ref,
    out_ref,
    *,
    n_heads: int,
    batch: int,
):
    N, C = x_ref.shape            # N = B*T
    B = batch
    T = N // B
    H = n_heads
    scale = float(C) ** -0.5      # NOTE: torch ref scales by n_embeds**-0.5 (not head_size**-0.5)

    x = x_ref[...]                                            # (N, C) f32

    # ---------------- self-attention branch ----------------
    xn = _layernorm(x, ln1g_ref[...], ln1b_ref[...])          # (N, C) f32

    # (B*H, T, C) activation stack: per-batch slab (sublane slice at a native
    # 8-row boundary) broadcast over heads, stacked along the untiled leading
    # axis.  No lane shuffles, no reshapes.
    xhb = jnp.concatenate(
        [jnp.broadcast_to(xn[b * T:(b + 1) * T, :].astype(jnp.bfloat16), (H, T, C))
         for b in range(B)],
        axis=0)                                               # (B*H, T, C) bf16

    # Head-major batched projections (weights pre-stacked on host as (B*H, C, hs)).
    q = jnp.einsum('ntc,ncd->ntd', xhb, wq_ref[...],
                   preferred_element_type=jnp.float32)        # (B*H, T, hs) f32
    k = jnp.einsum('ntc,ncd->ntd', xhb, wk_ref[...],
                   preferred_element_type=jnp.float32)
    v = jnp.einsum('ntc,ncd->ntd', xhb, wv_ref[...],
                   preferred_element_type=jnp.float32)

    # Attention scores, causal mask, softmax (f32 elementwise).
    s = jnp.einsum('nqd,nkd->nqk',
                   q.astype(jnp.bfloat16), k.astype(jnp.bfloat16),
                   preferred_element_type=jnp.float32) * scale  # (B*H, T, T)

    row = lax.broadcasted_iota(jnp.int32, (T, T), 0)
    col = lax.broadcasted_iota(jnp.int32, (T, T), 1)
    causal = col <= row                                        # (T, T) tril mask
    s = jnp.where(causal[None, :, :], s, -1e30)                # finite fill value
    s = s - jnp.max(s, axis=-1, keepdims=True)
    p = jnp.exp(s)
    p = p * pl.reciprocal(jnp.sum(p, axis=-1, keepdims=True), approx=True)

    o = jnp.einsum('nqk,nkd->nqd',
                   p.astype(jnp.bfloat16), v.astype(jnp.bfloat16),
                   preferred_element_type=jnp.float32)         # (B*H, T, hs)

    # Per-head output projection, accumulated over heads (replaces concat+proj).
    ctx = jnp.einsum('ntd,ndc->ntc',
                     o.astype(jnp.bfloat16), wproj_ref[...],
                     preferred_element_type=jnp.float32)       # (B*H, T, C)
    sa = jnp.concatenate(
        [sum(ctx[b * H + h] for h in range(H)) for b in range(B)], axis=0)  # (N, C)
    sa = sa + bproj_ref[...]

    x1 = x + sa                                                # residual 1 (f32)

    # ---------------- feed-forward branch ----------------
    xn2 = _layernorm(x1, ln2g_ref[...], ln2b_ref[...])         # (N, C) f32
    h1 = jnp.dot(xn2.astype(jnp.bfloat16), w1_ref[...],
                 preferred_element_type=jnp.float32) + b1_ref[...]   # (N, 4C)
    h1 = jnp.maximum(h1, 0.0)                                         # ReLU in f32
    ff = jnp.dot(h1.astype(jnp.bfloat16), w2_ref[...],
                 preferred_element_type=jnp.float32) + b2_ref[...]    # (N, C)

    out_ref[...] = x1 + ff                                      # residual 2


def decoder_forward(x, params, n_heads):
    """x: (B, T, C) float32."""
    B, T, C = x.shape
    H4 = 4 * C
    hs = C // n_heads
    BH = B * n_heads
    N = B * T

    # ---- host-side (free) weight re-layout ----
    # QKV: (C, C) with head-h columns [h*hs:(h+1)*hs]  ->  (H, C, hs), tiled to (B*H, C, hs)
    def qkv_stack(w):
        w_h = w.reshape(C, n_heads, hs).transpose(1, 0, 2)
        return jnp.tile(w_h, (B, 1, 1)).astype(jnp.bfloat16)

    wq_s = qkv_stack(params["wq"])
    wk_s = qkv_stack(params["wk"])
    wv_s = qkv_stack(params["wv"])
    # proj: (C, C) with head-h rows [h*hs:(h+1)*hs]  ->  (H, hs, C), tiled to (B*H, hs, C)
    wproj_s = jnp.tile(params["wproj"].reshape(n_heads, hs, C),
                       (B, 1, 1)).astype(jnp.bfloat16)
    w1_b = params["w1"].astype(jnp.bfloat16)
    w2_b = params["w2"].astype(jnp.bfloat16)

    x2d = x.reshape(N, C)

    def fixed(shape):
        nd = len(shape)
        return pl.BlockSpec(shape, lambda i, _nd=nd: (0,) * _nd)

    in_specs = [
        fixed((N, C)),                                   # x
        fixed((1, C)), fixed((1, C)),                    # ln1 gamma/beta
        fixed((BH, C, hs)), fixed((BH, C, hs)), fixed((BH, C, hs)),  # Wq, Wk, Wv (head-major)
        fixed((BH, hs, C)), fixed((1, C)),               # Wproj (head-major), bproj
        fixed((1, C)), fixed((1, C)),                    # ln2 gamma/beta
        fixed((C, H4)), fixed((1, H4)),                  # W1, b1
        fixed((H4, C)), fixed((1, C)),                   # W2, b2
    ]

    kernel = functools.partial(decoder_kernel, n_heads=n_heads, batch=B)

    args = (x2d,
            params["ln1_g"], params["ln1_b"],
            wq_s, wk_s, wv_s,
            wproj_s, params["bproj"],
            params["ln2_g"], params["ln2_b"],
            w1_b, params["b1"], w2_b, params["b2"])

    flops = (3 * 2 * BH * T * C * hs          # q/k/v projections
             + 2 * 2 * BH * T * T * hs        # scores + attn @ v
             + 2 * BH * T * hs * C            # output projection
             + 2 * N * C * H4 + 2 * N * H4 * C)  # FFN
    transcendentals = BH * T * T + BH * T + 2 * N     # exp + recip + rsqrt
    bytes_accessed = sum(int(a.size) * a.dtype.itemsize for a in args) + N * C * 4

    out2d = pl.pallas_call(
        kernel,
        out_shape=jax.ShapeDtypeStruct((N, C), jnp.float32),
        grid_spec=pltpu.PrefetchScalarGridSpec(
            num_scalar_prefetch=0,
            grid=(1,),                       # single step: whole batch at once
            in_specs=in_specs,
            out_specs=fixed((N, C)),
        ),
        compiler_params=pltpu.CompilerParams(
            # Single grid step; for v7x multi-core at larger B one would use
            # grid=(num_cores,) with ("parallel",) and split the batch.
            dimension_semantics=("arbitrary",),
        ),
        cost_estimate=pl.CostEstimate(
            flops=flops,
            transcendentals=transcendentals,
            bytes_accessed=bytes_accessed,
        ),
    )(*args)
    return out2d.reshape(B, T, C)


# ------------------------- pure-JAX reference ------------------------------
def decoder_ref(x, params, n_heads):
    B, T, C = x.shape
    hs = C // n_heads

    def ln(z, g, b, eps=1e-5):
        m = z.mean(-1, keepdims=True)
        v = ((z - m) ** 2).mean(-1, keepdims=True)
        return (z - m) / jnp.sqrt(v + eps) * g + b

    xn = ln(x, params["ln1_g"], params["ln1_b"])
    q = xn @ params["wq"]
    k = xn @ params["wk"]
    v = xn @ params["wv"]
    outs = []
    mask = jnp.tril(jnp.ones((T, T), bool))
    for h in range(n_heads):
        qh = q[..., h * hs:(h + 1) * hs]
        kh = k[..., h * hs:(h + 1) * hs]
        vh = v[..., h * hs:(h + 1) * hs]
        wei = jnp.einsum("btd,bsd->bts", qh, kh) * (C ** -0.5)
        wei = jnp.where(mask, wei, -jnp.inf)
        wei = jax.nn.softmax(wei, axis=-1)
        outs.append(jnp.einsum("bts,bsd->btd", wei, vh))
    sa = jnp.concatenate(outs, axis=-1) @ params["wproj"] + params["bproj"]
    x1 = x + sa
    xn2 = ln(x1, params["ln2_g"], params["ln2_b"])
    ff = jax.nn.relu(xn2 @ params["w1"] + params["b1"]) @ params["w2"] + params["b2"]
    return x1 + ff


# ------------------------------ main ---------------------------------------
if __name__ == "__main__":
    B, T = 2, 8                 # batch, sequence (block_size = 8)
    n_embeds, n_heads = 32, 4   # head_size = 8
    C, H = n_embeds, 4 * n_embeds

    key = jax.random.PRNGKey(0)
    keys = jax.random.split(key, 16)

    def init(k, shape, fan_in):
        return (jax.random.normal(k, shape, jnp.float32) * (fan_in ** -0.5)).astype(jnp.float32)

    params = {
        "ln1_g": jnp.ones((1, C), jnp.float32),
        "ln1_b": jnp.zeros((1, C), jnp.float32),
        "wq": init(keys[0], (C, C), C),
        "wk": init(keys[1], (C, C), C),
        "wv": init(keys[2], (C, C), C),
        "wproj": init(keys[3], (C, C), C),
        "bproj": init(keys[4], (1, C), C),
        "ln2_g": jnp.ones((1, C), jnp.float32),
        "ln2_b": jnp.zeros((1, C), jnp.float32),
        "w1": init(keys[5], (C, H), C),
        "b1": init(keys[6], (1, H), C),
        "w2": init(keys[7], (H, C), H),
        "b2": init(keys[8], (1, C), H),
    }

    x = jax.random.normal(keys[9], (B, T, C), jnp.float32)

    out = decoder_forward(x, params, n_heads)
    out = jax.block_until_ready(out)

    ref = decoder_ref(x, params, n_heads)
    assert out.shape == (B, T, C)
    # Tolerance covers bf16 MXU operands + approx reciprocal; structural errors
    # (wrong head routing, masking, etc.) would be O(1) and still fail.
    assert jnp.allclose(out, ref, atol=5e-2, rtol=5e-2), "mismatch vs reference"

    print("KERNEL_OK")
</pallas_src>

<mosaic_0001>
module attributes {stable_mosaic.version = 11 : i64} {
  func.func @decoder_kernel(%arg0: i32, %arg1: memref<16x32xf32, #tpu.memory_space<vmem>>, %arg2: memref<1x32xf32, #tpu.memory_space<vmem>>, %arg3: memref<1x32xf32, #tpu.memory_space<vmem>>, %arg4: memref<8x32x8xbf16, #tpu.memory_space<vmem>>, %arg5: memref<8x32x8xbf16, #tpu.memory_space<vmem>>, %arg6: memref<8x32x8xbf16, #tpu.memory_space<vmem>>, %arg7: memref<8x8x32xbf16, #tpu.memory_space<vmem>>, %arg8: memref<1x32xf32, #tpu.memory_space<vmem>>, %arg9: memref<1x32xf32, #tpu.memory_space<vmem>>, %arg10: memref<1x32xf32, #tpu.memory_space<vmem>>, %arg11: memref<32x128xbf16, #tpu.memory_space<vmem>>, %arg12: memref<1x128xf32, #tpu.memory_space<vmem>>, %arg13: memref<128x32xbf16, #tpu.memory_space<vmem>>, %arg14: memref<1x32xf32, #tpu.memory_space<vmem>>, %arg15: memref<16x32xf32, #tpu.memory_space<vmem>>) attributes {dimension_semantics = [#tpu.dimension_semantics<arbitrary>], iteration_bounds = array<i64: 1>, scalar_prefetch = 0 : i64, scratch_operands = 0 : i64, tpu.core_type = #tpu.core_type<tc>, window_params = [{pipeline_mode = #tpu.pipeline_mode<synchronous>, transform_indices = @transform_0, window_bounds = array<i64: 16, 32>}, {pipeline_mode = #tpu.pipeline_mode<synchronous>, transform_indices = @transform_1, window_bounds = array<i64: 1, 32>}, {pipeline_mode = #tpu.pipeline_mode<synchronous>, transform_indices = @transform_2, window_bounds = array<i64: 1, 32>}, {pipeline_mode = #tpu.pipeline_mode<synchronous>, transform_indices = @transform_3, window_bounds = array<i64: 8, 32, 8>}, {pipeline_mode = #tpu.pipeline_mode<synchronous>, transform_indices = @transform_4, window_bounds = array<i64: 8, 32, 8>}, {pipeline_mode = #tpu.pipeline_mode<synchronous>, transform_indices = @transform_5, window_bounds = array<i64: 8, 32, 8>}, {pipeline_mode = #tpu.pipeline_mode<synchronous>, transform_indices = @transform_6, window_bounds = array<i64: 8, 8, 32>}, {pipeline_mode = #tpu.pipeline_mode<synchronous>, transform_indices = @transform_7, window_bounds = array<i64: 1, 32>}, {pipeline_mode = #tpu.pipeline_mode<synchronous>, transform_indices = @transform_8, window_bounds = array<i64: 1, 32>}, {pipeline_mode = #tpu.pipeline_mode<synchronous>, transform_indices = @transform_9, window_bounds = array<i64: 1, 32>}, {pipeline_mode = #tpu.pipeline_mode<synchronous>, transform_indices = @transform_10, window_bounds = array<i64: 32, 128>}, {pipeline_mode = #tpu.pipeline_mode<synchronous>, transform_indices = @transform_11, window_bounds = array<i64: 1, 128>}, {pipeline_mode = #tpu.pipeline_mode<synchronous>, transform_indices = @transform_12, window_bounds = array<i64: 128, 32>}, {pipeline_mode = #tpu.pipeline_mode<synchronous>, transform_indices = @transform_13, window_bounds = array<i64: 1, 32>}, {pipeline_mode = #tpu.pipeline_mode<synchronous>, transform_indices = @transform_14, window_bounds = array<i64: 16, 32>}]} {
    %c0 = arith.constant 0 : index
    %c0_0 = arith.constant 0 : index
    %0 = vector.load %arg1[%c0, %c0_0] : memref<16x32xf32, #tpu.memory_space<vmem>>, vector<16x32xf32>
    %c0_1 = arith.constant 0 : index
    %c0_2 = arith.constant 0 : index
    %1 = vector.load %arg2[%c0_1, %c0_2] : memref<1x32xf32, #tpu.memory_space<vmem>>, vector<1x32xf32>
    %c0_3 = arith.constant 0 : index
    %c0_4 = arith.constant 0 : index
    %2 = vector.load %arg3[%c0_3, %c0_4] : memref<1x32xf32, #tpu.memory_space<vmem>>, vector<1x32xf32>
    %cst = arith.constant dense<0.000000e+00> : vector<16xf32>
    %3 = vector.multi_reduction <add>, %0, %cst [1] : vector<16x32xf32> to vector<16xf32>
    %4 = vector.shape_cast %3 : vector<16xf32> to vector<16x1xf32>
    %cst_5 = arith.constant 3.200000e+01 : f32
    %5 = vector.broadcast %cst_5 : f32 to vector<16x1xf32>
    %6 = arith.divf %4, %5 : vector<16x1xf32>
    %7 = vector.broadcast %6 : vector<16x1xf32> to vector<16x32xf32>
    %8 = arith.subf %0, %7 : vector<16x32xf32>
    %9 = arith.mulf %8, %8 : vector<16x32xf32>
    %cst_6 = arith.constant dense<0.000000e+00> : vector<16xf32>
    %10 = vector.multi_reduction <add>, %9, %cst_6 [1] : vector<16x32xf32> to vector<16xf32>
    %11 = vector.shape_cast %10 : vector<16xf32> to vector<16x1xf32>
    %cst_7 = arith.constant 3.200000e+01 : f32
    %12 = vector.broadcast %cst_7 : f32 to vector<16x1xf32>
    %13 = arith.divf %11, %12 : vector<16x1xf32>
    %14 = vector.broadcast %6 : vector<16x1xf32> to vector<16x32xf32>
    %15 = arith.subf %0, %14 : vector<16x32xf32>
    %cst_8 = arith.constant 9.99999974E-6 : f32
    %16 = vector.broadcast %cst_8 : f32 to vector<16x1xf32>
    %17 = arith.addf %13, %16 : vector<16x1xf32>
    %18 = math.rsqrt %17 : vector<16x1xf32>
    %19 = vector.broadcast %18 : vector<16x1xf32> to vector<16x32xf32>
    %20 = arith.mulf %15, %19 : vector<16x32xf32>
    %21 = vector.broadcast %1 : vector<1x32xf32> to vector<16x32xf32>
    %22 = arith.mulf %20, %21 : vector<16x32xf32>
    %23 = vector.broadcast %2 : vector<1x32xf32> to vector<16x32xf32>
    %24 = arith.addf %22, %23 : vector<16x32xf32>
    %25 = vector.extract_strided_slice %24 {offsets = [0, 0], sizes = [8, 32], strides = [1, 1]} : vector<16x32xf32> to vector<8x32xf32>
    %26 = arith.truncf %25 : vector<8x32xf32> to vector<8x32xbf16>
    %27 = vector.shape_cast %26 : vector<8x32xbf16> to vector<1x8x32xbf16>
    %28 = vector.broadcast %27 : vector<1x8x32xbf16> to vector<4x8x32xbf16>
    %29 = vector.extract_strided_slice %24 {offsets = [8, 0], sizes = [8, 32], strides = [1, 1]} : vector<16x32xf32> to vector<8x32xf32>
    %30 = arith.truncf %29 : vector<8x32xf32> to vector<8x32xbf16>
    %31 = vector.shape_cast %30 : vector<8x32xbf16> to vector<1x8x32xbf16>
    %32 = vector.broadcast %31 : vector<1x8x32xbf16> to vector<4x8x32xbf16>
    %33 = tpu.concatenate %28, %32 in 0 : vector<4x8x32xbf16>, vector<4x8x32xbf16> -> vector<8x8x32xbf16>
    %c0_9 = arith.constant 0 : index
    %c0_10 = arith.constant 0 : index
    %c0_11 = arith.constant 0 : index
    %34 = vector.load %arg4[%c0_9, %c0_10, %c0_11] : memref<8x32x8xbf16, #tpu.memory_space<vmem>>, vector<8x32x8xbf16>
    "tpu.trace_start"() <{level = 10 : i32, message = "ntc,ncd->ntd"}> : () -> ()
    %cst_12 = arith.constant dense<0.000000e+00> : vector<8x8x8xf32>
    %35 = tpu.matmul %33, %34, %cst_12 {dimension_numbers = #tpu.dot_dimension_numbers<[2], [1], [1], [2], [0, 0, 0, 1, 1, 2], [0], [0]>} : vector<8x8x32xbf16>, vector<8x32x8xbf16>, vector<8x8x8xf32> -> vector<8x8x8xf32>
    "tpu.trace_stop"() : () -> ()
    %c0_13 = arith.constant 0 : index
    %c0_14 = arith.constant 0 : index
    %c0_15 = arith.constant 0 : index
    %36 = vector.load %arg5[%c0_13, %c0_14, %c0_15] : memref<8x32x8xbf16, #tpu.memory_space<vmem>>, vector<8x32x8xbf16>
    "tpu.trace_start"() <{level = 10 : i32, message = "ntc,ncd->ntd"}> : () -> ()
    %cst_16 = arith.constant dense<0.000000e+00> : vector<8x8x8xf32>
    %37 = tpu.matmul %33, %36, %cst_16 {dimension_numbers = #tpu.dot_dimension_numbers<[2], [1], [1], [2], [0, 0, 0, 1, 1, 2], [0], [0]>} : vector<8x8x32xbf16>, vector<8x32x8xbf16>, vector<8x8x8xf32> -> vector<8x8x8xf32>
    "tpu.trace_stop"() : () -> ()
    %c0_17 = arith.constant 0 : index
    %c0_18 = arith.constant 0 : index
    %c0_19 = arith.constant 0 : index
    %38 = vector.load %arg6[%c0_17, %c0_18, %c0_19] : memref<8x32x8xbf16, #tpu.memory_space<vmem>>, vector<8x32x8xbf16>
    "tpu.trace_start"() <{level = 10 : i32, message = "ntc,ncd->ntd"}> : () -> ()
    %cst_20 = arith.constant dense<0.000000e+00> : vector<8x8x8xf32>
    %39 = tpu.matmul %33, %38, %cst_20 {dimension_numbers = #tpu.dot_dimension_numbers<[2], [1], [1], [2], [0, 0, 0, 1, 1, 2], [0], [0]>} : vector<8x8x32xbf16>, vector<8x32x8xbf16>, vector<8x8x8xf32> -> vector<8x8x8xf32>
    "tpu.trace_stop"() : () -> ()
    %40 = arith.truncf %35 : vector<8x8x8xf32> to vector<8x8x8xbf16>
    %41 = arith.truncf %37 : vector<8x8x8xf32> to vector<8x8x8xbf16>
    "tpu.trace_start"() <{level = 10 : i32, message = "nqd,nkd->nqk"}> : () -> ()
    %cst_21 = arith.constant dense<0.000000e+00> : vector<8x8x8xf32>
    %42 = tpu.matmul %40, %41, %cst_21 {dimension_numbers = #tpu.dot_dimension_numbers<[2], [2], [1], [1], [0, 0, 0, 1, 1, 1], [0], [0]>} : vector<8x8x8xbf16>, vector<8x8x8xbf16>, vector<8x8x8xf32> -> vector<8x8x8xf32>
    "tpu.trace_stop"() : () -> ()
    %cst_22 = arith.constant 0.176776692 : f32
    %43 = vector.broadcast %cst_22 : f32 to vector<8x8x8xf32>
    %44 = arith.mulf %42, %43 : vector<8x8x8xf32>
    %45 = tpu.iota {dimensions = array<i32: 0>} : vector<8x8xi32>
    %46 = tpu.iota {dimensions = array<i32: 1>} : vector<8x8xi32>
    %47 = arith.cmpi sle, %46, %45 : vector<8x8xi32>
    %48 = vector.shape_cast %47 : vector<8x8xi1> to vector<1x8x8xi1>
    %cst_23 = arith.constant -1.000000e+30 : f32
    %49 = vector.shape_cast %48 : vector<1x8x8xi1> to vector<1x8x8xi1>
    %50 = vector.broadcast %49 : vector<1x8x8xi1> to vector<8x8x8xi1>
    %51 = vector.broadcast %cst_23 : f32 to vector<8x8x8xf32>
    %52 = arith.select %50, %44, %51 : vector<8x8x8xi1>, vector<8x8x8xf32>
    %cst_24 = arith.constant dense<0xFF800000> : vector<8x8xf32>
    %53 = vector.multi_reduction <maximumf>, %52, %cst_24 [2] : vector<8x8x8xf32> to vector<8x8xf32>
    %54 = vector.shape_cast %53 : vector<8x8xf32> to vector<8x8x1xf32>
    %55 = vector.broadcast %54 : vector<8x8x1xf32> to vector<8x8x8xf32>
    %56 = arith.subf %52, %55 : vector<8x8x8xf32>
    %57 = math.exp %56 : vector<8x8x8xf32>
    %cst_25 = arith.constant dense<0.000000e+00> : vector<8x8xf32>
    %58 = vector.multi_reduction <add>, %57, %cst_25 [2] : vector<8x8x8xf32> to vector<8x8xf32>
    %59 = vector.shape_cast %58 : vector<8x8xf32> to vector<8x8x1xf32>
    %60 = tpu.reciprocal %59 {approx = true} : vector<8x8x1xf32> -> vector<8x8x1xf32>
    %61 = vector.broadcast %60 : vector<8x8x1xf32> to vector<8x8x8xf32>
    %62 = arith.mulf %57, %61 : vector<8x8x8xf32>
    %63 = arith.truncf %62 : vector<8x8x8xf32> to vector<8x8x8xbf16>
    %64 = arith.truncf %39 : vector<8x8x8xf32> to vector<8x8x8xbf16>
    "tpu.trace_start"() <{level = 10 : i32, message = "nqk,nkd->nqd"}> : () -> ()
    %cst_26 = arith.constant dense<0.000000e+00> : vector<8x8x8xf32>
    %65 = tpu.matmul %63, %64, %cst_26 {dimension_numbers = #tpu.dot_dimension_numbers<[2], [1], [1], [2], [0, 0, 0, 1, 1, 2], [0], [0]>} : vector<8x8x8xbf16>, vector<8x8x8xbf16>, vector<8x8x8xf32> -> vector<8x8x8xf32>
    "tpu.trace_stop"() : () -> ()
    %66 = arith.truncf %65 : vector<8x8x8xf32> to vector<8x8x8xbf16>
    %c0_27 = arith.constant 0 : index
    %c0_28 = arith.constant 0 : index
    %c0_29 = arith.constant 0 : index
    %67 = vector.load %arg7[%c0_27, %c0_28, %c0_29] : memref<8x8x32xbf16, #tpu.memory_space<vmem>>, vector<8x8x32xbf16>
    "tpu.trace_start"() <{level = 10 : i32, message = "ntd,ndc->ntc"}> : () -> ()
    %cst_30 = arith.constant dense<0.000000e+00> : vector<8x8x32xf32>
    %68 = tpu.matmul %66, %67, %cst_30 {dimension_numbers = #tpu.dot_dimension_numbers<[2], [1], [1], [2], [0, 0, 0, 1, 1, 2], [0], [0]>} : vector<8x8x8xbf16>, vector<8x8x32xbf16>, vector<8x8x32xf32> -> vector<8x8x32xf32>
    "tpu.trace_stop"() : () -> ()
    %69 = vector.extract_strided_slice %68 {offsets = [0, 0, 0], sizes = [1, 8, 32], strides = [1, 1, 1]} : vector<8x8x32xf32> to vector<1x8x32xf32>
    %70 = vector.shape_cast %69 : vector<1x8x32xf32> to vector<8x32xf32>
    %cst_31 = arith.constant 0.000000e+00 : f32
    %71 = vector.broadcast %cst_31 : f32 to vector<8x32xf32>
    %72 = arith.addf %71, %70 : vector<8x32xf32>
    %73 = vector.extract_strided_slice %68 {offsets = [1, 0, 0], sizes = [1, 8, 32], strides = [1, 1, 1]} : vector<8x8x32xf32> to vector<1x8x32xf32>
    %74 = vector.shape_cast %73 : vector<1x8x32xf32> to vector<8x32xf32>
    %75 = arith.addf %72, %74 : vector<8x32xf32>
    %76 = vector.extract_strided_slice %68 {offsets = [2, 0, 0], sizes = [1, 8, 32], strides = [1, 1, 1]} : vector<8x8x32xf32> to vector<1x8x32xf32>
    %77 = vector.shape_cast %76 : vector<1x8x32xf32> to vector<8x32xf32>
    %78 = arith.addf %75, %77 : vector<8x32xf32>
    %79 = vector.extract_strided_slice %68 {offsets = [3, 0, 0], sizes = [1, 8, 32], strides = [1, 1, 1]} : vector<8x8x32xf32> to vector<1x8x32xf32>
    %80 = vector.shape_cast %79 : vector<1x8x32xf32> to vector<8x32xf32>
    %81 = arith.addf %78, %80 : vector<8x32xf32>
    %82 = vector.extract_strided_slice %68 {offsets = [4, 0, 0], sizes = [1, 8, 32], strides = [1, 1, 1]} : vector<8x8x32xf32> to vector<1x8x32xf32>
    %83 = vector.shape_cast %82 : vector<1x8x32xf32> to vector<8x32xf32>
    %cst_32 = arith.constant 0.000000e+00 : f32
    %84 = vector.broadcast %cst_32 : f32 to vector<8x32xf32>
    %85 = arith.addf %84, %83 : vector<8x32xf32>
    %86 = vector.extract_strided_slice %68 {offsets = [5, 0, 0], sizes = [1, 8, 32], strides = [1, 1, 1]} : vector<8x8x32xf32> to vector<1x8x32xf32>
    %87 = vector.shape_cast %86 : vector<1x8x32xf32> to vector<8x32xf32>
    %88 = arith.addf %85, %87 : vector<8x32xf32>
    %89 = vector.extract_strided_slice %68 {offsets = [6, 0, 0], sizes = [1, 8, 32], strides = [1, 1, 1]} : vector<8x8x32xf32> to vector<1x8x32xf32>
    %90 = vector.shape_cast %89 : vector<1x8x32xf32> to vector<8x32xf32>
    %91 = arith.addf %88, %90 : vector<8x32xf32>
    %92 = vector.extract_strided_slice %68 {offsets = [7, 0, 0], sizes = [1, 8, 32], strides = [1, 1, 1]} : vector<8x8x32xf32> to vector<1x8x32xf32>
    %93 = vector.shape_cast %92 : vector<1x8x32xf32> to vector<8x32xf32>
    %94 = arith.addf %91, %93 : vector<8x32xf32>
    %95 = tpu.concatenate %81, %94 in 0 : vector<8x32xf32>, vector<8x32xf32> -> vector<16x32xf32>
    %c0_33 = arith.constant 0 : index
    %c0_34 = arith.constant 0 : index
    %96 = vector.load %arg8[%c0_33, %c0_34] : memref<1x32xf32, #tpu.memory_space<vmem>>, vector<1x32xf32>
    %97 = vector.broadcast %96 : vector<1x32xf32> to vector<16x32xf32>
    %98 = arith.addf %95, %97 : vector<16x32xf32>
    %99 = arith.addf %0, %98 : vector<16x32xf32>
    %c0_35 = arith.constant 0 : index
    %c0_36 = arith.constant 0 : index
    %100 = vector.load %arg9[%c0_35, %c0_36] : memref<1x32xf32, #tpu.memory_space<vmem>>, vector<1x32xf32>
    %c0_37 = arith.constant 0 : index
    %c0_38 = arith.constant 0 : index
    %101 = vector.load %arg10[%c0_37, %c0_38] : memref<1x32xf32, #tpu.memory_space<vmem>>, vector<1x32xf32>
    %cst_39 = arith.constant dense<0.000000e+00> : vector<16xf32>
    %102 = vector.multi_reduction <add>, %99, %cst_39 [1] : vector<16x32xf32> to vector<16xf32>
    %103 = vector.shape_cast %102 : vector<16xf32> to vector<16x1xf32>
    %cst_40 = arith.constant 3.200000e+01 : f32
    %104 = vector.broadcast %cst_40 : f32 to vector<16x1xf32>
    %105 = arith.divf %103, %104 : vector<16x1xf32>
    %106 = vector.broadcast %105 : vector<16x1xf32> to vector<16x32xf32>
    %107 = arith.subf %99, %106 : vector<16x32xf32>
    %108 = arith.mulf %107, %107 : vector<16x32xf32>
    %cst_41 = arith.constant dense<0.000000e+00> : vector<16xf32>
    %109 = vector.multi_reduction <add>, %108, %cst_41 [1] : vector<16x32xf32> to vector<16xf32>
    %110 = vector.shape_cast %109 : vector<16xf32> to vector<16x1xf32>
    %cst_42 = arith.constant 3.200000e+01 : f32
    %111 = vector.broadcast %cst_42 : f32 to vector<16x1xf32>
    %112 = arith.divf %110, %111 : vector<16x1xf32>
    %113 = vector.broadcast %105 : vector<16x1xf32> to vector<16x32xf32>
    %114 = arith.subf %99, %113 : vector<16x32xf32>
    %cst_43 = arith.constant 9.99999974E-6 : f32
    %115 = vector.broadcast %cst_43 : f32 to vector<16x1xf32>
    %116 = arith.addf %112, %115 : vector<16x1xf32>
    %117 = math.rsqrt %116 : vector<16x1xf32>
    %118 = vector.broadcast %117 : vector<16x1xf32> to vector<16x32xf32>
    %119 = arith.mulf %114, %118 : vector<16x32xf32>
    %120 = vector.broadcast %100 : vector<1x32xf32> to vector<16x32xf32>
    %121 = arith.mulf %119, %120 : vector<16x32xf32>
    %122 = vector.broadcast %101 : vector<1x32xf32> to vector<16x32xf32>
    %123 = arith.addf %121, %122 : vector<16x32xf32>
    %124 = arith.truncf %123 : vector<16x32xf32> to vector<16x32xbf16>
    %c0_44 = arith.constant 0 : index
    %c0_45 = arith.constant 0 : index
    %125 = vector.load %arg11[%c0_44, %c0_45] : memref<32x128xbf16, #tpu.memory_space<vmem>>, vector<32x128xbf16>
    %cst_46 = arith.constant dense<0.000000e+00> : vector<16x128xf32>
    %126 = tpu.matmul %124, %125, %cst_46 {dimension_numbers = #tpu.dot_dimension_numbers<[1], [0], [0], [1], [0, 0, 1, 1], [], []>} : vector<16x32xbf16>, vector<32x128xbf16>, vector<16x128xf32> -> vector<16x128xf32>
    %c0_47 = arith.constant 0 : index
    %c0_48 = arith.constant 0 : index
    %127 = vector.load %arg12[%c0_47, %c0_48] : memref<1x128xf32, #tpu.memory_space<vmem>>, vector<1x128xf32>
    %128 = vector.broadcast %127 : vector<1x128xf32> to vector<16x128xf32>
    %129 = arith.addf %126, %128 : vector<16x128xf32>
    %cst_49 = arith.constant 0.000000e+00 : f32
    %130 = vector.broadcast %cst_49 : f32 to vector<16x128xf32>
    %131 = arith.maximumf %129, %130 : vector<16x128xf32>
    %132 = arith.truncf %131 : vector<16x128xf32> to vector<16x128xbf16>
    %c0_50 = arith.constant 0 : index
    %c0_51 = arith.constant 0 : index
    %133 = vector.load %arg13[%c0_50, %c0_51] : memref<128x32xbf16, #tpu.memory_space<vmem>>, vector<128x32xbf16>
    %cst_52 = arith.constant dense<0.000000e+00> : vector<16x32xf32>
    %134 = tpu.matmul %132, %133, %cst_52 {dimension_numbers = #tpu.dot_dimension_numbers<[1], [0], [0], [1], [0, 0, 1, 1], [], []>} : vector<16x128xbf16>, vector<128x32xbf16>, vector<16x32xf32> -> vector<16x32xf32>
    %c0_53 = arith.constant 0 : index
    %c0_54 = arith.constant 0 : index
    %135 = vector.load %arg14[%c0_53, %c0_54] : memref<1x32xf32, #tpu.memory_space<vmem>>, vector<1x32xf32>
    %136 = vector.broadcast %135 : vector<1x32xf32> to vector<16x32xf32>
    %137 = arith.addf %134, %136 : vector<16x32xf32>
    %138 = arith.addf %99, %137 : vector<16x32xf32>
    %c0_55 = arith.constant 0 : index
    %c0_56 = arith.constant 0 : index
    %139 = vector.load %arg15[%c0_55, %c0_56] : memref<16x32xf32, #tpu.memory_space<vmem>>, vector<16x32xf32>
    tpu.vector_store %arg15[%c0_55, %c0_56], %138 {strides = array<i32>} : memref<16x32xf32, #tpu.memory_space<vmem>>, vector<16x32xf32>,
    return
  }
  func.func @transform_0(%arg0: i32) -> (i32, i32) {
    %c0_i32 = arith.constant 0 : i32
    %c0_i32_0 = arith.constant 0 : i32
    %c0_i32_1 = arith.constant 0 : i32
    return %c0_i32, %c0_i32_0 : i32, i32
  }
  func.func @transform_1(%arg0: i32) -> (i32, i32) {
    %c0_i32 = arith.constant 0 : i32
    %c0_i32_0 = arith.constant 0 : i32
    %c0_i32_1 = arith.constant 0 : i32
    return %c0_i32, %c0_i32_0 : i32, i32
  }
  func.func @transform_2(%arg0: i32) -> (i32, i32) {
    %c0_i32 = arith.constant 0 : i32
    %c0_i32_0 = arith.constant 0 : i32
    %c0_i32_1 = arith.constant 0 : i32
    return %c0_i32, %c0_i32_0 : i32, i32
  }
  func.func @transform_3(%arg0: i32) -> (i32, i32, i32) {
    %c0_i32 = arith.constant 0 : i32
    %c0_i32_0 = arith.constant 0 : i32
    %c0_i32_1 = arith.constant 0 : i32
    %c0_i32_2 = arith.constant 0 : i32
    return %c0_i32, %c0_i32_0, %c0_i32_1 : i32, i32, i32
  }
  func.func @transform_4(%arg0: i32) -> (i32, i32, i32) {
    %c0_i32 = arith.constant 0 : i32
    %c0_i32_0 = arith.constant 0 : i32
    %c0_i32_1 = arith.constant 0 : i32
    %c0_i32_2 = arith.constant 0 : i32
    return %c0_i32, %c0_i32_0, %c0_i32_1 : i32, i32, i32
  }
  func.func @transform_5(%arg0: i32) -> (i32, i32, i32) {
    %c0_i32 = arith.constant 0 : i32
    %c0_i32_0 = arith.constant 0 : i32
    %c0_i32_1 = arith.constant 0 : i32
    %c0_i32_2 = arith.constant 0 : i32
    return %c0_i32, %c0_i32_0, %c0_i32_1 : i32, i32, i32
  }
  func.func @transform_6(%arg0: i32) -> (i32, i32, i32) {
    %c0_i32 = arith.constant 0 : i32
    %c0_i32_0 = arith.constant 0 : i32
    %c0_i32_1 = arith.constant 0 : i32
    %c0_i32_2 = arith.constant 0 : i32
    return %c0_i32, %c0_i32_0, %c0_i32_1 : i32, i32, i32
  }
  func.func @transform_7(%arg0: i32) -> (i32, i32) {
    %c0_i32 = arith.constant 0 : i32
    %c0_i32_0 = arith.constant 0 : i32
    %c0_i32_1 = arith.constant 0 : i32
    return %c0_i32, %c0_i32_0 : i32, i32
  }
  func.func @transform_8(%arg0: i32) -> (i32, i32) {
    %c0_i32 = arith.constant 0 : i32
    %c0_i32_0 = arith.constant 0 : i32
    %c0_i32_1 = arith.constant 0 : i32
    return %c0_i32, %c0_i32_0 : i32, i32
  }
  func.func @transform_9(%arg0: i32) -> (i32, i32) {
    %c0_i32 = arith.constant 0 : i32
    %c0_i32_0 = arith.constant 0 : i32
    %c0_i32_1 = arith.constant 0 : i32
    return %c0_i32, %c0_i32_0 : i32, i32
  }
  func.func @transform_10(%arg0: i32) -> (i32, i32) {
    %c0_i32 = arith.constant 0 : i32
    %c0_i32_0 = arith.constant 0 : i32
    %c0_i32_1 = arith.constant 0 : i32
    return %c0_i32, %c0_i32_0 : i32, i32
  }
  func.func @transform_11(%arg0: i32) -> (i32, i32) {
    %c0_i32 = arith.constant 0 : i32
    %c0_i32_0 = arith.constant 0 : i32
    %c0_i32_1 = arith.constant 0 : i32
    return %c0_i32, %c0_i32_0 : i32, i32
  }
  func.func @transform_12(%arg0: i32) -> (i32, i32) {
    %c0_i32 = arith.constant 0 : i32
    %c0_i32_0 = arith.constant 0 : i32
    %c0_i32_1 = arith.constant 0 : i32
    return %c0_i32, %c0_i32_0 : i32, i32
  }
  func.func @transform_13(%arg0: i32) -> (i32, i32) {
    %c0_i32 = arith.constant 0 : i32
    %c0_i32_0 = arith.constant 0 : i32
    %c0_i32_1 = arith.constant 0 : i32
    return %c0_i32, %c0_i32_0 : i32, i32
  }
  func.func @transform_14(%arg0: i32) -> (i32, i32) {
    %c0_i32 = arith.constant 0 : i32
    %c0_i32_0 = arith.constant 0 : i32
    %c0_i32_1 = arith.constant 0 : i32
    return %c0_i32, %c0_i32_0 : i32, i32
  }
}

</mosaic_0001>

<llo_original>
// kernel: tpu_custom_call.1
$region0: #{tpu_custom_call.1}
  #allocation0 [shape = 'u32[]', space=smem, size = 0x4, offset = 0x4, fixed_abs, tag = 'smem constant byte address 0x4 - core index']
  #allocation1 [shape = 'u32[144,128]{1,0:T(1,128)}', space=vmem, size = 0x12000, scoped, tag = 'internal scratch']
  %s0 = inlined_call_operand.vmem [shape: f32[16,32], index: 0, kind: input, shape index: {}]
  %s1 = inlined_call_operand.vmem [shape: f32[1,32], index: 1, kind: input, shape index: {}]
  %s2 = inlined_call_operand.vmem [shape: f32[1,32], index: 2, kind: input, shape index: {}]
  %s3 = inlined_call_operand.vmem [shape: bf16[8,32,8], index: 3, kind: input, shape index: {}]
  %s4 = inlined_call_operand.vmem [shape: bf16[8,32,8], index: 4, kind: input, shape index: {}]
  %s5 = inlined_call_operand.vmem [shape: bf16[8,32,8], index: 5, kind: input, shape index: {}]
  %s6 = inlined_call_operand.vmem [shape: bf16[8,8,32], index: 6, kind: input, shape index: {}]
  %s7 = inlined_call_operand.vmem [shape: f32[1,32], index: 7, kind: input, shape index: {}]
  %s8 = inlined_call_operand.vmem [shape: f32[1,32], index: 8, kind: input, shape index: {}]
  %s9 = inlined_call_operand.vmem [shape: f32[1,32], index: 9, kind: input, shape index: {}]
  %s10 = inlined_call_operand.vmem [shape: bf16[32,128], index: 10, kind: input, shape index: {}]
  %s11 = inlined_call_operand.vmem [shape: f32[1,128], index: 11, kind: input, shape index: {}]
  %s12 = inlined_call_operand.vmem [shape: bf16[128,32], index: 12, kind: input, shape index: {}]
  %s13 = inlined_call_operand.vmem [shape: f32[1,32], index: 13, kind: input, shape index: {}]
  %s14 = inlined_call_operand.hbm [shape: f32[16,32], index: 14, kind: output, shape index: {}]
  %s15 = sld [smem:[#allocation0]]
  $region66: #{tpu_custom_call.1} parent=0
    _
  %s17 = ssub.s32 1, %s15
  %s18 = scalar_select 0, %s17, %s15
  $region1: #{tpu_custom_call.1} parent=0
    #allocation2 [shape = 'u8[8192]{0}', space=vmem, size = 0x2000, scoped, tag = 'output window, operand 0, single buffered']
    #allocation3 [shape = 's32[1]{0}', space=sflag, size = 0x4, scoped, tag = 'scoped memory for tpu_custom_call.1']
    %19 = vsyncpa [#allocation3], 0
    // Predicated region
    $region2: #{tpu_custom_call.1} parent=1 // pred_check
      _
    $region3: #{tpu_custom_call.1} parent=1 // pred_check_branch
      %21 = sbr.rel (0) target = $region5
    $region4: #{tpu_custom_call.1} parent=1 // pred_region
      _
    $region5: #{tpu_custom_call.1} parent=1 // pred_fallthru
      _
    // Predicated region
    $region6: #{tpu_custom_call.1} parent=1 // pred_check
      _
    $region7: #{tpu_custom_call.1} parent=1 // pred_check_branch
      %23 = sbr.rel (0) target = $region9
    $region8: #{tpu_custom_call.1} parent=1 // pred_region
      _
    $region9: #{tpu_custom_call.1} parent=1 // pred_fallthru
      _
    // Predicated region
    $region10: #{tpu_custom_call.1} parent=1 // pred_check
      _
    $region11: #{tpu_custom_call.1} parent=1 // pred_check_branch
      %25 = sbr.rel (0) target = $region13
    $region12: #{tpu_custom_call.1} parent=1 // pred_region
      _
    $region13: #{tpu_custom_call.1} parent=1 // pred_fallthru
      _
    // Predicated region
    $region14: #{tpu_custom_call.1} parent=1 // pred_check
      _
    $region15: #{tpu_custom_call.1} parent=1 // pred_check_branch
      %27 = sbr.rel (0) target = $region17
    $region16: #{tpu_custom_call.1} parent=1 // pred_region
      _
    $region17: #{tpu_custom_call.1} parent=1 // pred_fallthru
      _
    // Predicated region
    $region18: #{tpu_custom_call.1} parent=1 // pred_check
      _
    $region19: #{tpu_custom_call.1} parent=1 // pred_check_branch
      %29 = sbr.rel (0) target = $region21
    $region20: #{tpu_custom_call.1} parent=1 // pred_region
      _
    $region21: #{tpu_custom_call.1} parent=1 // pred_fallthru
      _
    // Predicated region
    $region22: #{tpu_custom_call.1} parent=1 // pred_check
      _
    $region23: #{tpu_custom_call.1} parent=1 // pred_check_branch
      %31 = sbr.rel (0) target = $region25
    $region24: #{tpu_custom_call.1} parent=1 // pred_region
      _
    $region25: #{tpu_custom_call.1} parent=1 // pred_fallthru
      _
    // Predicated region
    $region26: #{tpu_custom_call.1} parent=1 // pred_check
      _
    $region27: #{tpu_custom_call.1} parent=1 // pred_check_branch
      %33 = sbr.rel (0) target = $region29
    $region28: #{tpu_custom_call.1} parent=1 // pred_region
      _
    $region29: #{tpu_custom_call.1} parent=1 // pred_fallthru
      _
    // Predicated region
    $region30: #{tpu_custom_call.1} parent=1 // pred_check
      _
    $region31: #{tpu_custom_call.1} parent=1 // pred_check_branch
      %35 = sbr.rel (0) target = $region33
    $region32: #{tpu_custom_call.1} parent=1 // pred_region
      _
    $region33: #{tpu_custom_call.1} parent=1 // pred_fallthru
      _
    // Predicated region
    $region34: #{tpu_custom_call.1} parent=1 // pred_check
      _
    $region35: #{tpu_custom_call.1} parent=1 // pred_check_branch
      %37 = sbr.rel (0) target = $region37
    $region36: #{tpu_custom_call.1} parent=1 // pred_region
      _
    $region37: #{tpu_custom_call.1} parent=1 // pred_fallthru
      _
    // Predicated region
    $region38: #{tpu_custom_call.1} parent=1 // pred_check
      _
    $region39: #{tpu_custom_call.1} parent=1 // pred_check_branch
      %39 = sbr.rel (0) target = $region41
    $region40: #{tpu_custom_call.1} parent=1 // pred_region
      _
    $region41: #{tpu_custom_call.1} parent=1 // pred_fallthru
      _
    // Predicated region
    $region42: #{tpu_custom_call.1} parent=1 // pred_check
      _
    $region43: #{tpu_custom_call.1} parent=1 // pred_check_branch
      %41 = sbr.rel (0) target = $region45
    $region44: #{tpu_custom_call.1} parent=1 // pred_region
      _
    $region45: #{tpu_custom_call.1} parent=1 // pred_fallthru
      _
    // Predicated region
    $region46: #{tpu_custom_call.1} parent=1 // pred_check
      _
    $region47: #{tpu_custom_call.1} parent=1 // pred_check_branch
      %43 = sbr.rel (0) target = $region49
    $region48: #{tpu_custom_call.1} parent=1 // pred_region
      _
    $region49: #{tpu_custom_call.1} parent=1 // pred_fallthru
      _
    // Predicated region
    $region50: #{tpu_custom_call.1} parent=1 // pred_check
      _
    $region51: #{tpu_custom_call.1} parent=1 // pred_check_branch
      %45 = sbr.rel (0) target = $region53
    $region52: #{tpu_custom_call.1} parent=1 // pred_region
      _
    $region53: #{tpu_custom_call.1} parent=1 // pred_fallthru
      _
    // Predicated region
    $region54: #{tpu_custom_call.1} parent=1 // pred_check
      _
    $region55: #{tpu_custom_call.1} parent=1 // pred_check_branch
      %47 = sbr.rel (0) target = $region57
    $region56: #{tpu_custom_call.1} parent=1 // pred_region
      _
    $region57: #{tpu_custom_call.1} parent=1 // pred_fallthru
      _
    %v49 = vld [vmem:[%s0] sm:$0xff]
    %v50 = vld [vmem:[%s0 + $0x8] sm:$0xff]
    %v51 = vld [vmem:[%s1] sm:$0x1]
    %v52 = vld [vmem:[%s2] sm:$0x1]
    %vm53 = vcmask 261120
    %v54 = vsel %vm53, %v49, 0.0
    %55 = vadd.xlane.f32.xlu0 %v54
    %v56 = vpop.xlane.xlu0 %55
    %v57 = vsel %vm53, %v50, 0.0
    %58 = vadd.xlane.f32.xlu0 %v57
    %v59 = vpop.xlane.xlu0 %58
    %v60 = vrcp.pop 32.0
    %v61 = vmul.f32 %v56, %v60
    %v62 = vmul.f32 %v59, %v60
    %v63 = vsub.f32 %v49, %v61
    %v64 = vsub.f32 %v50, %v62
    %v65 = vmul.f32 %v63, %v63
    %v66 = vmul.f32 %v64, %v64
    %v67 = vsel %vm53, %v65, 0.0
    %68 = vadd.xlane.f32.xlu0 %v67
    %v69 = vpop.xlane.xlu0 %68
    %v70 = vsel %vm53, %v66, 0.0
    %71 = vadd.xlane.f32.xlu0 %v70
    %v72 = vpop.xlane.xlu0 %71
    %v73 = vmul.f32 %v69, %v60
    %v74 = vmul.f32 %v72, %v60
    %v75 = vadd.f32 %v73, 1e-05
    %v76 = vadd.f32 %v74, 1e-05
    %v77 = vrsqrt.pop %v75
    %v78 = vrsqrt.pop %v76
    %v79 = vmul.f32 %v63, %v77
    %v80 = vmul.f32 %v64, %v78
    %v82 = vlaneseq
    %v83 = vshrl.u32 %v82, 7
    %v84 = vsub.s32 0, %v83
    %v85 = vrot.slane %v51, %v84
    %v87 = vmul.f32 %v79, %v85
    %v88 = vmul.f32 %v80, %v85
    %v90 = vlaneseq
    %v91 = vshrl.u32 %v90, 7
    %v92 = vsub.s32 0, %v91
    %v93 = vrot.slane %v52, %v92
    %v95 = vadd.f32 %v87, %v93
    %v96 = vadd.f32 %v88, %v93
    %v97 = vpack.c.bf16 %v95, %v95
    %v98 = vpack.c.bf16 %v96, %v96
    %v99 = vld [vmem:[%s3] sm:$0xf]
    %v100 = vld [vmem:[%s3 + $0x4] sm:$0xf]
    %v101 = vld [vmem:[%s3 + $0x8] sm:$0xf]
    %v102 = vld [vmem:[%s3 + $0xc] sm:$0xf]
    %v103 = vld [vmem:[%s3 + $0x10] sm:$0xf]
    %v104 = vld [vmem:[%s3 + $0x14] sm:$0xf]
    %v105 = vld [vmem:[%s3 + $0x18] sm:$0xf]
    %v106 = vld [vmem:[%s3 + $0x1c] sm:$0xf]
    %v107 = vld [vmem:[%s3 + $0x20] sm:$0xf]
    %v108 = vld [vmem:[%s3 + $0x24] sm:$0xf]
    %v109 = vld [vmem:[%s3 + $0x28] sm:$0xf]
    %v110 = vld [vmem:[%s3 + $0x2c] sm:$0xf]
    %v111 = vld [vmem:[%s3 + $0x30] sm:$0xf]
    %v112 = vld [vmem:[%s3 + $0x34] sm:$0xf]
    %v113 = vld [vmem:[%s3 + $0x38] sm:$0xf]
    %v114 = vld [vmem:[%s3 + $0x3c] sm:$0xf]
    %v115 = vld [vmem:[%s3 + $0x40] sm:$0xf]
    %v116 = vld [vmem:[%s3 + $0x44] sm:$0xf]
    %v117 = vld [vmem:[%s3 + $0x48] sm:$0xf]
    %v118 = vld [vmem:[%s3 + $0x4c] sm:$0xf]
    %v119 = vld [vmem:[%s3 + $0x50] sm:$0xf]
    %v120 = vld [vmem:[%s3 + $0x54] sm:$0xf]
    %v121 = vld [vmem:[%s3 + $0x58] sm:$0xf]
    %v122 = vld [vmem:[%s3 + $0x5c] sm:$0xf]
    %v123 = vld [vmem:[%s3 + $0x60] sm:$0xf]
    %v124 = vld [vmem:[%s3 + $0x64] sm:$0xf]
    %v125 = vld [vmem:[%s3 + $0x68] sm:$0xf]
    %v126 = vld [vmem:[%s3 + $0x6c] sm:$0xf]
    %v127 = vld [vmem:[%s3 + $0x70] sm:$0xf]
    %v128 = vld [vmem:[%s3 + $0x74] sm:$0xf]
    %v129 = vld [vmem:[%s3 + $0x78] sm:$0xf]
    %v130 = vld [vmem:[%s3 + $0x7c] sm:$0xf]
    %v135 = vunpack.c.l.b16 %v99
    %v136 = vunpack.c.l.b16 %v100
    %v137 = vunpack.c.l.b16 %v101
    %v138 = vunpack.c.l.b16 %v102
    %v139 = vpack.c.b16 %v136, %v135
    %v140 = vpack.c.b16 %v138, %v137
    %v144 = vsel %vm53, %v97, 0
    %146 = vmatprep.subr.bf16.mxu0 0
    %147 = vmatpush1.bf16.msra.mxu0 0
    %148 = vmatprep.subr.bf16.mxu0 0
    %149 = vmatpush1.bf16.msra.mxu0 0
    %150 = vmatprep.subr.bf16.mxu0 0
    %151 = vmatpush1.bf16.msra.mxu0 0
    %152 = vmatprep.subr.bf16.mxu0 0
    %153 = vmatpush1.bf16.msra.mxu0 0
    %154 = vmatprep.subr.bf16.mxu0 0
    %155 = vmatpush1.bf16.msra.mxu0 0
    %156 = vmatprep.subr.bf16.mxu0 0
    %157 = vmatpush1.bf16.msra.mxu0 0
    %158 = vmatprep.subr.bf16.mxu0 0
    %159 = vmatpush1.bf16.msra.mxu0 %v140
    %160 = vmatprep.subr.bf16.mxu0 0
    %161 = vmatpush1.bf16.msra.mxu0 %v139
    %162 = vmatprep.subr.bf16.mxu0 0
    %163 = vmatpush2.bf16.msra.mxu0 0
    %164 = vmatprep.subr.bf16.mxu0 0
    %165 = vmatpush2.bf16.msra.mxu0 0
    %166 = vmatprep.subr.bf16.mxu0 0
    %167 = vmatpush2.bf16.msra.mxu0 0
    %168 = vmatprep.subr.bf16.mxu0 0
    %169 = vmatpush2.bf16.msra.mxu0 0
    %170 = vmatprep.subr.bf16.mxu0 0
    %171 = vmatpush2.bf16.msra.mxu0 0
    %172 = vmatprep.subr.bf16.mxu0 0
    %173 = vmatpush2.bf16.msra.mxu0 0
    %174 = vmatprep.subr.bf16.mxu0 0
    %175 = vmatpush2.bf16.msra.mxu0 0
    %176 = vmatprep.subr.bf16.mxu0 0
    %177 = vmatpush2.bf16.msra.mxu0 0
    %178 = vmatprep.mubr.bf16.mxu0 0
    %179 = vmatmul.mubr.bf16.gmra.mxu0 %v144
    %v180 = vpop.f32.mrf.mxu0
    %v181 = vadd.f32 0.0, %v180
    %v182 = vpop.f32.mrf.mxu0
    %v183 = vpop.f32.mrf.mxu0
    %v184 = vpop.f32.mrf.mxu0
    %185 = vdwg.mxu0
    %v190 = vunpack.c.l.b16 %v103
    %v191 = vunpack.c.l.b16 %v104
    %v192 = vunpack.c.l.b16 %v105
    %v193 = vunpack.c.l.b16 %v106
    %v194 = vpack.c.b16 %v191, %v190
    %v195 = vpack.c.b16 %v193, %v192
    %198 = vmatprep.subr.bf16.mxu0 0
    %199 = vmatpush1.bf16.msra.mxu0 0
    %200 = vmatprep.subr.bf16.mxu0 0
    %201 = vmatpush1.bf16.msra.mxu0 0
    %202 = vmatprep.subr.bf16.mxu0 0
    %203 = vmatpush1.bf16.msra.mxu0 0
    %204 = vmatprep.subr.bf16.mxu0 0
    %205 = vmatpush1.bf16.msra.mxu0 0
    %206 = vmatprep.subr.bf16.mxu0 0
    %207 = vmatpush1.bf16.msra.mxu0 0
    %208 = vmatprep.subr.bf16.mxu0 0
    %209 = vmatpush1.bf16.msra.mxu0 0
    %210 = vmatprep.subr.bf16.mxu0 0
    %211 = vmatpush1.bf16.msra.mxu0 %v195
    %212 = vmatprep.subr.bf16.mxu0 0
    %213 = vmatpush1.bf16.msra.mxu0 %v194
    %214 = vmatprep.subr.bf16.mxu0 0
    %215 = vmatpush2.bf16.msra.mxu0 0
    %216 = vmatprep.subr.bf16.mxu0 0
    %217 = vmatpush2.bf16.msra.mxu0 0
    %218 = vmatprep.subr.bf16.mxu0 0
    %219 = vmatpush2.bf16.msra.mxu0 0
    %220 = vmatprep.subr.bf16.mxu0 0
    %221 = vmatpush2.bf16.msra.mxu0 0
    %222 = vmatprep.subr.bf16.mxu0 0
    %223 = vmatpush2.bf16.msra.mxu0 0
    %224 = vmatprep.subr.bf16.mxu0 0
    %225 = vmatpush2.bf16.msra.mxu0 0
    %226 = vmatprep.subr.bf16.mxu0 0
    %227 = vmatpush2.bf16.msra.mxu0 0
    %228 = vmatprep.subr.bf16.mxu0 0
    %229 = vmatpush2.bf16.msra.mxu0 0
    %230 = vmatprep.mubr.bf16.mxu0 0
    %231 = vmatmul.mubr.bf16.gmra.mxu0 %v144
    %v232 = vpop.f32.mrf.mxu0
    %v233 = vadd.f32 0.0, %v232
    %v234 = vpop.f32.mrf.mxu0
    %v235 = vpop.f32.mrf.mxu0
    %v236 = vpop.f32.mrf.mxu0
    %237 = vdwg.mxu0
    %v242 = vunpack.c.l.b16 %v107
    %v243 = vunpack.c.l.b16 %v108
    %v244 = vunpack.c.l.b16 %v109
    %v245 = vunpack.c.l.b16 %v110
    %v246 = vpack.c.b16 %v243, %v242
    %v247 = vpack.c.b16 %v245, %v244
    %250 = vmatprep.subr.bf16.mxu0 0
    %251 = vmatpush1.bf16.msra.mxu0 0
    %252 = vmatprep.subr.bf16.mxu0 0
    %253 = vmatpush1.bf16.msra.mxu0 0
    %254 = vmatprep.subr.bf16.mxu0 0
    %255 = vmatpush1.bf16.msra.mxu0 0
    %256 = vmatprep.subr.bf16.mxu0 0
    %257 = vmatpush1.bf16.msra.mxu0 0
    %258 = vmatprep.subr.bf16.mxu0 0
    %259 = vmatpush1.bf16.msra.mxu0 0
    %260 = vmatprep.subr.bf16.mxu0 0
    %261 = vmatpush1.bf16.msra.mxu0 0
    %262 = vmatprep.subr.bf16.mxu0 0
    %263 = vmatpush1.bf16.msra.mxu0 %v247
    %264 = vmatprep.subr.bf16.mxu0 0
    %265 = vmatpush1.bf16.msra.mxu0 %v246
    %266 = vmatprep.subr.bf16.mxu0 0
    %267 = vmatpush2.bf16.msra.mxu0 0
    %268 = vmatprep.subr.bf16.mxu0 0
    %269 = vmatpush2.bf16.msra.mxu0 0
    %270 = vmatprep.subr.bf16.mxu0 0
    %271 = vmatpush2.bf16.msra.mxu0 0
    %272 = vmatprep.subr.bf16.mxu0 0
    %273 = vmatpush2.bf16.msra.mxu0 0
    %274 = vmatprep.subr.bf16.mxu0 0
    %275 = vmatpush2.bf16.msra.mxu0 0
    %276 = vmatprep.subr.bf16.mxu0 0
    %277 = vmatpush2.bf16.msra.mxu0 0
    %278 = vmatprep.subr.bf16.mxu0 0
    %279 = vmatpush2.bf16.msra.mxu0 0
    %280 = vmatprep.subr.bf16.mxu0 0
    %281 = vmatpush2.bf16.msra.mxu0 0
    %282 = vmatprep.mubr.bf16.mxu0 0
    %283 = vmatmul.mubr.bf16.gmra.mxu0 %v144
    %v284 = vpop.f32.mrf.mxu0
    %v285 = vadd.f32 0.0, %v284
    %v286 = vpop.f32.mrf.mxu0
    %v287 = vpop.f32.mrf.mxu0
    %v288 = vpop.f32.mrf.mxu0
    %289 = vdwg.mxu0
    %v294 = vunpack.c.l.b16 %v111
    %v295 = vunpack.c.l.b16 %v112
    %v296 = vunpack.c.l.b16 %v113
    %v297 = vunpack.c.l.b16 %v114
    %v298 = vpack.c.b16 %v295, %v294
    %v299 = vpack.c.b16 %v297, %v296
    %302 = vmatprep.subr.bf16.mxu0 0
    %303 = vmatpush1.bf16.msra.mxu0 0
    %304 = vmatprep.subr.bf16.mxu0 0
    %305 = vmatpush1.bf16.msra.mxu0 0
    %306 = vmatprep.subr.bf16.mxu0 0
    %307 = vmatpush1.bf16.msra.mxu0 0
    %308 = vmatprep.subr.bf16.mxu0 0
    %309 = vmatpush1.bf16.msra.mxu0 0
    %310 = vmatprep.subr.bf16.mxu0 0
    %311 = vmatpush1.bf16.msra.mxu0 0
    %312 = vmatprep.subr.bf16.mxu0 0
    %313 = vmatpush1.bf16.msra.mxu0 0
    %314 = vmatprep.subr.bf16.mxu0 0
    %315 = vmatpush1.bf16.msra.mxu0 %v299
    %316 = vmatprep.subr.bf16.mxu0 0
    %317 = vmatpush1.bf16.msra.mxu0 %v298
    %318 = vmatprep.subr.bf16.mxu0 0
    %319 = vmatpush2.bf16.msra.mxu0 0
    %320 = vmatprep.subr.bf16.mxu0 0
    %321 = vmatpush2.bf16.msra.mxu0 0
    %322 = vmatprep.subr.bf16.mxu0 0
    %323 = vmatpush2.bf16.msra.mxu0 0
    %324 = vmatprep.subr.bf16.mxu0 0
    %325 = vmatpush2.bf16.msra.mxu0 0
    %326 = vmatprep.subr.bf16.mxu0 0
    %327 = vmatpush2.bf16.msra.mxu0 0
    %328 = vmatprep.subr.bf16.mxu0 0
    %329 = vmatpush2.bf16.msra.mxu0 0
    %330 = vmatprep.subr.bf16.mxu0 0
    %331 = vmatpush2.bf16.msra.mxu0 0
    %332 = vmatprep.subr.bf16.mxu0 0
    %333 = vmatpush2.bf16.msra.mxu0 0
    %334 = vmatprep.mubr.bf16.mxu0 0
    %335 = vmatmul.mubr.bf16.gmra.mxu0 %v144
    %v336 = vpop.f32.mrf.mxu0
    %v337 = vadd.f32 0.0, %v336
    %v338 = vpop.f32.mrf.mxu0
    %v339 = vpop.f32.mrf.mxu0
    %v340 = vpop.f32.mrf.mxu0
    %341 = vdwg.mxu0
    %v346 = vunpack.c.l.b16 %v115
    %v347 = vunpack.c.l.b16 %v116
    %v348 = vunpack.c.l.b16 %v117
    %v349 = vunpack.c.l.b16 %v118
    %v350 = vpack.c.b16 %v347, %v346
    %v351 = vpack.c.b16 %v349, %v348
    %v355 = vsel %vm53, %v98, 0
    %357 = vmatprep.subr.bf16.mxu0 0
    %358 = vmatpush1.bf16.msra.mxu0 0
    %359 = vmatprep.subr.bf16.mxu0 0
    %360 = vmatpush1.bf16.msra.mxu0 0
    %361 = vmatprep.subr.bf16.mxu0 0
    %362 = vmatpush1.bf16.msra.mxu0 0
    %363 = vmatprep.subr.bf16.mxu0 0
    %364 = vmatpush1.bf16.msra.mxu0 0
    %365 = vmatprep.subr.bf16.mxu0 0
    %366 = vmatpush1.bf16.msra.mxu0 0
    %367 = vmatprep.subr.bf16.mxu0 0
    %368 = vmatpush1.bf16.msra.mxu0 0
    %369 = vmatprep.subr.bf16.mxu0 0
    %370 = vmatpush1.bf16.msra.mxu0 %v351
    %371 = vmatprep.subr.bf16.mxu0 0
    %372 = vmatpush1.bf16.msra.mxu0 %v350
    %373 = vmatprep.subr.bf16.mxu0 0
    %374 = vmatpush2.bf16.msra.mxu0 0
    %375 = vmatprep.subr.bf16.mxu0 0
    %376 = vmatpush2.bf16.msra.mxu0 0
    %377 = vmatprep.subr.bf16.mxu0 0
    %378 = vmatpush2.bf16.msra.mxu0 0
    %379 = vmatprep.subr.bf16.mxu0 0
    %380 = vmatpush2.bf16.msra.mxu0 0
    %381 = vmatprep.subr.bf16.mxu0 0
    %382 = vmatpush2.bf16.msra.mxu0 0
    %383 = vmatprep.subr.bf16.mxu0 0
    %384 = vmatpush2.bf16.msra.mxu0 0
    %385 = vmatprep.subr.bf16.mxu0 0
    %386 = vmatpush2.bf16.msra.mxu0 0
    %387 = vmatprep.subr.bf16.mxu0 0
    %388 = vmatpush2.bf16.msra.mxu0 0
    %389 = vmatprep.mubr.bf16.mxu0 0
    %390 = vmatmul.mubr.bf16.gmra.mxu0 %v355
    %v391 = vpop.f32.mrf.mxu0
    %v392 = vadd.f32 0.0, %v391
    %v393 = vpop.f32.mrf.mxu0
    %v394 = vpop.f32.mrf.mxu0
    %v395 = vpop.f32.mrf.mxu0
    %396 = vdwg.mxu0
    %v401 = vunpack.c.l.b16 %v119
    %v402 = vunpack.c.l.b16 %v120
    %v403 = vunpack.c.l.b16 %v121
    %v404 = vunpack.c.l.b16 %v122
    %v405 = vpack.c.b16 %v402, %v401
    %v406 = vpack.c.b16 %v404, %v403
    %409 = vmatprep.subr.bf16.mxu0 0
    %410 = vmatpush1.bf16.msra.mxu0 0
    %411 = vmatprep.subr.bf16.mxu0 0
    %412 = vmatpush1.bf16.msra.mxu0 0
    %413 = vmatprep.subr.bf16.mxu0 0
    %414 = vmatpush1.bf16.msra.mxu0 0
    %415 = vmatprep.subr.bf16.mxu0 0
    %416 = vmatpush1.bf16.msra.mxu0 0
    %417 = vmatprep.subr.bf16.mxu0 0
    %418 = vmatpush1.bf16.msra.mxu0 0
    %419 = vmatprep.subr.bf16.mxu0 0
    %420 = vmatpush1.bf16.msra.mxu0 0
    %421 = vmatprep.subr.bf16.mxu0 0
    %422 = vmatpush1.bf16.msra.mxu0 %v406
    %423 = vmatprep.subr.bf16.mxu0 0
    %424 = vmatpush1.bf16.msra.mxu0 %v405
    %425 = vmatprep.subr.bf16.mxu0 0
    %426 = vmatpush2.bf16.msra.mxu0 0
    %427 = vmatprep.subr.bf16.mxu0 0
    %428 = vmatpush2.bf16.msra.mxu0 0
    %429 = vmatprep.subr.bf16.mxu0 0
    %430 = vmatpush2.bf16.msra.mxu0 0
    %431 = vmatprep.subr.bf16.mxu0 0
    %432 = vmatpush2.bf16.msra.mxu0 0
    %433 = vmatprep.subr.bf16.mxu0 0
    %434 = vmatpush2.bf16.msra.mxu0 0
    %435 = vmatprep.subr.bf16.mxu0 0
    %436 = vmatpush2.bf16.msra.mxu0 0
    %437 = vmatprep.subr.bf16.mxu0 0
    %438 = vmatpush2.bf16.msra.mxu0 0
    %439 = vmatprep.subr.bf16.mxu0 0
    %440 = vmatpush2.bf16.msra.mxu0 0
    %441 = vmatprep.mubr.bf16.mxu0 0
    %442 = vmatmul.mubr.bf16.gmra.mxu0 %v355
    %v443 = vpop.f32.mrf.mxu0
    %v444 = vadd.f32 0.0, %v443
    %v445 = vpop.f32.mrf.mxu0
    %v446 = vpop.f32.mrf.mxu0
    %v447 = vpop.f32.mrf.mxu0
    %448 = vdwg.mxu0
    %v453 = vunpack.c.l.b16 %v123
    %v454 = vunpack.c.l.b16 %v124
    %v455 = vunpack.c.l.b16 %v125
    %v456 = vunpack.c.l.b16 %v126
    %v457 = vpack.c.b16 %v454, %v453
    %v458 = vpack.c.b16 %v456, %v455
    %461 = vmatprep.subr.bf16.mxu0 0
    %462 = vmatpush1.bf16.msra.mxu0 0
    %463 = vmatprep.subr.bf16.mxu0 0
    %464 = vmatpush1.bf16.msra.mxu0 0
    %465 = vmatprep.subr.bf16.mxu0 0
    %466 = vmatpush1.bf16.msra.mxu0 0
    %467 = vmatprep.subr.bf16.mxu0 0
    %468 = vmatpush1.bf16.msra.mxu0 0
    %469 = vmatprep.subr.bf16.mxu0 0
    %470 = vmatpush1.bf16.msra.mxu0 0
    %471 = vmatprep.subr.bf16.mxu0 0
    %472 = vmatpush1.bf16.msra.mxu0 0
    %473 = vmatprep.subr.bf16.mxu0 0
    %474 = vmatpush1.bf16.msra.mxu0 %v458
    %475 = vmatprep.subr.bf16.mxu0 0
    %476 = vmatpush1.bf16.msra.mxu0 %v457
    %477 = vmatprep.subr.bf16.mxu0 0
    %478 = vmatpush2.bf16.msra.mxu0 0
    %479 = vmatprep.subr.bf16.mxu0 0
    %480 = vmatpush2.bf16.msra.mxu0 0
    %481 = vmatprep.subr.bf16.mxu0 0
    %482 = vmatpush2.bf16.msra.mxu0 0
    %483 = vmatprep.subr.bf16.mxu0 0
    %484 = vmatpush2.bf16.msra.mxu0 0
    %485 = vmatprep.subr.bf16.mxu0 0
    %486 = vmatpush2.bf16.msra.mxu0 0
    %487 = vmatprep.subr.bf16.mxu0 0
    %488 = vmatpush2.bf16.msra.mxu0 0
    %489 = vmatprep.subr.bf16.mxu0 0
    %490 = vmatpush2.bf16.msra.mxu0 0
    %491 = vmatprep.subr.bf16.mxu0 0
    %492 = vmatpush2.bf16.msra.mxu0 0
    %493 = vmatprep.mubr.bf16.mxu0 0
    %494 = vmatmul.mubr.bf16.gmra.mxu0 %v355
    %v495 = vpop.f32.mrf.mxu0
    %v496 = vadd.f32 0.0, %v495
    %v497 = vpop.f32.mrf.mxu0
    %v498 = vpop.f32.mrf.mxu0
    %v499 = vpop.f32.mrf.mxu0
    %500 = vdwg.mxu0
    %v505 = vunpack.c.l.b16 %v127
    %v506 = vunpack.c.l.b16 %v128
    %v507 = vunpack.c.l.b16 %v129
    %v508 = vunpack.c.l.b16 %v130
    %v509 = vpack.c.b16 %v506, %v505
    %v510 = vpack.c.b16 %v508, %v507
    %513 = vmatprep.subr.bf16.mxu0 0
    %514 = vmatpush1.bf16.msra.mxu0 0
    %515 = vmatprep.subr.bf16.mxu0 0
    %516 = vmatpush1.bf16.msra.mxu0 0
    %517 = vmatprep.subr.bf16.mxu0 0
    %518 = vmatpush1.bf16.msra.mxu0 0
    %519 = vmatprep.subr.bf16.mxu0 0
    %520 = vmatpush1.bf16.msra.mxu0 0
    %521 = vmatprep.subr.bf16.mxu0 0
    %522 = vmatpush1.bf16.msra.mxu0 0
    %523 = vmatprep.subr.bf16.mxu0 0
    %524 = vmatpush1.bf16.msra.mxu0 0
    %525 = vmatprep.subr.bf16.mxu0 0
    %526 = vmatpush1.bf16.msra.mxu0 %v510
    %527 = vmatprep.subr.bf16.mxu0 0
    %528 = vmatpush1.bf16.msra.mxu0 %v509
    %529 = vmatprep.subr.bf16.mxu0 0
    %530 = vmatpush2.bf16.msra.mxu0 0
    %531 = vmatprep.subr.bf16.mxu0 0
    %532 = vmatpush2.bf16.msra.mxu0 0
    %533 = vmatprep.subr.bf16.mxu0 0
    %534 = vmatpush2.bf16.msra.mxu0 0
    %535 = vmatprep.subr.bf16.mxu0 0
    %536 = vmatpush2.bf16.msra.mxu0 0
    %537 = vmatprep.subr.bf16.mxu0 0
    %538 = vmatpush2.bf16.msra.mxu0 0
    %539 = vmatprep.subr.bf16.mxu0 0
    %540 = vmatpush2.bf16.msra.mxu0 0
    %541 = vmatprep.subr.bf16.mxu0 0
    %542 = vmatpush2.bf16.msra.mxu0 0
    %543 = vmatprep.subr.bf16.mxu0 0
    %544 = vmatpush2.bf16.msra.mxu0 0
    %545 = vmatprep.mubr.bf16.mxu0 0
    %546 = vmatmul.mubr.bf16.gmra.mxu0 %v355
    %v547 = vpop.f32.mrf.mxu0
    %v548 = vadd.f32 0.0, %v547
    %v549 = vpop.f32.mrf.mxu0
    %v550 = vpop.f32.mrf.mxu0
    %v551 = vpop.f32.mrf.mxu0
    %552 = vdwg.mxu0
    %v553 = vld [vmem:[%s4] sm:$0xf]
    %v554 = vld [vmem:[%s4 + $0x4] sm:$0xf]
    %v555 = vld [vmem:[%s4 + $0x8] sm:$0xf]
    %v556 = vld [vmem:[%s4 + $0xc] sm:$0xf]
    %v557 = vld [vmem:[%s4 + $0x10] sm:$0xf]
    %v558 = vld [vmem:[%s4 + $0x14] sm:$0xf]
    %v559 = vld [vmem:[%s4 + $0x18] sm:$0xf]
    %v560 = vld [vmem:[%s4 + $0x1c] sm:$0xf]
    %v561 = vld [vmem:[%s4 + $0x20] sm:$0xf]
    %v562 = vld [vmem:[%s4 + $0x24] sm:$0xf]
    %v563 = vld [vmem:[%s4 + $0x28] sm:$0xf]
    %v564 = vld [vmem:[%s4 + $0x2c] sm:$0xf]
    %v565 = vld [vmem:[%s4 + $0x30] sm:$0xf]
    %v566 = vld [vmem:[%s4 + $0x34] sm:$0xf]
    %v567 = vld [vmem:[%s4 + $0x38] sm:$0xf]
    %v568 = vld [vmem:[%s4 + $0x3c] sm:$0xf]
    %v569 = vld [vmem:[%s4 + $0x40] sm:$0xf]
    %v570 = vld [vmem:[%s4 + $0x44] sm:$0xf]
    %v571 = vld [vmem:[%s4 + $0x48] sm:$0xf]
    %v572 = vld [vmem:[%s4 + $0x4c] sm:$0xf]
    %v573 = vld [vmem:[%s4 + $0x50] sm:$0xf]
    %v574 = vld [vmem:[%s4 + $0x54] sm:$0xf]
    %v575 = vld [vmem:[%s4 + $0x58] sm:$0xf]
    %v576 = vld [vmem:[%s4 + $0x5c] sm:$0xf]
    %v577 = vld [vmem:[%s4 + $0x60] sm:$0xf]
    %v578 = vld [vmem:[%s4 + $0x64] sm:$0xf]
    %v579 = vld [vmem:[%s4 + $0x68] sm:$0xf]
    %v580 = vld [vmem:[%s4 + $0x6c] sm:$0xf]
    %v581 = vld [vmem:[%s4 + $0x70] sm:$0xf]
    %v582 = vld [vmem:[%s4 + $0x74] sm:$0xf]
    %v583 = vld [vmem:[%s4 + $0x78] sm:$0xf]
    %v584 = vld [vmem:[%s4 + $0x7c] sm:$0xf]
    %v589 = vunpack.c.l.b16 %v553
    %v590 = vunpack.c.l.b16 %v554
    %v591 = vunpack.c.l.b16 %v555
    %v592 = vunpack.c.l.b16 %v556
    %v593 = vpack.c.b16 %v590, %v589
    %v594 = vpack.c.b16 %v592, %v591
    %597 = vmatprep.subr.bf16.mxu0 0
    %598 = vmatpush1.bf16.msra.mxu0 0
    %599 = vmatprep.subr.bf16.mxu0 0
    %600 = vmatpush1.bf16.msra.mxu0 0
    %601 = vmatprep.subr.bf16.mxu0 0
    %602 = vmatpush1.bf16.msra.mxu0 0
    %603 = vmatprep.subr.bf16.mxu0 0
    %604 = vmatpush1.bf16.msra.mxu0 0
    %605 = vmatprep.subr.bf16.mxu0 0
    %606 = vmatpush1.bf16.msra.mxu0 0
    %607 = vmatprep.subr.bf16.mxu0 0
    %608 = vmatpush1.bf16.msra.mxu0 0
    %609 = vmatprep.subr.bf16.mxu0 0
    %610 = vmatpush1.bf16.msra.mxu0 %v594
    %611 = vmatprep.subr.bf16.mxu0 0
    %612 = vmatpush1.bf16.msra.mxu0 %v593
    %613 = vmatprep.subr.bf16.mxu0 0
    %614 = vmatpush2.bf16.msra.mxu0 0
    %615 = vmatprep.subr.bf16.mxu0 0
    %616 = vmatpush2.bf16.msra.mxu0 0
    %617 = vmatprep.subr.bf16.mxu0 0
    %618 = vmatpush2.bf16.msra.mxu0 0
    %619 = vmatprep.subr.bf16.mxu0 0
    %620 = vmatpush2.bf16.msra.mxu0 0
    %621 = vmatprep.subr.bf16.mxu0 0
    %622 = vmatpush2.bf16.msra.mxu0 0
    %623 = vmatprep.subr.bf16.mxu0 0
    %624 = vmatpush2.bf16.msra.mxu0 0
    %625 = vmatprep.subr.bf16.mxu0 0
    %626 = vmatpush2.bf16.msra.mxu0 0
    %627 = vmatprep.subr.bf16.mxu0 0
    %628 = vmatpush2.bf16.msra.mxu0 0
    %629 = vmatprep.mubr.bf16.mxu0 0
    %630 = vmatmul.mubr.bf16.gmra.mxu0 %v144
    %v631 = vpop.f32.mrf.mxu0
    %v632 = vadd.f32 0.0, %v631
    %v633 = vpop.f32.mrf.mxu0
    %v634 = vpop.f32.mrf.mxu0
    %v635 = vpop.f32.mrf.mxu0
    %636 = vdwg.mxu0
    %v641 = vunpack.c.l.b16 %v557
    %v642 = vunpack.c.l.b16 %v558
    %v643 = vunpack.c.l.b16 %v559
    %v644 = vunpack.c.l.b16 %v560
    %v645 = vpack.c.b16 %v642, %v641
    %v646 = vpack.c.b16 %v644, %v643
    %649 = vmatprep.subr.bf16.mxu0 0
    %650 = vmatpush1.bf16.msra.mxu0 0
    %651 = vmatprep.subr.bf16.mxu0 0
    %652 = vmatpush1.bf16.msra.mxu0 0
    %653 = vmatprep.subr.bf16.mxu0 0
    %654 = vmatpush1.bf16.msra.mxu0 0
    %655 = vmatprep.subr.bf16.mxu0 0
    %656 = vmatpush1.bf16.msra.mxu0 0
    %657 = vmatprep.subr.bf16.mxu0 0
    %658 = vmatpush1.bf16.msra.mxu0 0
    %659 = vmatprep.subr.bf16.mxu0 0
    %660 = vmatpush1.bf16.msra.mxu0 0
    %661 = vmatprep.subr.bf16.mxu0 0
    %662 = vmatpush1.bf16.msra.mxu0 %v646
    %663 = vmatprep.subr.bf16.mxu0 0
    %664 = vmatpush1.bf16.msra.mxu0 %v645
    %665 = vmatprep.subr.bf16.mxu0 0
    %666 = vmatpush2.bf16.msra.mxu0 0
    %667 = vmatprep.subr.bf16.mxu0 0
    %668 = vmatpush2.bf16.msra.mxu0 0
    %669 = vmatprep.subr.bf16.mxu0 0
    %670 = vmatpush2.bf16.msra.mxu0 0
    %671 = vmatprep.subr.bf16.mxu0 0
    %672 = vmatpush2.bf16.msra.mxu0 0
    %673 = vmatprep.subr.bf16.mxu0 0
    %674 = vmatpush2.bf16.msra.mxu0 0
    %675 = vmatprep.subr.bf16.mxu0 0
    %676 = vmatpush2.bf16.msra.mxu0 0
    %677 = vmatprep.subr.bf16.mxu0 0
    %678 = vmatpush2.bf16.msra.mxu0 0
    %679 = vmatprep.subr.bf16.mxu0 0
    %680 = vmatpush2.bf16.msra.mxu0 0
    %681 = vmatprep.mubr.bf16.mxu0 0
    %682 = vmatmul.mubr.bf16.gmra.mxu0 %v144
    %v683 = vpop.f32.mrf.mxu0
    %v684 = vadd.f32 0.0, %v683
    %v685 = vpop.f32.mrf.mxu0
    %v686 = vpop.f32.mrf.mxu0
    %v687 = vpop.f32.mrf.mxu0
    %688 = vdwg.mxu0
    %v693 = vunpack.c.l.b16 %v561
    %v694 = vunpack.c.l.b16 %v562
    %v695 = vunpack.c.l.b16 %v563
    %v696 = vunpack.c.l.b16 %v564
    %v697 = vpack.c.b16 %v694, %v693
    %v698 = vpack.c.b16 %v696, %v695
    %701 = vmatprep.subr.bf16.mxu0 0
    %702 = vmatpush1.bf16.msra.mxu0 0
    %703 = vmatprep.subr.bf16.mxu0 0
    %704 = vmatpush1.bf16.msra.mxu0 0
    %705 = vmatprep.subr.bf16.mxu0 0
    %706 = vmatpush1.bf16.msra.mxu0 0
    %707 = vmatprep.subr.bf16.mxu0 0
    %708 = vmatpush1.bf16.msra.mxu0 0
    %709 = vmatprep.subr.bf16.mxu0 0
    %710 = vmatpush1.bf16.msra.mxu0 0
    %711 = vmatprep.subr.bf16.mxu0 0
    %712 = vmatpush1.bf16.msra.mxu0 0
    %713 = vmatprep.subr.bf16.mxu0 0
    %714 = vmatpush1.bf16.msra.mxu0 %v698
    %715 = vmatprep.subr.bf16.mxu0 0
    %716 = vmatpush1.bf16.msra.mxu0 %v697
    %717 = vmatprep.subr.bf16.mxu0 0
    %718 = vmatpush2.bf16.msra.mxu0 0
    %719 = vmatprep.subr.bf16.mxu0 0
    %720 = vmatpush2.bf16.msra.mxu0 0
    %721 = vmatprep.subr.bf16.mxu0 0
    %722 = vmatpush2.bf16.msra.mxu0 0
    %723 = vmatprep.subr.bf16.mxu0 0
    %724 = vmatpush2.bf16.msra.mxu0 0
    %725 = vmatprep.subr.bf16.mxu0 0
    %726 = vmatpush2.bf16.msra.mxu0 0
    %727 = vmatprep.subr.bf16.mxu0 0
    %728 = vmatpush2.bf16.msra.mxu0 0
    %729 = vmatprep.subr.bf16.mxu0 0
    %730 = vmatpush2.bf16.msra.mxu0 0
    %731 = vmatprep.subr.bf16.mxu0 0
    %732 = vmatpush2.bf16.msra.mxu0 0
    %733 = vmatprep.mubr.bf16.mxu0 0
    %734 = vmatmul.mubr.bf16.gmra.mxu0 %v144
    %v735 = vpop.f32.mrf.mxu0
    %v736 = vadd.f32 0.0, %v735
    %v737 = vpop.f32.mrf.mxu0
    %v738 = vpop.f32.mrf.mxu0
    %v739 = vpop.f32.mrf.mxu0
    %740 = vdwg.mxu0
    %v745 = vunpack.c.l.b16 %v565
    %v746 = vunpack.c.l.b16 %v566
    %v747 = vunpack.c.l.b16 %v567
    %v748 = vunpack.c.l.b16 %v568
    %v749 = vpack.c.b16 %v746, %v745
    %v750 = vpack.c.b16 %v748, %v747
    %753 = vmatprep.subr.bf16.mxu0 0
    %754 = vmatpush1.bf16.msra.mxu0 0
    %755 = vmatprep.subr.bf16.mxu0 0
    %756 = vmatpush1.bf16.msra.mxu0 0
    %757 = vmatprep.subr.bf16.mxu0 0
    %758 = vmatpush1.bf16.msra.mxu0 0
    %759 = vmatprep.subr.bf16.mxu0 0
    %760 = vmatpush1.bf16.msra.mxu0 0
    %761 = vmatprep.subr.bf16.mxu0 0
    %762 = vmatpush1.bf16.msra.mxu0 0
    %763 = vmatprep.subr.bf16.mxu0 0
    %764 = vmatpush1.bf16.msra.mxu0 0
    %765 = vmatprep.subr.bf16.mxu0 0
    %766 = vmatpush1.bf16.msra.mxu0 %v750
    %767 = vmatprep.subr.bf16.mxu0 0
    %768 = vmatpush1.bf16.msra.mxu0 %v749
    %769 = vmatprep.subr.bf16.mxu0 0
    %770 = vmatpush2.bf16.msra.mxu0 0
    %771 = vmatprep.subr.bf16.mxu0 0
    %772 = vmatpush2.bf16.msra.mxu0 0
    %773 = vmatprep.subr.bf16.mxu0 0
    %774 = vmatpush2.bf16.msra.mxu0 0
    %775 = vmatprep.subr.bf16.mxu0 0
    %776 = vmatpush2.bf16.msra.mxu0 0
    %777 = vmatprep.subr.bf16.mxu0 0
    %778 = vmatpush2.bf16.msra.mxu0 0
    %779 = vmatprep.subr.bf16.mxu0 0
    %780 = vmatpush2.bf16.msra.mxu0 0
    %781 = vmatprep.subr.bf16.mxu0 0
    %782 = vmatpush2.bf16.msra.mxu0 0
    %783 = vmatprep.subr.bf16.mxu0 0
    %784 = vmatpush2.bf16.msra.mxu0 0
    %785 = vmatprep.mubr.bf16.mxu0 0
    %786 = vmatmul.mubr.bf16.gmra.mxu0 %v144
    %v787 = vpop.f32.mrf.mxu0
    %v788 = vadd.f32 0.0, %v787
    %v789 = vpop.f32.mrf.mxu0
    %v790 = vpop.f32.mrf.mxu0
    %v791 = vpop.f32.mrf.mxu0
    %792 = vdwg.mxu0
    %v797 = vunpack.c.l.b16 %v569
    %v798 = vunpack.c.l.b16 %v570
    %v799 = vunpack.c.l.b16 %v571
    %v800 = vunpack.c.l.b16 %v572
    %v801 = vpack.c.b16 %v798, %v797
    %v802 = vpack.c.b16 %v800, %v799
    %805 = vmatprep.subr.bf16.mxu0 0
    %806 = vmatpush1.bf16.msra.mxu0 0
    %807 = vmatprep.subr.bf16.mxu0 0
    %808 = vmatpush1.bf16.msra.mxu0 0
    %809 = vmatprep.subr.bf16.mxu0 0
    %810 = vmatpush1.bf16.msra.mxu0 0
    %811 = vmatprep.subr.bf16.mxu0 0
    %812 = vmatpush1.bf16.msra.mxu0 0
    %813 = vmatprep.subr.bf16.mxu0 0
    %814 = vmatpush1.bf16.msra.mxu0 0
    %815 = vmatprep.subr.bf16.mxu0 0
    %816 = vmatpush1.bf16.msra.mxu0 0
    %817 = vmatprep.subr.bf16.mxu0 0
    %818 = vmatpush1.bf16.msra.mxu0 %v802
    %819 = vmatprep.subr.bf16.mxu0 0
    %820 = vmatpush1.bf16.msra.mxu0 %v801
    %821 = vmatprep.subr.bf16.mxu0 0
    %822 = vmatpush2.bf16.msra.mxu0 0
    %823 = vmatprep.subr.bf16.mxu0 0
    %824 = vmatpush2.bf16.msra.mxu0 0
    %825 = vmatprep.subr.bf16.mxu0 0
    %826 = vmatpush2.bf16.msra.mxu0 0
    %827 = vmatprep.subr.bf16.mxu0 0
    %828 = vmatpush2.bf16.msra.mxu0 0
    %829 = vmatprep.subr.bf16.mxu0 0
    %830 = vmatpush2.bf16.msra.mxu0 0
    %831 = vmatprep.subr.bf16.mxu0 0
    %832 = vmatpush2.bf16.msra.mxu0 0
    %833 = vmatprep.subr.bf16.mxu0 0
    %834 = vmatpush2.bf16.msra.mxu0 0
    %835 = vmatprep.subr.bf16.mxu0 0
    %836 = vmatpush2.bf16.msra.mxu0 0
    %837 = vmatprep.mubr.bf16.mxu0 0
    %838 = vmatmul.mubr.bf16.gmra.mxu0 %v355
    %v839 = vpop.f32.mrf.mxu0
    %v840 = vadd.f32 0.0, %v839
    %v841 = vpop.f32.mrf.mxu0
    %v842 = vpop.f32.mrf.mxu0
    %v843 = vpop.f32.mrf.mxu0
    %844 = vdwg.mxu0
    %v849 = vunpack.c.l.b16 %v573
    %v850 = vunpack.c.l.b16 %v574
    %v851 = vunpack.c.l.b16 %v575
    %v852 = vunpack.c.l.b16 %v576
    %v853 = vpack.c.b16 %v850, %v849
    %v854 = vpack.c.b16 %v852, %v851
    %857 = vmatprep.subr.bf16.mxu0 0
    %858 = vmatpush1.bf16.msra.mxu0 0
    %859 = vmatprep.subr.bf16.mxu0 0
    %860 = vmatpush1.bf16.msra.mxu0 0
    %861 = vmatprep.subr.bf16.mxu0 0
    %862 = vmatpush1.bf16.msra.mxu0 0
    %863 = vmatprep.subr.bf16.mxu0 0
    %864 = vmatpush1.bf16.msra.mxu0 0
    %865 = vmatprep.subr.bf16.mxu0 0
    %866 = vmatpush1.bf16.msra.mxu0 0
    %867 = vmatprep.subr.bf16.mxu0 0
    %868 = vmatpush1.bf16.msra.mxu0 0
    %869 = vmatprep.subr.bf16.mxu0 0
    %870 = vmatpush1.bf16.msra.mxu0 %v854
    %871 = vmatprep.subr.bf16.mxu0 0
    %872 = vmatpush1.bf16.msra.mxu0 %v853
    %873 = vmatprep.subr.bf16.mxu0 0
    %874 = vmatpush2.bf16.msra.mxu0 0
    %875 = vmatprep.subr.bf16.mxu0 0
    %876 = vmatpush2.bf16.msra.mxu0 0
    %877 = vmatprep.subr.bf16.mxu0 0
    %878 = vmatpush2.bf16.msra.mxu0 0
    %879 = vmatprep.subr.bf16.mxu0 0
    %880 = vmatpush2.bf16.msra.mxu0 0
    %881 = vmatprep.subr.bf16.mxu0 0
    %882 = vmatpush2.bf16.msra.mxu0 0
    %883 = vmatprep.subr.bf16.mxu0 0
    %884 = vmatpush2.bf16.msra.mxu0 0
    %885 = vmatprep.subr.bf16.mxu0 0
    %886 = vmatpush2.bf16.msra.mxu0 0
    %887 = vmatprep.subr.bf16.mxu0 0
    %888 = vmatpush2.bf16.msra.mxu0 0
    %889 = vmatprep.mubr.bf16.mxu0 0
    %890 = vmatmul.mubr.bf16.gmra.mxu0 %v355
    %v891 = vpop.f32.mrf.mxu0
    %v892 = vadd.f32 0.0, %v891
    %v893 = vpop.f32.mrf.mxu0
    %v894 = vpop.f32.mrf.mxu0
    %v895 = vpop.f32.mrf.mxu0
    %896 = vdwg.mxu0
    %v901 = vunpack.c.l.b16 %v577
    %v902 = vunpack.c.l.b16 %v578
    %v903 = vunpack.c.l.b16 %v579
    %v904 = vunpack.c.l.b16 %v580
    %v905 = vpack.c.b16 %v902, %v901
    %v906 = vpack.c.b16 %v904, %v903
    %909 = vmatprep.subr.bf16.mxu0 0
    %910 = vmatpush1.bf16.msra.mxu0 0
    %911 = vmatprep.subr.bf16.mxu0 0
    %912 = vmatpush1.bf16.msra.mxu0 0
    %913 = vmatprep.subr.bf16.mxu0 0
    %914 = vmatpush1.bf16.msra.mxu0 0
    %915 = vmatprep.subr.bf16.mxu0 0
    %916 = vmatpush1.bf16.msra.mxu0 0
    %917 = vmatprep.subr.bf16.mxu0 0
    %918 = vmatpush1.bf16.msra.mxu0 0
    %919 = vmatprep.subr.bf16.mxu0 0
    %920 = vmatpush1.bf16.msra.mxu0 0
    %921 = vmatprep.subr.bf16.mxu0 0
    %922 = vmatpush1.bf16.msra.mxu0 %v906
    %923 = vmatprep.subr.bf16.mxu0 0
    %924 = vmatpush1.bf16.msra.mxu0 %v905
    %925 = vmatprep.subr.bf16.mxu0 0
    %926 = vmatpush2.bf16.msra.mxu0 0
    %927 = vmatprep.subr.bf16.mxu0 0
    %928 = vmatpush2.bf16.msra.mxu0 0
    %929 = vmatprep.subr.bf16.mxu0 0
    %930 = vmatpush2.bf16.msra.mxu0 0
    %931 = vmatprep.subr.bf16.mxu0 0
    %932 = vmatpush2.bf16.msra.mxu0 0
    %933 = vmatprep.subr.bf16.mxu0 0
    %934 = vmatpush2.bf16.msra.mxu0 0
    %935 = vmatprep.subr.bf16.mxu0 0
    %936 = vmatpush2.bf16.msra.mxu0 0
    %937 = vmatprep.subr.bf16.mxu0 0
    %938 = vmatpush2.bf16.msra.mxu0 0
    %939 = vmatprep.subr.bf16.mxu0 0
    %940 = vmatpush2.bf16.msra.mxu0 0
    %941 = vmatprep.mubr.bf16.mxu0 0
    %942 = vmatmul.mubr.bf16.gmra.mxu0 %v355
    %v943 = vpop.f32.mrf.mxu0
    %v944 = vadd.f32 0.0, %v943
    %v945 = vpop.f32.mrf.mxu0
    %v946 = vpop.f32.mrf.mxu0
    %v947 = vpop.f32.mrf.mxu0
    %948 = vdwg.mxu0
    %v953 = vunpack.c.l.b16 %v581
    %v954 = vunpack.c.l.b16 %v582
    %v955 = vunpack.c.l.b16 %v583
    %v956 = vunpack.c.l.b16 %v584
    %v957 = vpack.c.b16 %v954, %v953
    %v958 = vpack.c.b16 %v956, %v955
    %961 = vmatprep.subr.bf16.mxu0 0
    %962 = vmatpush1.bf16.msra.mxu0 0
    %963 = vmatprep.subr.bf16.mxu0 0
    %964 = vmatpush1.bf16.msra.mxu0 0
    %965 = vmatprep.subr.bf16.mxu0 0
    %966 = vmatpush1.bf16.msra.mxu0 0
    %967 = vmatprep.subr.bf16.mxu0 0
    %968 = vmatpush1.bf16.msra.mxu0 0
    %969 = vmatprep.subr.bf16.mxu0 0
    %970 = vmatpush1.bf16.msra.mxu0 0
    %971 = vmatprep.subr.bf16.mxu0 0
    %972 = vmatpush1.bf16.msra.mxu0 0
    %973 = vmatprep.subr.bf16.mxu0 0
    %974 = vmatpush1.bf16.msra.mxu0 %v958
    %975 = vmatprep.subr.bf16.mxu0 0
    %976 = vmatpush1.bf16.msra.mxu0 %v957
    %977 = vmatprep.subr.bf16.mxu0 0
    %978 = vmatpush2.bf16.msra.mxu0 0
    %979 = vmatprep.subr.bf16.mxu0 0
    %980 = vmatpush2.bf16.msra.mxu0 0
    %981 = vmatprep.subr.bf16.mxu0 0
    %982 = vmatpush2.bf16.msra.mxu0 0
    %983 = vmatprep.subr.bf16.mxu0 0
    %984 = vmatpush2.bf16.msra.mxu0 0
    %985 = vmatprep.subr.bf16.mxu0 0
    %986 = vmatpush2.bf16.msra.mxu0 0
    %987 = vmatprep.subr.bf16.mxu0 0
    %988 = vmatpush2.bf16.msra.mxu0 0
    %989 = vmatprep.subr.bf16.mxu0 0
    %990 = vmatpush2.bf16.msra.mxu0 0
    %991 = vmatprep.subr.bf16.mxu0 0
    %992 = vmatpush2.bf16.msra.mxu0 0
    %993 = vmatprep.mubr.bf16.mxu0 0
    %994 = vmatmul.mubr.bf16.gmra.mxu0 %v355
    %v995 = vpop.f32.mrf.mxu0
    %v996 = vadd.f32 0.0, %v995
    %v997 = vpop.f32.mrf.mxu0
    %v998 = vpop.f32.mrf.mxu0
    %v999 = vpop.f32.mrf.mxu0
    %1000 = vdwg.mxu0
    %v1001 = vld [vmem:[%s5] sm:$0xf]
    %v1002 = vld [vmem:[%s5 + $0x4] sm:$0xf]
    %v1003 = vld [vmem:[%s5 + $0x8] sm:$0xf]
    %v1004 = vld [vmem:[%s5 + $0xc] sm:$0xf]
    %v1005 = vld [vmem:[%s5 + $0x10] sm:$0xf]
    %v1006 = vld [vmem:[%s5 + $0x14] sm:$0xf]
    %v1007 = vld [vmem:[%s5 + $0x18] sm:$0xf]
    %v1008 = vld [vmem:[%s5 + $0x1c] sm:$0xf]
    %v1009 = vld [vmem:[%s5 + $0x20] sm:$0xf]
    %v1010 = vld [vmem:[%s5 + $0x24] sm:$0xf]
    %v1011 = vld [vmem:[%s5 + $0x28] sm:$0xf]
    %v1012 = vld [vmem:[%s5 + $0x2c] sm:$0xf]
    %v1013 = vld [vmem:[%s5 + $0x30] sm:$0xf]
    %v1014 = vld [vmem:[%s5 + $0x34] sm:$0xf]
    %v1015 = vld [vmem:[%s5 + $0x38] sm:$0xf]
    %v1016 = vld [vmem:[%s5 + $0x3c] sm:$0xf]
    %v1017 = vld [vmem:[%s5 + $0x40] sm:$0xf]
    %v1018 = vld [vmem:[%s5 + $0x44] sm:$0xf]
    %v1019 = vld [vmem:[%s5 + $0x48] sm:$0xf]
    %v1020 = vld [vmem:[%s5 + $0x4c] sm:$0xf]
    %v1021 = vld [vmem:[%s5 + $0x50] sm:$0xf]
    %v1022 = vld [vmem:[%s5 + $0x54] sm:$0xf]
    %v1023 = vld [vmem:[%s5 + $0x58] sm:$0xf]
    %v1024 = vld [vmem:[%s5 + $0x5c] sm:$0xf]
    %v1025 = vld [vmem:[%s5 + $0x60] sm:$0xf]
    %v1026 = vld [vmem:[%s5 + $0x64] sm:$0xf]
    %v1027 = vld [vmem:[%s5 + $0x68] sm:$0xf]
    %v1028 = vld [vmem:[%s5 + $0x6c] sm:$0xf]
    %v1029 = vld [vmem:[%s5 + $0x70] sm:$0xf]
    %v1030 = vld [vmem:[%s5 + $0x74] sm:$0xf]
    %v1031 = vld [vmem:[%s5 + $0x78] sm:$0xf]
    %v1032 = vld [vmem:[%s5 + $0x7c] sm:$0xf]
    %v1037 = vunpack.c.l.b16 %v1001
    %v1038 = vunpack.c.l.b16 %v1002
    %v1039 = vunpack.c.l.b16 %v1003
    %v1040 = vunpack.c.l.b16 %v1004
    %v1041 = vpack.c.b16 %v1038, %v1037
    %v1042 = vpack.c.b16 %v1040, %v1039
    %1045 = vmatprep.subr.bf16.mxu0 0
    %1046 = vmatpush1.bf16.msra.mxu0 0
    %1047 = vmatprep.subr.bf16.mxu0 0
    %1048 = vmatpush1.bf16.msra.mxu0 0
    %1049 = vmatprep.subr.bf16.mxu0 0
    %1050 = vmatpush1.bf16.msra.mxu0 0
    %1051 = vmatprep.subr.bf16.mxu0 0
    %1052 = vmatpush1.bf16.msra.mxu0 0
    %1053 = vmatprep.subr.bf16.mxu0 0
    %1054 = vmatpush1.bf16.msra.mxu0 0
    %1055 = vmatprep.subr.bf16.mxu0 0
    %1056 = vmatpush1.bf16.msra.mxu0 0
    %1057 = vmatprep.subr.bf16.mxu0 0
    %1058 = vmatpush1.bf16.msra.mxu0 %v1042
    %1059 = vmatprep.subr.bf16.mxu0 0
    %1060 = vmatpush1.bf16.msra.mxu0 %v1041
    %1061 = vmatprep.subr.bf16.mxu0 0
    %1062 = vmatpush2.bf16.msra.mxu0 0
    %1063 = vmatprep.subr.bf16.mxu0 0
    %1064 = vmatpush2.bf16.msra.mxu0 0
    %1065 = vmatprep.subr.bf16.mxu0 0
    %1066 = vmatpush2.bf16.msra.mxu0 0
    %1067 = vmatprep.subr.bf16.mxu0 0
    %1068 = vmatpush2.bf16.msra.mxu0 0
    %1069 = vmatprep.subr.bf16.mxu0 0
    %1070 = vmatpush2.bf16.msra.mxu0 0
    %1071 = vmatprep.subr.bf16.mxu0 0
    %1072 = vmatpush2.bf16.msra.mxu0 0
    %1073 = vmatprep.subr.bf16.mxu0 0
    %1074 = vmatpush2.bf16.msra.mxu0 0
    %1075 = vmatprep.subr.bf16.mxu0 0
    %1076 = vmatpush2.bf16.msra.mxu0 0
    %1077 = vmatprep.mubr.bf16.mxu0 0
    %1078 = vmatmul.mubr.bf16.gmra.mxu0 %v144
    %v1079 = vpop.f32.mrf.mxu0
    %v1080 = vadd.f32 0.0, %v1079
    %v1081 = vpop.f32.mrf.mxu0
    %v1082 = vpop.f32.mrf.mxu0
    %v1083 = vpop.f32.mrf.mxu0
    %1084 = vdwg.mxu0
    %v1089 = vunpack.c.l.b16 %v1005
    %v1090 = vunpack.c.l.b16 %v1006
    %v1091 = vunpack.c.l.b16 %v1007
    %v1092 = vunpack.c.l.b16 %v1008
    %v1093 = vpack.c.b16 %v1090, %v1089
    %v1094 = vpack.c.b16 %v1092, %v1091
    %1097 = vmatprep.subr.bf16.mxu0 0
    %1098 = vmatpush1.bf16.msra.mxu0 0
    %1099 = vmatprep.subr.bf16.mxu0 0
    %1100 = vmatpush1.bf16.msra.mxu0 0
    %1101 = vmatprep.subr.bf16.mxu0 0
    %1102 = vmatpush1.bf16.msra.mxu0 0
    %1103 = vmatprep.subr.bf16.mxu0 0
    %1104 = vmatpush1.bf16.msra.mxu0 0
    %1105 = vmatprep.subr.bf16.mxu0 0
    %1106 = vmatpush1.bf16.msra.mxu0 0
    %1107 = vmatprep.subr.bf16.mxu0 0
    %1108 = vmatpush1.bf16.msra.mxu0 0
    %1109 = vmatprep.subr.bf16.mxu0 0
    %1110 = vmatpush1.bf16.msra.mxu0 %v1094
    %1111 = vmatprep.subr.bf16.mxu0 0
    %1112 = vmatpush1.bf16.msra.mxu0 %v1093
    %1113 = vmatprep.subr.bf16.mxu0 0
    %1114 = vmatpush2.bf16.msra.mxu0 0
    %1115 = vmatprep.subr.bf16.mxu0 0
    %1116 = vmatpush2.bf16.msra.mxu0 0
    %1117 = vmatprep.subr.bf16.mxu0 0
    %1118 = vmatpush2.bf16.msra.mxu0 0
    %1119 = vmatprep.subr.bf16.mxu0 0
    %1120 = vmatpush2.bf16.msra.mxu0 0
    %1121 = vmatprep.subr.bf16.mxu0 0
    %1122 = vmatpush2.bf16.msra.mxu0 0
    %1123 = vmatprep.subr.bf16.mxu0 0
    %1124 = vmatpush2.bf16.msra.mxu0 0
    %1125 = vmatprep.subr.bf16.mxu0 0
    %1126 = vmatpush2.bf16.msra.mxu0 0
    %1127 = vmatprep.subr.bf16.mxu0 0
    %1128 = vmatpush2.bf16.msra.mxu0 0
    %1129 = vmatprep.mubr.bf16.mxu0 0
    %1130 = vmatmul.mubr.bf16.gmra.mxu0 %v144
    %v1131 = vpop.f32.mrf.mxu0
    %v1132 = vadd.f32 0.0, %v1131
    %v1133 = vpop.f32.mrf.mxu0
    %v1134 = vpop.f32.mrf.mxu0
    %v1135 = vpop.f32.mrf.mxu0
    %1136 = vdwg.mxu0
    %v1141 = vunpack.c.l.b16 %v1009
    %v1142 = vunpack.c.l.b16 %v1010
    %v1143 = vunpack.c.l.b16 %v1011
    %v1144 = vunpack.c.l.b16 %v1012
    %v1145 = vpack.c.b16 %v1142, %v1141
    %v1146 = vpack.c.b16 %v1144, %v1143
    %1149 = vmatprep.subr.bf16.mxu0 0
    %1150 = vmatpush1.bf16.msra.mxu0 0
    %1151 = vmatprep.subr.bf16.mxu0 0
    %1152 = vmatpush1.bf16.msra.mxu0 0
    %1153 = vmatprep.subr.bf16.mxu0 0
    %1154 = vmatpush1.bf16.msra.mxu0 0
    %1155 = vmatprep.subr.bf16.mxu0 0
    %1156 = vmatpush1.bf16.msra.mxu0 0
    %1157 = vmatprep.subr.bf16.mxu0 0
    %1158 = vmatpush1.bf16.msra.mxu0 0
    %1159 = vmatprep.subr.bf16.mxu0 0
    %1160 = vmatpush1.bf16.msra.mxu0 0
    %1161 = vmatprep.subr.bf16.mxu0 0
    %1162 = vmatpush1.bf16.msra.mxu0 %v1146
    %1163 = vmatprep.subr.bf16.mxu0 0
    %1164 = vmatpush1.bf16.msra.mxu0 %v1145
    %1165 = vmatprep.subr.bf16.mxu0 0
    %1166 = vmatpush2.bf16.msra.mxu0 0
    %1167 = vmatprep.subr.bf16.mxu0 0
    %1168 = vmatpush2.bf16.msra.mxu0 0
    %1169 = vmatprep.subr.bf16.mxu0 0
    %1170 = vmatpush2.bf16.msra.mxu0 0
    %1171 = vmatprep.subr.bf16.mxu0 0
    %1172 = vmatpush2.bf16.msra.mxu0 0
    %1173 = vmatprep.subr.bf16.mxu0 0
    %1174 = vmatpush2.bf16.msra.mxu0 0
    %1175 = vmatprep.subr.bf16.mxu0 0
    %1176 = vmatpush2.bf16.msra.mxu0 0
    %1177 = vmatprep.subr.bf16.mxu0 0
    %1178 = vmatpush2.bf16.msra.mxu0 0
    %1179 = vmatprep.subr.bf16.mxu0 0
    %1180 = vmatpush2.bf16.msra.mxu0 0
    %1181 = vmatprep.mubr.bf16.mxu0 0
    %1182 = vmatmul.mubr.bf16.gmra.mxu0 %v144
    %v1183 = vpop.f32.mrf.mxu0
    %v1184 = vadd.f32 0.0, %v1183
    %v1185 = vpop.f32.mrf.mxu0
    %v1186 = vpop.f32.mrf.mxu0
    %v1187 = vpop.f32.mrf.mxu0
    %1188 = vdwg.mxu0
    %v1193 = vunpack.c.l.b16 %v1013
    %v1194 = vunpack.c.l.b16 %v1014
    %v1195 = vunpack.c.l.b16 %v1015
    %v1196 = vunpack.c.l.b16 %v1016
    %v1197 = vpack.c.b16 %v1194, %v1193
    %v1198 = vpack.c.b16 %v1196, %v1195
    %1201 = vmatprep.subr.bf16.mxu0 0
    %1202 = vmatpush1.bf16.msra.mxu0 0
    %1203 = vmatprep.subr.bf16.mxu0 0
    %1204 = vmatpush1.bf16.msra.mxu0 0
    %1205 = vmatprep.subr.bf16.mxu0 0
    %1206 = vmatpush1.bf16.msra.mxu0 0
    %1207 = vmatprep.subr.bf16.mxu0 0
    %1208 = vmatpush1.bf16.msra.mxu0 0
    %1209 = vmatprep.subr.bf16.mxu0 0
    %1210 = vmatpush1.bf16.msra.mxu0 0
    %1211 = vmatprep.subr.bf16.mxu0 0
    %1212 = vmatpush1.bf16.msra.mxu0 0
    %1213 = vmatprep.subr.bf16.mxu0 0
    %1214 = vmatpush1.bf16.msra.mxu0 %v1198
    %1215 = vmatprep.subr.bf16.mxu0 0
    %1216 = vmatpush1.bf16.msra.mxu0 %v1197
    %1217 = vmatprep.subr.bf16.mxu0 0
    %1218 = vmatpush2.bf16.msra.mxu0 0
    %1219 = vmatprep.subr.bf16.mxu0 0
    %1220 = vmatpush2.bf16.msra.mxu0 0
    %1221 = vmatprep.subr.bf16.mxu0 0
    %1222 = vmatpush2.bf16.msra.mxu0 0
    %1223 = vmatprep.subr.bf16.mxu0 0
    %1224 = vmatpush2.bf16.msra.mxu0 0
    %1225 = vmatprep.subr.bf16.mxu0 0
    %1226 = vmatpush2.bf16.msra.mxu0 0
    %1227 = vmatprep.subr.bf16.mxu0 0
    %1228 = vmatpush2.bf16.msra.mxu0 0
    %1229 = vmatprep.subr.bf16.mxu0 0
    %1230 = vmatpush2.bf16.msra.mxu0 0
    %1231 = vmatprep.subr.bf16.mxu0 0
    %1232 = vmatpush2.bf16.msra.mxu0 0
    %1233 = vmatprep.mubr.bf16.mxu0 0
    %1234 = vmatmul.mubr.bf16.gmra.mxu0 %v144
    %v1235 = vpop.f32.mrf.mxu0
    %v1236 = vadd.f32 0.0, %v1235
    %v1237 = vpop.f32.mrf.mxu0
    %v1238 = vpop.f32.mrf.mxu0
    %v1239 = vpop.f32.mrf.mxu0
    %1240 = vdwg.mxu0
    %v1245 = vunpack.c.l.b16 %v1017
    %v1246 = vunpack.c.l.b16 %v1018
    %v1247 = vunpack.c.l.b16 %v1019
    %v1248 = vunpack.c.l.b16 %v1020
    %v1249 = vpack.c.b16 %v1246, %v1245
    %v1250 = vpack.c.b16 %v1248, %v1247
    %1253 = vmatprep.subr.bf16.mxu0 0
    %1254 = vmatpush1.bf16.msra.mxu0 0
    %1255 = vmatprep.subr.bf16.mxu0 0
    %1256 = vmatpush1.bf16.msra.mxu0 0
    %1257 = vmatprep.subr.bf16.mxu0 0
    %1258 = vmatpush1.bf16.msra.mxu0 0
    %1259 = vmatprep.subr.bf16.mxu0 0
    %1260 = vmatpush1.bf16.msra.mxu0 0
    %1261 = vmatprep.subr.bf16.mxu0 0
    %1262 = vmatpush1.bf16.msra.mxu0 0
    %1263 = vmatprep.subr.bf16.mxu0 0
    %1264 = vmatpush1.bf16.msra.mxu0 0
    %1265 = vmatprep.subr.bf16.mxu0 0
    %1266 = vmatpush1.bf16.msra.mxu0 %v1250
    %1267 = vmatprep.subr.bf16.mxu0 0
    %1268 = vmatpush1.bf16.msra.mxu0 %v1249
    %1269 = vmatprep.subr.bf16.mxu0 0
    %1270 = vmatpush2.bf16.msra.mxu0 0
    %1271 = vmatprep.subr.bf16.mxu0 0
    %1272 = vmatpush2.bf16.msra.mxu0 0
    %1273 = vmatprep.subr.bf16.mxu0 0
    %1274 = vmatpush2.bf16.msra.mxu0 0
    %1275 = vmatprep.subr.bf16.mxu0 0
    %1276 = vmatpush2.bf16.msra.mxu0 0
    %1277 = vmatprep.subr.bf16.mxu0 0
    %1278 = vmatpush2.bf16.msra.mxu0 0
    %1279 = vmatprep.subr.bf16.mxu0 0
    %1280 = vmatpush2.bf16.msra.mxu0 0
    %1281 = vmatprep.subr.bf16.mxu0 0
    %1282 = vmatpush2.bf16.msra.mxu0 0
    %1283 = vmatprep.subr.bf16.mxu0 0
    %1284 = vmatpush2.bf16.msra.mxu0 0
    %1285 = vmatprep.mubr.bf16.mxu0 0
    %1286 = vmatmul.mubr.bf16.gmra.mxu0 %v355
    %v1287 = vpop.f32.mrf.mxu0
    %v1288 = vadd.f32 0.0, %v1287
    %v1289 = vpop.f32.mrf.mxu0
    %v1290 = vpop.f32.mrf.mxu0
    %v1291 = vpop.f32.mrf.mxu0
    %1292 = vdwg.mxu0
    %v1297 = vunpack.c.l.b16 %v1021
    %v1298 = vunpack.c.l.b16 %v1022
    %v1299 = vunpack.c.l.b16 %v1023
    %v1300 = vunpack.c.l.b16 %v1024
    %v1301 = vpack.c.b16 %v1298, %v1297
    %v1302 = vpack.c.b16 %v1300, %v1299
    %1305 = vmatprep.subr.bf16.mxu0 0
    %1306 = vmatpush1.bf16.msra.mxu0 0
    %1307 = vmatprep.subr.bf16.mxu0 0
    %1308 = vmatpush1.bf16.msra.mxu0 0
    %1309 = vmatprep.subr.bf16.mxu0 0
    %1310 = vmatpush1.bf16.msra.mxu0 0
    %1311 = vmatprep.subr.bf16.mxu0 0
    %1312 = vmatpush1.bf16.msra.mxu0 0
    %1313 = vmatprep.subr.bf16.mxu0 0
    %1314 = vmatpush1.bf16.msra.mxu0 0
    %1315 = vmatprep.subr.bf16.mxu0 0
    %1316 = vmatpush1.bf16.msra.mxu0 0
    %1317 = vmatprep.subr.bf16.mxu0 0
    %1318 = vmatpush1.bf16.msra.mxu0 %v1302
    %1319 = vmatprep.subr.bf16.mxu0 0
    %1320 = vmatpush1.bf16.msra.mxu0 %v1301
    %1321 = vmatprep.subr.bf16.mxu0 0
    %1322 = vmatpush2.bf16.msra.mxu0 0
    %1323 = vmatprep.subr.bf16.mxu0 0
    %1324 = vmatpush2.bf16.msra.mxu0 0
    %1325 = vmatprep.subr.bf16.mxu0 0
    %1326 = vmatpush2.bf16.msra.mxu0 0
    %1327 = vmatprep.subr.bf16.mxu0 0
    %1328 = vmatpush2.bf16.msra.mxu0 0
    %1329 = vmatprep.subr.bf16.mxu0 0
    %1330 = vmatpush2.bf16.msra.mxu0 0
    %1331 = vmatprep.subr.bf16.mxu0 0
    %1332 = vmatpush2.bf16.msra.mxu0 0
    %1333 = vmatprep.subr.bf16.mxu0 0
    %1334 = vmatpush2.bf16.msra.mxu0 0
    %1335 = vmatprep.subr.bf16.mxu0 0
    %1336 = vmatpush2.bf16.msra.mxu0 0
    %1337 = vmatprep.mubr.bf16.mxu0 0
    %1338 = vmatmul.mubr.bf16.gmra.mxu0 %v355
    %v1339 = vpop.f32.mrf.mxu0
    %v1340 = vadd.f32 0.0, %v1339
    %v1341 = vpop.f32.mrf.mxu0
    %v1342 = vpop.f32.mrf.mxu0
    %v1343 = vpop.f32.mrf.mxu0
    %1344 = vdwg.mxu0
    %v1349 = vunpack.c.l.b16 %v1025
    %v1350 = vunpack.c.l.b16 %v1026
    %v1351 = vunpack.c.l.b16 %v1027
    %v1352 = vunpack.c.l.b16 %v1028
    %v1353 = vpack.c.b16 %v1350, %v1349
    %v1354 = vpack.c.b16 %v1352, %v1351
    %1357 = vmatprep.subr.bf16.mxu0 0
    %1358 = vmatpush1.bf16.msra.mxu0 0
    %1359 = vmatprep.subr.bf16.mxu0 0
    %1360 = vmatpush1.bf16.msra.mxu0 0
    %1361 = vmatprep.subr.bf16.mxu0 0
    %1362 = vmatpush1.bf16.msra.mxu0 0
    %1363 = vmatprep.subr.bf16.mxu0 0
    %1364 = vmatpush1.bf16.msra.mxu0 0
    %1365 = vmatprep.subr.bf16.mxu0 0
    %1366 = vmatpush1.bf16.msra.mxu0 0
    %1367 = vmatprep.subr.bf16.mxu0 0
    %1368 = vmatpush1.bf16.msra.mxu0 0
    %1369 = vmatprep.subr.bf16.mxu0 0
    %1370 = vmatpush1.bf16.msra.mxu0 %v1354
    %1371 = vmatprep.subr.bf16.mxu0 0
    %1372 = vmatpush1.bf16.msra.mxu0 %v1353
    %1373 = vmatprep.subr.bf16.mxu0 0
    %1374 = vmatpush2.bf16.msra.mxu0 0
    %1375 = vmatprep.subr.bf16.mxu0 0
    %1376 = vmatpush2.bf16.msra.mxu0 0
    %1377 = vmatprep.subr.bf16.mxu0 0
    %1378 = vmatpush2.bf16.msra.mxu0 0
    %1379 = vmatprep.subr.bf16.mxu0 0
    %1380 = vmatpush2.bf16.msra.mxu0 0
    %1381 = vmatprep.subr.bf16.mxu0 0
    %1382 = vmatpush2.bf16.msra.mxu0 0
    %1383 = vmatprep.subr.bf16.mxu0 0
    %1384 = vmatpush2.bf16.msra.mxu0 0
    %1385 = vmatprep.subr.bf16.mxu0 0
    %1386 = vmatpush2.bf16.msra.mxu0 0
    %1387 = vmatprep.subr.bf16.mxu0 0
    %1388 = vmatpush2.bf16.msra.mxu0 0
    %1389 = vmatprep.mubr.bf16.mxu0 0
    %1390 = vmatmul.mubr.bf16.gmra.mxu0 %v355
    %v1391 = vpop.f32.mrf.mxu0
    %v1392 = vadd.f32 0.0, %v1391
    %v1393 = vpop.f32.mrf.mxu0
    %v1394 = vpop.f32.mrf.mxu0
    %v1395 = vpop.f32.mrf.mxu0
    %1396 = vdwg.mxu0
    %v1401 = vunpack.c.l.b16 %v1029
    %v1402 = vunpack.c.l.b16 %v1030
    %v1403 = vunpack.c.l.b16 %v1031
    %v1404 = vunpack.c.l.b16 %v1032
    %v1405 = vpack.c.b16 %v1402, %v1401
    %v1406 = vpack.c.b16 %v1404, %v1403
    %1409 = vmatprep.subr.bf16.mxu0 0
    %1410 = vmatpush1.bf16.msra.mxu0 0
    %1411 = vmatprep.subr.bf16.mxu0 0
    %1412 = vmatpush1.bf16.msra.mxu0 0
    %1413 = vmatprep.subr.bf16.mxu0 0
    %1414 = vmatpush1.bf16.msra.mxu0 0
    %1415 = vmatprep.subr.bf16.mxu0 0
    %1416 = vmatpush1.bf16.msra.mxu0 0
    %1417 = vmatprep.subr.bf16.mxu0 0
    %1418 = vmatpush1.bf16.msra.mxu0 0
    %1419 = vmatprep.subr.bf16.mxu0 0
    %1420 = vmatpush1.bf16.msra.mxu0 0
    %1421 = vmatprep.subr.bf16.mxu0 0
    %1422 = vmatpush1.bf16.msra.mxu0 %v1406
    %1423 = vmatprep.subr.bf16.mxu0 0
    %1424 = vmatpush1.bf16.msra.mxu0 %v1405
    %1425 = vmatprep.subr.bf16.mxu0 0
    %1426 = vmatpush2.bf16.msra.mxu0 0
    %1427 = vmatprep.subr.bf16.mxu0 0
    %1428 = vmatpush2.bf16.msra.mxu0 0
    %1429 = vmatprep.subr.bf16.mxu0 0
    %1430 = vmatpush2.bf16.msra.mxu0 0
    %1431 = vmatprep.subr.bf16.mxu0 0
    %1432 = vmatpush2.bf16.msra.mxu0 0
    %1433 = vmatprep.subr.bf16.mxu0 0
    %1434 = vmatpush2.bf16.msra.mxu0 0
    %1435 = vmatprep.subr.bf16.mxu0 0
    %1436 = vmatpush2.bf16.msra.mxu0 0
    %1437 = vmatprep.subr.bf16.mxu0 0
    %1438 = vmatpush2.bf16.msra.mxu0 0
    %1439 = vmatprep.subr.bf16.mxu0 0
    %1440 = vmatpush2.bf16.msra.mxu0 0
    %1441 = vmatprep.mubr.bf16.mxu0 0
    %1442 = vmatmul.mubr.bf16.gmra.mxu0 %v355
    %v1443 = vpop.f32.mrf.mxu0
    %v1444 = vadd.f32 0.0, %v1443
    %v1445 = vpop.f32.mrf.mxu0
    %v1446 = vpop.f32.mrf.mxu0
    %v1447 = vpop.f32.mrf.mxu0
    %1448 = vdwg.mxu0
    %v1449 = vpack.c.bf16 %v181, %v181
    %v1450 = vpack.c.bf16 %v233, %v233
    %v1451 = vpack.c.bf16 %v285, %v285
    %v1452 = vpack.c.bf16 %v337, %v337
    %v1453 = vpack.c.bf16 %v392, %v392
    %v1454 = vpack.c.bf16 %v444, %v444
    %v1455 = vpack.c.bf16 %v496, %v496
    %v1456 = vpack.c.bf16 %v548, %v548
    %v1457 = vpack.c.bf16 %v632, %v632
    %v1458 = vpack.c.bf16 %v684, %v684
    %v1459 = vpack.c.bf16 %v736, %v736
    %v1460 = vpack.c.bf16 %v788, %v788
    %v1461 = vpack.c.bf16 %v840, %v840
    %v1462 = vpack.c.bf16 %v892, %v892
    %v1463 = vpack.c.bf16 %v944, %v944
    %v1464 = vpack.c.bf16 %v996, %v996
    %vm1465 = vcmask 64512
    %v1467 = vsel %vm1465, %v1449, 0
    %v1470 = vsel %vm1465, %v1457, 0
    %1472 = vmatprep.subr.bf16.mxu0 0
    %1473 = vmatpush1.bf16.xpose.msra.mxu0 0
    %1474 = vmatprep.subr.bf16.mxu0 0
    %1475 = vmatpush1.bf16.xpose.msra.mxu0 0
    %1476 = vmatprep.subr.bf16.mxu0 0
    %1477 = vmatpush1.bf16.xpose.msra.mxu0 0
    %1478 = vmatprep.subr.bf16.mxu0 0
    %1479 = vmatpush1.bf16.xpose.msra.mxu0 0
    %1480 = vmatprep.subr.bf16.mxu0 0
    %1481 = vmatpush1.bf16.xpose.msra.mxu0 0
    %1482 = vmatprep.subr.bf16.mxu0 0
    %1483 = vmatpush1.bf16.xpose.msra.mxu0 0
    %1484 = vmatprep.subr.bf16.mxu0 0
    %1485 = vmatpush1.bf16.xpose.msra.mxu0 0
    %1486 = vmatprep.subr.bf16.mxu0 0
    %1487 = vmatpush1.bf16.xpose.msra.mxu0 %v1470
    %1488 = vmatprep.subr.bf16.mxu0 0
    %1489 = vmatpush2.bf16.xpose.msra.mxu0 0
    %1490 = vmatprep.subr.bf16.mxu0 0
    %1491 = vmatpush2.bf16.xpose.msra.mxu0 0
    %1492 = vmatprep.subr.bf16.mxu0 0
    %1493 = vmatpush2.bf16.xpose.msra.mxu0 0
    %1494 = vmatprep.subr.bf16.mxu0 0
    %1495 = vmatpush2.bf16.xpose.msra.mxu0 0
    %1496 = vmatprep.subr.bf16.mxu0 0
    %1497 = vmatpush2.bf16.xpose.msra.mxu0 0
    %1498 = vmatprep.subr.bf16.mxu0 0
    %1499 = vmatpush2.bf16.xpose.msra.mxu0 0
    %1500 = vmatprep.subr.bf16.mxu0 0
    %1501 = vmatpush2.bf16.xpose.msra.mxu0 0
    %1502 = vmatprep.subr.bf16.mxu0 0
    %1503 = vmatpush2.bf16.xpose.msra.mxu0 0
    %1504 = vmatprep.mubr.bf16.mxu0 0
    %1505 = vmatmul.mubr.bf16.gmra.mxu0 %v1467
    %v1506 = vpop.f32.mrf.mxu0
    %v1507 = vadd.f32 0.0, %v1506
    %v1508 = vpop.f32.mrf.mxu0
    %v1509 = vpop.f32.mrf.mxu0
    %v1510 = vpop.f32.mrf.mxu0
    %1511 = vdwg.mxu0
    %v1513 = vsel %vm1465, %v1450, 0
    %v1516 = vsel %vm1465, %v1458, 0
    %1518 = vmatprep.subr.bf16.mxu0 0
    %1519 = vmatpush1.bf16.xpose.msra.mxu0 0
    %1520 = vmatprep.subr.bf16.mxu0 0
    %1521 = vmatpush1.bf16.xpose.msra.mxu0 0
    %1522 = vmatprep.subr.bf16.mxu0 0
    %1523 = vmatpush1.bf16.xpose.msra.mxu0 0
    %1524 = vmatprep.subr.bf16.mxu0 0
    %1525 = vmatpush1.bf16.xpose.msra.mxu0 0
    %1526 = vmatprep.subr.bf16.mxu0 0
    %1527 = vmatpush1.bf16.xpose.msra.mxu0 0
    %1528 = vmatprep.subr.bf16.mxu0 0
    %1529 = vmatpush1.bf16.xpose.msra.mxu0 0
    %1530 = vmatprep.subr.bf16.mxu0 0
    %1531 = vmatpush1.bf16.xpose.msra.mxu0 0
    %1532 = vmatprep.subr.bf16.mxu0 0
    %1533 = vmatpush1.bf16.xpose.msra.mxu0 %v1516
    %1534 = vmatprep.subr.bf16.mxu0 0
    %1535 = vmatpush2.bf16.xpose.msra.mxu0 0
    %1536 = vmatprep.subr.bf16.mxu0 0
    %1537 = vmatpush2.bf16.xpose.msra.mxu0 0
    %1538 = vmatprep.subr.bf16.mxu0 0
    %1539 = vmatpush2.bf16.xpose.msra.mxu0 0
    %1540 = vmatprep.subr.bf16.mxu0 0
    %1541 = vmatpush2.bf16.xpose.msra.mxu0 0
    %1542 = vmatprep.subr.bf16.mxu0 0
    %1543 = vmatpush2.bf16.xpose.msra.mxu0 0
    %1544 = vmatprep.subr.bf16.mxu0 0
    %1545 = vmatpush2.bf16.xpose.msra.mxu0 0
    %1546 = vmatprep.subr.bf16.mxu0 0
    %1547 = vmatpush2.bf16.xpose.msra.mxu0 0
    %1548 = vmatprep.subr.bf16.mxu0 0
    %1549 = vmatpush2.bf16.xpose.msra.mxu0 0
    %1550 = vmatprep.mubr.bf16.mxu0 0
    %1551 = vmatmul.mubr.bf16.gmra.mxu0 %v1513
    %v1552 = vpop.f32.mrf.mxu0
    %v1553 = vadd.f32 0.0, %v1552
    %v1554 = vpop.f32.mrf.mxu0
    %v1555 = vpop.f32.mrf.mxu0
    %v1556 = vpop.f32.mrf.mxu0
    %1557 = vdwg.mxu0
    %v1559 = vsel %vm1465, %v1451, 0
    %v1562 = vsel %vm1465, %v1459, 0
    %1564 = vmatprep.subr.bf16.mxu0 0
    %1565 = vmatpush1.bf16.xpose.msra.mxu0 0
    %1566 = vmatprep.subr.bf16.mxu0 0
    %1567 = vmatpush1.bf16.xpose.msra.mxu0 0
    %1568 = vmatprep.subr.bf16.mxu0 0
    %1569 = vmatpush1.bf16.xpose.msra.mxu0 0
    %1570 = vmatprep.subr.bf16.mxu0 0
    %1571 = vmatpush1.bf16.xpose.msra.mxu0 0
    %1572 = vmatprep.subr.bf16.mxu0 0
    %1573 = vmatpush1.bf16.xpose.msra.mxu0 0
    %1574 = vmatprep.subr.bf16.mxu0 0
    %1575 = vmatpush1.bf16.xpose.msra.mxu0 0
    %1576 = vmatprep.subr.bf16.mxu0 0
    %1577 = vmatpush1.bf16.xpose.msra.mxu0 0
    %1578 = vmatprep.subr.bf16.mxu0 0
    %1579 = vmatpush1.bf16.xpose.msra.mxu0 %v1562
    %1580 = vmatprep.subr.bf16.mxu0 0
    %1581 = vmatpush2.bf16.xpose.msra.mxu0 0
    %1582 = vmatprep.subr.bf16.mxu0 0
    %1583 = vmatpush2.bf16.xpose.msra.mxu0 0
    %1584 = vmatprep.subr.bf16.mxu0 0
    %1585 = vmatpush2.bf16.xpose.msra.mxu0 0
    %1586 = vmatprep.subr.bf16.mxu0 0
    %1587 = vmatpush2.bf16.xpose.msra.mxu0 0
    %1588 = vmatprep.subr.bf16.mxu0 0
    %1589 = vmatpush2.bf16.xpose.msra.mxu0 0
    %1590 = vmatprep.subr.bf16.mxu0 0
    %1591 = vmatpush2.bf16.xpose.msra.mxu0 0
    %1592 = vmatprep.subr.bf16.mxu0 0
    %1593 = vmatpush2.bf16.xpose.msra.mxu0 0
    %1594 = vmatprep.subr.bf16.mxu0 0
    %1595 = vmatpush2.bf16.xpose.msra.mxu0 0
    %1596 = vmatprep.mubr.bf16.mxu0 0
    %1597 = vmatmul.mubr.bf16.gmra.mxu0 %v1559
    %v1598 = vpop.f32.mrf.mxu0
    %v1599 = vadd.f32 0.0, %v1598
    %v1600 = vpop.f32.mrf.mxu0
    %v1601 = vpop.f32.mrf.mxu0
    %v1602 = vpop.f32.mrf.mxu0
    %1603 = vdwg.mxu0
    %v1605 = vsel %vm1465, %v1452, 0
    %v1608 = vsel %vm1465, %v1460, 0
    %1610 = vmatprep.subr.bf16.mxu0 0
    %1611 = vmatpush1.bf16.xpose.msra.mxu0 0
    %1612 = vmatprep.subr.bf16.mxu0 0
    %1613 = vmatpush1.bf16.xpose.msra.mxu0 0
    %1614 = vmatprep.subr.bf16.mxu0 0
    %1615 = vmatpush1.bf16.xpose.msra.mxu0 0
    %1616 = vmatprep.subr.bf16.mxu0 0
    %1617 = vmatpush1.bf16.xpose.msra.mxu0 0
    %1618 = vmatprep.subr.bf16.mxu0 0
    %1619 = vmatpush1.bf16.xpose.msra.mxu0 0
    %1620 = vmatprep.subr.bf16.mxu0 0
    %1621 = vmatpush1.bf16.xpose.msra.mxu0 0
    %1622 = vmatprep.subr.bf16.mxu0 0
    %1623 = vmatpush1.bf16.xpose.msra.mxu0 0
    %1624 = vmatprep.subr.bf16.mxu0 0
    %1625 = vmatpush1.bf16.xpose.msra.mxu0 %v1608
    %1626 = vmatprep.subr.bf16.mxu0 0
    %1627 = vmatpush2.bf16.xpose.msra.mxu0 0
    %1628 = vmatprep.subr.bf16.mxu0 0
    %1629 = vmatpush2.bf16.xpose.msra.mxu0 0
    %1630 = vmatprep.subr.bf16.mxu0 0
    %1631 = vmatpush2.bf16.xpose.msra.mxu0 0
    %1632 = vmatprep.subr.bf16.mxu0 0
    %1633 = vmatpush2.bf16.xpose.msra.mxu0 0
    %1634 = vmatprep.subr.bf16.mxu0 0
    %1635 = vmatpush2.bf16.xpose.msra.mxu0 0
    %1636 = vmatprep.subr.bf16.mxu0 0
    %1637 = vmatpush2.bf16.xpose.msra.mxu0 0
    %1638 = vmatprep.subr.bf16.mxu0 0
    %1639 = vmatpush2.bf16.xpose.msra.mxu0 0
    %1640 = vmatprep.subr.bf16.mxu0 0
    %1641 = vmatpush2.bf16.xpose.msra.mxu0 0
    %1642 = vmatprep.mubr.bf16.mxu0 0
    %1643 = vmatmul.mubr.bf16.gmra.mxu0 %v1605
    %v1644 = vpop.f32.mrf.mxu0
    %v1645 = vadd.f32 0.0, %v1644
    %v1646 = vpop.f32.mrf.mxu0
    %v1647 = vpop.f32.mrf.mxu0
    %v1648 = vpop.f32.mrf.mxu0
    %1649 = vdwg.mxu0
    %v1651 = vsel %vm1465, %v1453, 0
    %v1654 = vsel %vm1465, %v1461, 0
    %1656 = vmatprep.subr.bf16.mxu0 0
    %1657 = vmatpush1.bf16.xpose.msra.mxu0 0
    %1658 = vmatprep.subr.bf16.mxu0 0
    %1659 = vmatpush1.bf16.xpose.msra.mxu0 0
    %1660 = vmatprep.subr.bf16.mxu0 0
    %1661 = vmatpush1.bf16.xpose.msra.mxu0 0
    %1662 = vmatprep.subr.bf16.mxu0 0
    %1663 = vmatpush1.bf16.xpose.msra.mxu0 0
    %1664 = vmatprep.subr.bf16.mxu0 0
    %1665 = vmatpush1.bf16.xpose.msra.mxu0 0
    %1666 = vmatprep.subr.bf16.mxu0 0
    %1667 = vmatpush1.bf16.xpose.msra.mxu0 0
    %1668 = vmatprep.subr.bf16.mxu0 0
    %1669 = vmatpush1.bf16.xpose.msra.mxu0 0
    %1670 = vmatprep.subr.bf16.mxu0 0
    %1671 = vmatpush1.bf16.xpose.msra.mxu0 %v1654
    %1672 = vmatprep.subr.bf16.mxu0 0
    %1673 = vmatpush2.bf16.xpose.msra.mxu0 0
    %1674 = vmatprep.subr.bf16.mxu0 0
    %1675 = vmatpush2.bf16.xpose.msra.mxu0 0
    %1676 = vmatprep.subr.bf16.mxu0 0
    %1677 = vmatpush2.bf16.xpose.msra.mxu0 0
    %1678 = vmatprep.subr.bf16.mxu0 0
    %1679 = vmatpush2.bf16.xpose.msra.mxu0 0
    %1680 = vmatprep.subr.bf16.mxu0 0
    %1681 = vmatpush2.bf16.xpose.msra.mxu0 0
    %1682 = vmatprep.subr.bf16.mxu0 0
    %1683 = vmatpush2.bf16.xpose.msra.mxu0 0
    %1684 = vmatprep.subr.bf16.mxu0 0
    %1685 = vmatpush2.bf16.xpose.msra.mxu0 0
    %1686 = vmatprep.subr.bf16.mxu0 0
    %1687 = vmatpush2.bf16.xpose.msra.mxu0 0
    %1688 = vmatprep.mubr.bf16.mxu0 0
    %1689 = vmatmul.mubr.bf16.gmra.mxu0 %v1651
    %v1690 = vpop.f32.mrf.mxu0
    %v1691 = vadd.f32 0.0, %v1690
    %v1692 = vpop.f32.mrf.mxu0
    %v1693 = vpop.f32.mrf.mxu0
    %v1694 = vpop.f32.mrf.mxu0
    %1695 = vdwg.mxu0
    %v1697 = vsel %vm1465, %v1454, 0
    %v1700 = vsel %vm1465, %v1462, 0
    %1702 = vmatprep.subr.bf16.mxu0 0
    %1703 = vmatpush1.bf16.xpose.msra.mxu0 0
    %1704 = vmatprep.subr.bf16.mxu0 0
    %1705 = vmatpush1.bf16.xpose.msra.mxu0 0
    %1706 = vmatprep.subr.bf16.mxu0 0
    %1707 = vmatpush1.bf16.xpose.msra.mxu0 0
    %1708 = vmatprep.subr.bf16.mxu0 0
    %1709 = vmatpush1.bf16.xpose.msra.mxu0 0
    %1710 = vmatprep.subr.bf16.mxu0 0
    %1711 = vmatpush1.bf16.xpose.msra.mxu0 0
    %1712 = vmatprep.subr.bf16.mxu0 0
    %1713 = vmatpush1.bf16.xpose.msra.mxu0 0
    %1714 = vmatprep.subr.bf16.mxu0 0
    %1715 = vmatpush1.bf16.xpose.msra.mxu0 0
    %1716 = vmatprep.subr.bf16.mxu0 0
    %1717 = vmatpush1.bf16.xpose.msra.mxu0 %v1700
    %1718 = vmatprep.subr.bf16.mxu0 0
    %1719 = vmatpush2.bf16.xpose.msra.mxu0 0
    %1720 = vmatprep.subr.bf16.mxu0 0
    %1721 = vmatpush2.bf16.xpose.msra.mxu0 0
    %1722 = vmatprep.subr.bf16.mxu0 0
    %1723 = vmatpush2.bf16.xpose.msra.mxu0 0
    %1724 = vmatprep.subr.bf16.mxu0 0
    %1725 = vmatpush2.bf16.xpose.msra.mxu0 0
    %1726 = vmatprep.subr.bf16.mxu0 0
    %1727 = vmatpush2.bf16.xpose.msra.mxu0 0
    %1728 = vmatprep.subr.bf16.mxu0 0
    %1729 = vmatpush2.bf16.xpose.msra.mxu0 0
    %1730 = vmatprep.subr.bf16.mxu0 0
    %1731 = vmatpush2.bf16.xpose.msra.mxu0 0
    %1732 = vmatprep.subr.bf16.mxu0 0
    %1733 = vmatpush2.bf16.xpose.msra.mxu0 0
    %1734 = vmatprep.mubr.bf16.mxu0 0
    %1735 = vmatmul.mubr.bf16.gmra.mxu0 %v1697
    %v1736 = vpop.f32.mrf.mxu0
    %v1737 = vadd.f32 0.0, %v1736
    %v1738 = vpop.f32.mrf.mxu0
    %v1739 = vpop.f32.mrf.mxu0
    %v1740 = vpop.f32.mrf.mxu0
    %1741 = vdwg.mxu0
    %v1743 = vsel %vm1465, %v1455, 0
    %v1746 = vsel %vm1465, %v1463, 0
    %1748 = vmatprep.subr.bf16.mxu0 0
    %1749 = vmatpush1.bf16.xpose.msra.mxu0 0
    %1750 = vmatprep.subr.bf16.mxu0 0
    %1751 = vmatpush1.bf16.xpose.msra.mxu0 0
    %1752 = vmatprep.subr.bf16.mxu0 0
    %1753 = vmatpush1.bf16.xpose.msra.mxu0 0
    %1754 = vmatprep.subr.bf16.mxu0 0
    %1755 = vmatpush1.bf16.xpose.msra.mxu0 0
    %1756 = vmatprep.subr.bf16.mxu0 0
    %1757 = vmatpush1.bf16.xpose.msra.mxu0 0
    %1758 = vmatprep.subr.bf16.mxu0 0
    %1759 = vmatpush1.bf16.xpose.msra.mxu0 0
    %1760 = vmatprep.subr.bf16.mxu0 0
    %1761 = vmatpush1.bf16.xpose.msra.mxu0 0
    %1762 = vmatprep.subr.bf16.mxu0 0
    %1763 = vmatpush1.bf16.xpose.msra.mxu0 %v1746
    %1764 = vmatprep.subr.bf16.mxu0 0
    %1765 = vmatpush2.bf16.xpose.msra.mxu0 0
    %1766 = vmatprep.subr.bf16.mxu0 0
    %1767 = vmatpush2.bf16.xpose.msra.mxu0 0
    %1768 = vmatprep.subr.bf16.mxu0 0
    %1769 = vmatpush2.bf16.xpose.msra.mxu0 0
    %1770 = vmatprep.subr.bf16.mxu0 0
    %1771 = vmatpush2.bf16.xpose.msra.mxu0 0
    %1772 = vmatprep.subr.bf16.mxu0 0
    %1773 = vmatpush2.bf16.xpose.msra.mxu0 0
    %1774 = vmatprep.subr.bf16.mxu0 0
    %1775 = vmatpush2.bf16.xpose.msra.mxu0 0
    %1776 = vmatprep.subr.bf16.mxu0 0
    %1777 = vmatpush2.bf16.xpose.msra.mxu0 0
    %1778 = vmatprep.subr.bf16.mxu0 0
    %1779 = vmatpush2.bf16.xpose.msra.mxu0 0
    %1780 = vmatprep.mubr.bf16.mxu0 0
    %1781 = vmatmul.mubr.bf16.gmra.mxu0 %v1743
    %v1782 = vpop.f32.mrf.mxu0
    %v1783 = vadd.f32 0.0, %v1782
    %v1784 = vpop.f32.mrf.mxu0
    %v1785 = vpop.f32.mrf.mxu0
    %v1786 = vpop.f32.mrf.mxu0
    %1787 = vdwg.mxu0
    %v1789 = vsel %vm1465, %v1456, 0
    %v1792 = vsel %vm1465, %v1464, 0
    %1794 = vmatprep.subr.bf16.mxu0 0
    %1795 = vmatpush1.bf16.xpose.msra.mxu0 0
    %1796 = vmatprep.subr.bf16.mxu0 0
    %1797 = vmatpush1.bf16.xpose.msra.mxu0 0
    %1798 = vmatprep.subr.bf16.mxu0 0
    %1799 = vmatpush1.bf16.xpose.msra.mxu0 0
    %1800 = vmatprep.subr.bf16.mxu0 0
    %1801 = vmatpush1.bf16.xpose.msra.mxu0 0
    %1802 = vmatprep.subr.bf16.mxu0 0
    %1803 = vmatpush1.bf16.xpose.msra.mxu0 0
    %1804 = vmatprep.subr.bf16.mxu0 0
    %1805 = vmatpush1.bf16.xpose.msra.mxu0 0
    %1806 = vmatprep.subr.bf16.mxu0 0
    %1807 = vmatpush1.bf16.xpose.msra.mxu0 0
    %1808 = vmatprep.subr.bf16.mxu0 0
    %1809 = vmatpush1.bf16.xpose.msra.mxu0 %v1792
    %1810 = vmatprep.subr.bf16.mxu0 0
    %1811 = vmatpush2.bf16.xpose.msra.mxu0 0
    %1812 = vmatprep.subr.bf16.mxu0 0
    %1813 = vmatpush2.bf16.xpose.msra.mxu0 0
    %1814 = vmatprep.subr.bf16.mxu0 0
    %1815 = vmatpush2.bf16.xpose.msra.mxu0 0
    %1816 = vmatprep.subr.bf16.mxu0 0
    %1817 = vmatpush2.bf16.xpose.msra.mxu0 0
    %1818 = vmatprep.subr.bf16.mxu0 0
    %1819 = vmatpush2.bf16.xpose.msra.mxu0 0
    %1820 = vmatprep.subr.bf16.mxu0 0
    %1821 = vmatpush2.bf16.xpose.msra.mxu0 0
    %1822 = vmatprep.subr.bf16.mxu0 0
    %1823 = vmatpush2.bf16.xpose.msra.mxu0 0
    %1824 = vmatprep.subr.bf16.mxu0 0
    %1825 = vmatpush2.bf16.xpose.msra.mxu0 0
    %1826 = vmatprep.mubr.bf16.mxu0 0
    %1827 = vmatmul.mubr.bf16.gmra.mxu0 %v1789
    %v1828 = vpop.f32.mrf.mxu0
    %v1829 = vadd.f32 0.0, %v1828
    %v1830 = vpop.f32.mrf.mxu0
    %v1831 = vpop.f32.mrf.mxu0
    %v1832 = vpop.f32.mrf.mxu0
    %1833 = vdwg.mxu0
    %v1834 = vmul.f32 %v1507, 0.17677669
    %v1835 = vmul.f32 %v1553, 0.17677669
    %v1836 = vmul.f32 %v1599, 0.17677669
    %v1837 = vmul.f32 %v1645, 0.17677669
    %v1838 = vmul.f32 %v1691, 0.17677669
    %v1839 = vmul.f32 %v1737, 0.17677669
    %v1840 = vmul.f32 %v1783, 0.17677669
    %v1841 = vmul.f32 %v1829, 0.17677669
    %v1842 = vlaneseq
    %v1843 = vshrl.u32 %v1842, 7
    %v1844 = vlaneseq
    %v1845 = vand.u32 %v1844, 127
    %vm1846 = vcmp.le.s32.totalorder %v1845, %v1843
    %v1847 = vsel %vm1846, 1, 0
    %vm1848 = vcmp.eq.s32.totalorder %v1847, 1
    %v1849 = vsel %vm1848, %v1834, -1e+30
    %v1850 = vsel %vm1848, %v1835, -1e+30
    %v1851 = vsel %vm1848, %v1836, -1e+30
    %v1852 = vsel %vm1848, %v1837, -1e+30
    %v1853 = vsel %vm1848, %v1838, -1e+30
    %v1854 = vsel %vm1848, %v1839, -1e+30
    %v1855 = vsel %vm1848, %v1840, -1e+30
    %v1856 = vsel %vm1848, %v1841, -1e+30
    %v1857 = vsel %vm1465, %v1849, -inf
    %1858 = vmax.xlane.f32.xlu0 %v1857
    %v1859 = vpop.xlane.xlu0 %1858
    %v1860 = vsel %vm1465, %v1850, -inf
    %1861 = vmax.xlane.f32.xlu0 %v1860
    %v1862 = vpop.xlane.xlu0 %1861
    %v1863 = vsel %vm1465, %v1851, -inf
    %1864 = vmax.xlane.f32.xlu0 %v1863
    %v1865 = vpop.xlane.xlu0 %1864
    %v1866 = vsel %vm1465, %v1852, -inf
    %1867 = vmax.xlane.f32.xlu0 %v1866
    %v1868 = vpop.xlane.xlu0 %1867
    %v1869 = vsel %vm1465, %v1853, -inf
    %1870 = vmax.xlane.f32.xlu0 %v1869
    %v1871 = vpop.xlane.xlu0 %1870
    %v1872 = vsel %vm1465, %v1854, -inf
    %1873 = vmax.xlane.f32.xlu0 %v1872
    %v1874 = vpop.xlane.xlu0 %1873
    %v1875 = vsel %vm1465, %v1855, -inf
    %1876 = vmax.xlane.f32.xlu0 %v1875
    %v1877 = vpop.xlane.xlu0 %1876
    %v1878 = vsel %vm1465, %v1856, -inf
    %1879 = vmax.xlane.f32.xlu0 %v1878
    %v1880 = vpop.xlane.xlu0 %1879
    %v1881 = vsub.f32 %v1849, %v1859
    %v1882 = vsub.f32 %v1850, %v1862
    %v1883 = vsub.f32 %v1851, %v1865
    %v1884 = vsub.f32 %v1852, %v1868
    %v1885 = vsub.f32 %v1853, %v1871
    %v1886 = vsub.f32 %v1854, %v1874
    %v1887 = vsub.f32 %v1855, %v1877
    %v1888 = vsub.f32 %v1856, %v1880
    %v1889 = vmul.f32 %v1881, 1.442695
    %v1890 = vpow.pop %v1889
    %v1891 = vmul.f32 %v1882, 1.442695
    %v1892 = vpow.pop %v1891
    %v1893 = vmul.f32 %v1883, 1.442695
    %v1894 = vpow.pop %v1893
    %v1895 = vmul.f32 %v1884, 1.442695
    %v1896 = vpow.pop %v1895
    %v1897 = vmul.f32 %v1885, 1.442695
    %v1898 = vpow.pop %v1897
    %v1899 = vmul.f32 %v1886, 1.442695
    %v1900 = vpow.pop %v1899
    %v1901 = vmul.f32 %v1887, 1.442695
    %v1902 = vpow.pop %v1901
    %v1903 = vmul.f32 %v1888, 1.442695
    %v1904 = vpow.pop %v1903
    %v1905 = vsel %vm1465, %v1890, 0.0
    %1906 = vadd.xlane.f32.xlu0 %v1905
    %v1907 = vpop.xlane.xlu0 %1906
    %v1908 = vsel %vm1465, %v1892, 0.0
    %1909 = vadd.xlane.f32.xlu0 %v1908
    %v1910 = vpop.xlane.xlu0 %1909
    %v1911 = vsel %vm1465, %v1894, 0.0
    %1912 = vadd.xlane.f32.xlu0 %v1911
    %v1913 = vpop.xlane.xlu0 %1912
    %v1914 = vsel %vm1465, %v1896, 0.0
    %1915 = vadd.xlane.f32.xlu0 %v1914
    %v1916 = vpop.xlane.xlu0 %1915
    %v1917 = vsel %vm1465, %v1898, 0.0
    %1918 = vadd.xlane.f32.xlu0 %v1917
    %v1919 = vpop.xlane.xlu0 %1918
    %v1920 = vsel %vm1465, %v1900, 0.0
    %1921 = vadd.xlane.f32.xlu0 %v1920
    %v1922 = vpop.xlane.xlu0 %1921
    %v1923 = vsel %vm1465, %v1902, 0.0
    %1924 = vadd.xlane.f32.xlu0 %v1923
    %v1925 = vpop.xlane.xlu0 %1924
    %v1926 = vsel %vm1465, %v1904, 0.0
    %1927 = vadd.xlane.f32.xlu0 %v1926
    %v1928 = vpop.xlane.xlu0 %1927
    %v1929 = vrcp.pop %v1907
    %v1930 = vrcp.pop %v1910
    %v1931 = vrcp.pop %v1913
    %v1932 = vrcp.pop %v1916
    %v1933 = vrcp.pop %v1919
    %v1934 = vrcp.pop %v1922
    %v1935 = vrcp.pop %v1925
    %v1936 = vrcp.pop %v1928
    %v1937 = vmul.f32 %v1890, %v1929
    %v1938 = vmul.f32 %v1892, %v1930
    %v1939 = vmul.f32 %v1894, %v1931
    %v1940 = vmul.f32 %v1896, %v1932
    %v1941 = vmul.f32 %v1898, %v1933
    %v1942 = vmul.f32 %v1900, %v1934
    %v1943 = vmul.f32 %v1902, %v1935
    %v1944 = vmul.f32 %v1904, %v1936
    %v1945 = vpack.c.bf16 %v1937, %v1937
    %v1946 = vpack.c.bf16 %v1938, %v1938
    %v1947 = vpack.c.bf16 %v1939, %v1939
    %v1948 = vpack.c.bf16 %v1940, %v1940
    %v1949 = vpack.c.bf16 %v1941, %v1941
    %v1950 = vpack.c.bf16 %v1942, %v1942
    %v1951 = vpack.c.bf16 %v1943, %v1943
    %v1952 = vpack.c.bf16 %v1944, %v1944
    %v1953 = vpack.c.bf16 %v1080, %v1080
    %v1954 = vpack.c.bf16 %v1132, %v1132
    %v1955 = vpack.c.bf16 %v1184, %v1184
    %v1956 = vpack.c.bf16 %v1236, %v1236
    %v1957 = vpack.c.bf16 %v1288, %v1288
    %v1958 = vpack.c.bf16 %v1340, %v1340
    %v1959 = vpack.c.bf16 %v1392, %v1392
    %v1960 = vpack.c.bf16 %v1444, %v1444
    %v1962 = vsel %vm1465, %v1945, 0
    %vm1964 = vcmask 1043456
    %v1966 = vsel %vm1964, %v1953, 0
    %1968 = vmatprep.subr.bf16.mxu0 0
    %1969 = vmatpush1.bf16.msra.mxu0 0
    %1970 = vmatprep.subr.bf16.mxu0 0
    %1971 = vmatpush1.bf16.msra.mxu0 0
    %1972 = vmatprep.subr.bf16.mxu0 0
    %1973 = vmatpush1.bf16.msra.mxu0 0
    %1974 = vmatprep.subr.bf16.mxu0 0
    %1975 = vmatpush1.bf16.msra.mxu0 0
    %1976 = vmatprep.subr.bf16.mxu0 0
    %1977 = vmatpush1.bf16.msra.mxu0 0
    %1978 = vmatprep.subr.bf16.mxu0 0
    %1979 = vmatpush1.bf16.msra.mxu0 0
    %1980 = vmatprep.subr.bf16.mxu0 0
    %1981 = vmatpush1.bf16.msra.mxu0 0
    %1982 = vmatprep.subr.bf16.mxu0 0
    %1983 = vmatpush1.bf16.msra.mxu0 %v1966
    %1984 = vmatprep.subr.bf16.mxu0 0
    %1985 = vmatpush2.bf16.msra.mxu0 0
    %1986 = vmatprep.subr.bf16.mxu0 0
    %1987 = vmatpush2.bf16.msra.mxu0 0
    %1988 = vmatprep.subr.bf16.mxu0 0
    %1989 = vmatpush2.bf16.msra.mxu0 0
    %1990 = vmatprep.subr.bf16.mxu0 0
    %1991 = vmatpush2.bf16.msra.mxu0 0
    %1992 = vmatprep.subr.bf16.mxu0 0
    %1993 = vmatpush2.bf16.msra.mxu0 0
    %1994 = vmatprep.subr.bf16.mxu0 0
    %1995 = vmatpush2.bf16.msra.mxu0 0
    %1996 = vmatprep.subr.bf16.mxu0 0
    %1997 = vmatpush2.bf16.msra.mxu0 0
    %1998 = vmatprep.subr.bf16.mxu0 0
    %1999 = vmatpush2.bf16.msra.mxu0 0
    %2000 = vmatprep.mubr.bf16.mxu0 0
    %2001 = vmatmul.mubr.bf16.gmra.mxu0 %v1962
    %v2002 = vpop.f32.mrf.mxu0
    %v2003 = vadd.f32 0.0, %v2002
    %v2004 = vpop.f32.mrf.mxu0
    %v2005 = vpop.f32.mrf.mxu0
    %v2006 = vpop.f32.mrf.mxu0
    %2007 = vdwg.mxu0
    %v2009 = vsel %vm1465, %v1946, 0
    %v2012 = vsel %vm1964, %v1954, 0
    %2014 = vmatprep.subr.bf16.mxu0 0
    %2015 = vmatpush1.bf16.msra.mxu0 0
    %2016 = vmatprep.subr.bf16.mxu0 0
    %2017 = vmatpush1.bf16.msra.mxu0 0
    %2018 = vmatprep.subr.bf16.mxu0 0
    %2019 = vmatpush1.bf16.msra.mxu0 0
    %2020 = vmatprep.subr.bf16.mxu0 0
    %2021 = vmatpush1.bf16.msra.mxu0 0
    %2022 = vmatprep.subr.bf16.mxu0 0
    %2023 = vmatpush1.bf16.msra.mxu0 0
    %2024 = vmatprep.subr.bf16.mxu0 0
    %2025 = vmatpush1.bf16.msra.mxu0 0
    %2026 = vmatprep.subr.bf16.mxu0 0
    %2027 = vmatpush1.bf16.msra.mxu0 0
    %2028 = vmatprep.subr.bf16.mxu0 0
    %2029 = vmatpush1.bf16.msra.mxu0 %v2012
    %2030 = vmatprep.subr.bf16.mxu0 0
    %2031 = vmatpush2.bf16.msra.mxu0 0
    %2032 = vmatprep.subr.bf16.mxu0 0
    %2033 = vmatpush2.bf16.msra.mxu0 0
    %2034 = vmatprep.subr.bf16.mxu0 0
    %2035 = vmatpush2.bf16.msra.mxu0 0
    %2036 = vmatprep.subr.bf16.mxu0 0
    %2037 = vmatpush2.bf16.msra.mxu0 0
    %2038 = vmatprep.subr.bf16.mxu0 0
    %2039 = vmatpush2.bf16.msra.mxu0 0
    %2040 = vmatprep.subr.bf16.mxu0 0
    %2041 = vmatpush2.bf16.msra.mxu0 0
    %2042 = vmatprep.subr.bf16.mxu0 0
    %2043 = vmatpush2.bf16.msra.mxu0 0
    %2044 = vmatprep.subr.bf16.mxu0 0
    %2045 = vmatpush2.bf16.msra.mxu0 0
    %2046 = vmatprep.mubr.bf16.mxu0 0
    %2047 = vmatmul.mubr.bf16.gmra.mxu0 %v2009
    %v2048 = vpop.f32.mrf.mxu0
    %v2049 = vadd.f32 0.0, %v2048
    %v2050 = vpop.f32.mrf.mxu0
    %v2051 = vpop.f32.mrf.mxu0
    %v2052 = vpop.f32.mrf.mxu0
    %2053 = vdwg.mxu0
    %v2055 = vsel %vm1465, %v1947, 0
    %v2058 = vsel %vm1964, %v1955, 0
    %2060 = vmatprep.subr.bf16.mxu0 0
    %2061 = vmatpush1.bf16.msra.mxu0 0
    %2062 = vmatprep.subr.bf16.mxu0 0
    %2063 = vmatpush1.bf16.msra.mxu0 0
    %2064 = vmatprep.subr.bf16.mxu0 0
    %2065 = vmatpush1.bf16.msra.mxu0 0
    %2066 = vmatprep.subr.bf16.mxu0 0
    %2067 = vmatpush1.bf16.msra.mxu0 0
    %2068 = vmatprep.subr.bf16.mxu0 0
    %2069 = vmatpush1.bf16.msra.mxu0 0
    %2070 = vmatprep.subr.bf16.mxu0 0
    %2071 = vmatpush1.bf16.msra.mxu0 0
    %2072 = vmatprep.subr.bf16.mxu0 0
    %2073 = vmatpush1.bf16.msra.mxu0 0
    %2074 = vmatprep.subr.bf16.mxu0 0
    %2075 = vmatpush1.bf16.msra.mxu0 %v2058
    %2076 = vmatprep.subr.bf16.mxu0 0
    %2077 = vmatpush2.bf16.msra.mxu0 0
    %2078 = vmatprep.subr.bf16.mxu0 0
    %2079 = vmatpush2.bf16.msra.mxu0 0
    %2080 = vmatprep.subr.bf16.mxu0 0
    %2081 = vmatpush2.bf16.msra.mxu0 0
    %2082 = vmatprep.subr.bf16.mxu0 0
    %2083 = vmatpush2.bf16.msra.mxu0 0
    %2084 = vmatprep.subr.bf16.mxu0 0
    %2085 = vmatpush2.bf16.msra.mxu0 0
    %2086 = vmatprep.subr.bf16.mxu0 0
    %2087 = vmatpush2.bf16.msra.mxu0 0
    %2088 = vmatprep.subr.bf16.mxu0 0
    %2089 = vmatpush2.bf16.msra.mxu0 0
    %2090 = vmatprep.subr.bf16.mxu0 0
    %2091 = vmatpush2.bf16.msra.mxu0 0
    %2092 = vmatprep.mubr.bf16.mxu0 0
    %2093 = vmatmul.mubr.bf16.gmra.mxu0 %v2055
    %v2094 = vpop.f32.mrf.mxu0
    %v2095 = vadd.f32 0.0, %v2094
    %v2096 = vpop.f32.mrf.mxu0
    %v2097 = vpop.f32.mrf.mxu0
    %v2098 = vpop.f32.mrf.mxu0
    %2099 = vdwg.mxu0
    %v2101 = vsel %vm1465, %v1948, 0
    %v2104 = vsel %vm1964, %v1956, 0
    %2106 = vmatprep.subr.bf16.mxu0 0
    %2107 = vmatpush1.bf16.msra.mxu0 0
    %2108 = vmatprep.subr.bf16.mxu0 0
    %2109 = vmatpush1.bf16.msra.mxu0 0
    %2110 = vmatprep.subr.bf16.mxu0 0
    %2111 = vmatpush1.bf16.msra.mxu0 0
    %2112 = vmatprep.subr.bf16.mxu0 0
    %2113 = vmatpush1.bf16.msra.mxu0 0
    %2114 = vmatprep.subr.bf16.mxu0 0
    %2115 = vmatpush1.bf16.msra.mxu0 0
    %2116 = vmatprep.subr.bf16.mxu0 0
    %2117 = vmatpush1.bf16.msra.mxu0 0
    %2118 = vmatprep.subr.bf16.mxu0 0
    %2119 = vmatpush1.bf16.msra.mxu0 0
    %2120 = vmatprep.subr.bf16.mxu0 0
    %2121 = vmatpush1.bf16.msra.mxu0 %v2104
    %2122 = vmatprep.subr.bf16.mxu0 0
    %2123 = vmatpush2.bf16.msra.mxu0 0
    %2124 = vmatprep.subr.bf16.mxu0 0
    %2125 = vmatpush2.bf16.msra.mxu0 0
    %2126 = vmatprep.subr.bf16.mxu0 0
    %2127 = vmatpush2.bf16.msra.mxu0 0
    %2128 = vmatprep.subr.bf16.mxu0 0
    %2129 = vmatpush2.bf16.msra.mxu0 0
    %2130 = vmatprep.subr.bf16.mxu0 0
    %2131 = vmatpush2.bf16.msra.mxu0 0
    %2132 = vmatprep.subr.bf16.mxu0 0
    %2133 = vmatpush2.bf16.msra.mxu0 0
    %2134 = vmatprep.subr.bf16.mxu0 0
    %2135 = vmatpush2.bf16.msra.mxu0 0
    %2136 = vmatprep.subr.bf16.mxu0 0
    %2137 = vmatpush2.bf16.msra.mxu0 0
    %2138 = vmatprep.mubr.bf16.mxu0 0
    %2139 = vmatmul.mubr.bf16.gmra.mxu0 %v2101
    %v2140 = vpop.f32.mrf.mxu0
    %v2141 = vadd.f32 0.0, %v2140
    %v2142 = vpop.f32.mrf.mxu0
    %v2143 = vpop.f32.mrf.mxu0
    %v2144 = vpop.f32.mrf.mxu0
    %2145 = vdwg.mxu0
    %v2147 = vsel %vm1465, %v1949, 0
    %v2150 = vsel %vm1964, %v1957, 0
    %2152 = vmatprep.subr.bf16.mxu0 0
    %2153 = vmatpush1.bf16.msra.mxu0 0
    %2154 = vmatprep.subr.bf16.mxu0 0
    %2155 = vmatpush1.bf16.msra.mxu0 0
    %2156 = vmatprep.subr.bf16.mxu0 0
    %2157 = vmatpush1.bf16.msra.mxu0 0
    %2158 = vmatprep.subr.bf16.mxu0 0
    %2159 = vmatpush1.bf16.msra.mxu0 0
    %2160 = vmatprep.subr.bf16.mxu0 0
    %2161 = vmatpush1.bf16.msra.mxu0 0
    %2162 = vmatprep.subr.bf16.mxu0 0
    %2163 = vmatpush1.bf16.msra.mxu0 0
    %2164 = vmatprep.subr.bf16.mxu0 0
    %2165 = vmatpush1.bf16.msra.mxu0 0
    %2166 = vmatprep.subr.bf16.mxu0 0
    %2167 = vmatpush1.bf16.msra.mxu0 %v2150
    %2168 = vmatprep.subr.bf16.mxu0 0
    %2169 = vmatpush2.bf16.msra.mxu0 0
    %2170 = vmatprep.subr.bf16.mxu0 0
    %2171 = vmatpush2.bf16.msra.mxu0 0
    %2172 = vmatprep.subr.bf16.mxu0 0
    %2173 = vmatpush2.bf16.msra.mxu0 0
    %2174 = vmatprep.subr.bf16.mxu0 0
    %2175 = vmatpush2.bf16.msra.mxu0 0
    %2176 = vmatprep.subr.bf16.mxu0 0
    %2177 = vmatpush2.bf16.msra.mxu0 0
    %2178 = vmatprep.subr.bf16.mxu0 0
    %2179 = vmatpush2.bf16.msra.mxu0 0
    %2180 = vmatprep.subr.bf16.mxu0 0
    %2181 = vmatpush2.bf16.msra.mxu0 0
    %2182 = vmatprep.subr.bf16.mxu0 0
    %2183 = vmatpush2.bf16.msra.mxu0 0
    %2184 = vmatprep.mubr.bf16.mxu0 0
    %2185 = vmatmul.mubr.bf16.gmra.mxu0 %v2147
    %v2186 = vpop.f32.mrf.mxu0
    %v2187 = vadd.f32 0.0, %v2186
    %v2188 = vpop.f32.mrf.mxu0
    %v2189 = vpop.f32.mrf.mxu0
    %v2190 = vpop.f32.mrf.mxu0
    %2191 = vdwg.mxu0
    %v2193 = vsel %vm1465, %v1950, 0
    %v2196 = vsel %vm1964, %v1958, 0
    %2198 = vmatprep.subr.bf16.mxu0 0
    %2199 = vmatpush1.bf16.msra.mxu0 0
    %2200 = vmatprep.subr.bf16.mxu0 0
    %2201 = vmatpush1.bf16.msra.mxu0 0
    %2202 = vmatprep.subr.bf16.mxu0 0
    %2203 = vmatpush1.bf16.msra.mxu0 0
    %2204 = vmatprep.subr.bf16.mxu0 0
    %2205 = vmatpush1.bf16.msra.mxu0 0
    %2206 = vmatprep.subr.bf16.mxu0 0
    %2207 = vmatpush1.bf16.msra.mxu0 0
    %2208 = vmatprep.subr.bf16.mxu0 0
    %2209 = vmatpush1.bf16.msra.mxu0 0
    %2210 = vmatprep.subr.bf16.mxu0 0
    %2211 = vmatpush1.bf16.msra.mxu0 0
    %2212 = vmatprep.subr.bf16.mxu0 0
    %2213 = vmatpush1.bf16.msra.mxu0 %v2196
    %2214 = vmatprep.subr.bf16.mxu0 0
    %2215 = vmatpush2.bf16.msra.mxu0 0
    %2216 = vmatprep.subr.bf16.mxu0 0
    %2217 = vmatpush2.bf16.msra.mxu0 0
    %2218 = vmatprep.subr.bf16.mxu0 0
    %2219 = vmatpush2.bf16.msra.mxu0 0
    %2220 = vmatprep.subr.bf16.mxu0 0
    %2221 = vmatpush2.bf16.msra.mxu0 0
    %2222 = vmatprep.subr.bf16.mxu0 0
    %2223 = vmatpush2.bf16.msra.mxu0 0
    %2224 = vmatprep.subr.bf16.mxu0 0
    %2225 = vmatpush2.bf16.msra.mxu0 0
    %2226 = vmatprep.subr.bf16.mxu0 0
    %2227 = vmatpush2.bf16.msra.mxu0 0
    %2228 = vmatprep.subr.bf16.mxu0 0
    %2229 = vmatpush2.bf16.msra.mxu0 0
    %2230 = vmatprep.mubr.bf16.mxu0 0
    %2231 = vmatmul.mubr.bf16.gmra.mxu0 %v2193
    %v2232 = vpop.f32.mrf.mxu0
    %v2233 = vadd.f32 0.0, %v2232
    %v2234 = vpop.f32.mrf.mxu0
    %v2235 = vpop.f32.mrf.mxu0
    %v2236 = vpop.f32.mrf.mxu0
    %2237 = vdwg.mxu0
    %v2239 = vsel %vm1465, %v1951, 0
    %v2242 = vsel %vm1964, %v1959, 0
    %2244 = vmatprep.subr.bf16.mxu0 0
    %2245 = vmatpush1.bf16.msra.mxu0 0
    %2246 = vmatprep.subr.bf16.mxu0 0
    %2247 = vmatpush1.bf16.msra.mxu0 0
    %2248 = vmatprep.subr.bf16.mxu0 0
    %2249 = vmatpush1.bf16.msra.mxu0 0
    %2250 = vmatprep.subr.bf16.mxu0 0
    %2251 = vmatpush1.bf16.msra.mxu0 0
    %2252 = vmatprep.subr.bf16.mxu0 0
    %2253 = vmatpush1.bf16.msra.mxu0 0
    %2254 = vmatprep.subr.bf16.mxu0 0
    %2255 = vmatpush1.bf16.msra.mxu0 0
    %2256 = vmatprep.subr.bf16.mxu0 0
    %2257 = vmatpush1.bf16.msra.mxu0 0
    %2258 = vmatprep.subr.bf16.mxu0 0
    %2259 = vmatpush1.bf16.msra.mxu0 %v2242
    %2260 = vmatprep.subr.bf16.mxu0 0
    %2261 = vmatpush2.bf16.msra.mxu0 0
    %2262 = vmatprep.subr.bf16.mxu0 0
    %2263 = vmatpush2.bf16.msra.mxu0 0
    %2264 = vmatprep.subr.bf16.mxu0 0
    %2265 = vmatpush2.bf16.msra.mxu0 0
    %2266 = vmatprep.subr.bf16.mxu0 0
    %2267 = vmatpush2.bf16.msra.mxu0 0
    %2268 = vmatprep.subr.bf16.mxu0 0
    %2269 = vmatpush2.bf16.msra.mxu0 0
    %2270 = vmatprep.subr.bf16.mxu0 0
    %2271 = vmatpush2.bf16.msra.mxu0 0
    %2272 = vmatprep.subr.bf16.mxu0 0
    %2273 = vmatpush2.bf16.msra.mxu0 0
    %2274 = vmatprep.subr.bf16.mxu0 0
    %2275 = vmatpush2.bf16.msra.mxu0 0
    %2276 = vmatprep.mubr.bf16.mxu0 0
    %2277 = vmatmul.mubr.bf16.gmra.mxu0 %v2239
    %v2278 = vpop.f32.mrf.mxu0
    %v2279 = vadd.f32 0.0, %v2278
    %v2280 = vpop.f32.mrf.mxu0
    %v2281 = vpop.f32.mrf.mxu0
    %v2282 = vpop.f32.mrf.mxu0
    %2283 = vdwg.mxu0
    %v2285 = vsel %vm1465, %v1952, 0
    %v2288 = vsel %vm1964, %v1960, 0
    %2290 = vmatprep.subr.bf16.mxu0 0
    %2291 = vmatpush1.bf16.msra.mxu0 0
    %2292 = vmatprep.subr.bf16.mxu0 0
    %2293 = vmatpush1.bf16.msra.mxu0 0
    %2294 = vmatprep.subr.bf16.mxu0 0
    %2295 = vmatpush1.bf16.msra.mxu0 0
    %2296 = vmatprep.subr.bf16.mxu0 0
    %2297 = vmatpush1.bf16.msra.mxu0 0
    %2298 = vmatprep.subr.bf16.mxu0 0
    %2299 = vmatpush1.bf16.msra.mxu0 0
    %2300 = vmatprep.subr.bf16.mxu0 0
    %2301 = vmatpush1.bf16.msra.mxu0 0
    %2302 = vmatprep.subr.bf16.mxu0 0
    %2303 = vmatpush1.bf16.msra.mxu0 0
    %2304 = vmatprep.subr.bf16.mxu0 0
    %2305 = vmatpush1.bf16.msra.mxu0 %v2288
    %2306 = vmatprep.subr.bf16.mxu0 0
    %2307 = vmatpush2.bf16.msra.mxu0 0
    %2308 = vmatprep.subr.bf16.mxu0 0
    %2309 = vmatpush2.bf16.msra.mxu0 0
    %2310 = vmatprep.subr.bf16.mxu0 0
    %2311 = vmatpush2.bf16.msra.mxu0 0
    %2312 = vmatprep.subr.bf16.mxu0 0
    %2313 = vmatpush2.bf16.msra.mxu0 0
    %2314 = vmatprep.subr.bf16.mxu0 0
    %2315 = vmatpush2.bf16.msra.mxu0 0
    %2316 = vmatprep.subr.bf16.mxu0 0
    %2317 = vmatpush2.bf16.msra.mxu0 0
    %2318 = vmatprep.subr.bf16.mxu0 0
    %2319 = vmatpush2.bf16.msra.mxu0 0
    %2320 = vmatprep.subr.bf16.mxu0 0
    %2321 = vmatpush2.bf16.msra.mxu0 0
    %2322 = vmatprep.mubr.bf16.mxu0 0
    %2323 = vmatmul.mubr.bf16.gmra.mxu0 %v2285
    %v2324 = vpop.f32.mrf.mxu0
    %v2325 = vadd.f32 0.0, %v2324
    %v2326 = vpop.f32.mrf.mxu0
    %v2327 = vpop.f32.mrf.mxu0
    %v2328 = vpop.f32.mrf.mxu0
    %2329 = vdwg.mxu0
    %v2330 = vpack.c.bf16 %v2003, %v2003
    %v2331 = vpack.c.bf16 %v2049, %v2049
    %v2332 = vpack.c.bf16 %v2095, %v2095
    %v2333 = vpack.c.bf16 %v2141, %v2141
    %v2334 = vpack.c.bf16 %v2187, %v2187
    %v2335 = vpack.c.bf16 %v2233, %v2233
    %v2336 = vpack.c.bf16 %v2279, %v2279
    %v2337 = vpack.c.bf16 %v2325, %v2325
    %v2338 = vld [vmem:[%s6] sm:$0xf]
    %v2339 = vld [vmem:[%s6 + $0x4] sm:$0xf]
    %v2340 = vld [vmem:[%s6 + $0x8] sm:$0xf]
    %v2341 = vld [vmem:[%s6 + $0xc] sm:$0xf]
    %v2342 = vld [vmem:[%s6 + $0x10] sm:$0xf]
    %v2343 = vld [vmem:[%s6 + $0x14] sm:$0xf]
    %v2344 = vld [vmem:[%s6 + $0x18] sm:$0xf]
    %v2345 = vld [vmem:[%s6 + $0x1c] sm:$0xf]
    %v2347 = vsel %vm1465, %v2330, 0
    %v2350 = vsel %vm1964, %v2338, 0
    %2352 = vmatprep.subr.bf16.mxu0 0
    %2353 = vmatpush1.bf16.msra.mxu0 0
    %2354 = vmatprep.subr.bf16.mxu0 0
    %2355 = vmatpush1.bf16.msra.mxu0 0
    %2356 = vmatprep.subr.bf16.mxu0 0
    %2357 = vmatpush1.bf16.msra.mxu0 0
    %2358 = vmatprep.subr.bf16.mxu0 0
    %2359 = vmatpush1.bf16.msra.mxu0 0
    %2360 = vmatprep.subr.bf16.mxu0 0
    %2361 = vmatpush1.bf16.msra.mxu0 0
    %2362 = vmatprep.subr.bf16.mxu0 0
    %2363 = vmatpush1.bf16.msra.mxu0 0
    %2364 = vmatprep.subr.bf16.mxu0 0
    %2365 = vmatpush1.bf16.msra.mxu0 0
    %2366 = vmatprep.subr.bf16.mxu0 0
    %2367 = vmatpush1.bf16.msra.mxu0 %v2350
    %2368 = vmatprep.subr.bf16.mxu0 0
    %2369 = vmatpush2.bf16.msra.mxu0 0
    %2370 = vmatprep.subr.bf16.mxu0 0
    %2371 = vmatpush2.bf16.msra.mxu0 0
    %2372 = vmatprep.subr.bf16.mxu0 0
    %2373 = vmatpush2.bf16.msra.mxu0 0
    %2374 = vmatprep.subr.bf16.mxu0 0
    %2375 = vmatpush2.bf16.msra.mxu0 0
    %2376 = vmatprep.subr.bf16.mxu0 0
    %2377 = vmatpush2.bf16.msra.mxu0 0
    %2378 = vmatprep.subr.bf16.mxu0 0
    %2379 = vmatpush2.bf16.msra.mxu0 0
    %2380 = vmatprep.subr.bf16.mxu0 0
    %2381 = vmatpush2.bf16.msra.mxu0 0
    %2382 = vmatprep.subr.bf16.mxu0 0
    %2383 = vmatpush2.bf16.msra.mxu0 0
    %2384 = vmatprep.mubr.bf16.mxu0 0
    %2385 = vmatmul.mubr.bf16.gmra.mxu0 %v2347
    %v2386 = vpop.f32.mrf.mxu0
    %v2387 = vadd.f32 0.0, %v2386
    %v2388 = vpop.f32.mrf.mxu0
    %v2389 = vpop.f32.mrf.mxu0
    %v2390 = vpop.f32.mrf.mxu0
    %2391 = vdwg.mxu0
    %v2393 = vsel %vm1465, %v2331, 0
    %v2396 = vsel %vm1964, %v2339, 0
    %2398 = vmatprep.subr.bf16.mxu0 0
    %2399 = vmatpush1.bf16.msra.mxu0 0
    %2400 = vmatprep.subr.bf16.mxu0 0
    %2401 = vmatpush1.bf16.msra.mxu0 0
    %2402 = vmatprep.subr.bf16.mxu0 0
    %2403 = vmatpush1.bf16.msra.mxu0 0
    %2404 = vmatprep.subr.bf16.mxu0 0
    %2405 = vmatpush1.bf16.msra.mxu0 0
    %2406 = vmatprep.subr.bf16.mxu0 0
    %2407 = vmatpush1.bf16.msra.mxu0 0
    %2408 = vmatprep.subr.bf16.mxu0 0
    %2409 = vmatpush1.bf16.msra.mxu0 0
    %2410 = vmatprep.subr.bf16.mxu0 0
    %2411 = vmatpush1.bf16.msra.mxu0 0
    %2412 = vmatprep.subr.bf16.mxu0 0
    %2413 = vmatpush1.bf16.msra.mxu0 %v2396
    %2414 = vmatprep.subr.bf16.mxu0 0
    %2415 = vmatpush2.bf16.msra.mxu0 0
    %2416 = vmatprep.subr.bf16.mxu0 0
    %2417 = vmatpush2.bf16.msra.mxu0 0
    %2418 = vmatprep.subr.bf16.mxu0 0
    %2419 = vmatpush2.bf16.msra.mxu0 0
    %2420 = vmatprep.subr.bf16.mxu0 0
    %2421 = vmatpush2.bf16.msra.mxu0 0
    %2422 = vmatprep.subr.bf16.mxu0 0
    %2423 = vmatpush2.bf16.msra.mxu0 0
    %2424 = vmatprep.subr.bf16.mxu0 0
    %2425 = vmatpush2.bf16.msra.mxu0 0
    %2426 = vmatprep.subr.bf16.mxu0 0
    %2427 = vmatpush2.bf16.msra.mxu0 0
    %2428 = vmatprep.subr.bf16.mxu0 0
    %2429 = vmatpush2.bf16.msra.mxu0 0
    %2430 = vmatprep.mubr.bf16.mxu0 0
    %2431 = vmatmul.mubr.bf16.gmra.mxu0 %v2393
    %v2432 = vpop.f32.mrf.mxu0
    %v2433 = vadd.f32 0.0, %v2432
    %v2434 = vpop.f32.mrf.mxu0
    %v2435 = vpop.f32.mrf.mxu0
    %v2436 = vpop.f32.mrf.mxu0
    %2437 = vdwg.mxu0
    %v2439 = vsel %vm1465, %v2332, 0
    %v2442 = vsel %vm1964, %v2340, 0
    %2444 = vmatprep.subr.bf16.mxu0 0
    %2445 = vmatpush1.bf16.msra.mxu0 0
    %2446 = vmatprep.subr.bf16.mxu0 0
    %2447 = vmatpush1.bf16.msra.mxu0 0
    %2448 = vmatprep.subr.bf16.mxu0 0
    %2449 = vmatpush1.bf16.msra.mxu0 0
    %2450 = vmatprep.subr.bf16.mxu0 0
    %2451 = vmatpush1.bf16.msra.mxu0 0
    %2452 = vmatprep.subr.bf16.mxu0 0
    %2453 = vmatpush1.bf16.msra.mxu0 0
    %2454 = vmatprep.subr.bf16.mxu0 0
    %2455 = vmatpush1.bf16.msra.mxu0 0
    %2456 = vmatprep.subr.bf16.mxu0 0
    %2457 = vmatpush1.bf16.msra.mxu0 0
    %2458 = vmatprep.subr.bf16.mxu0 0
    %2459 = vmatpush1.bf16.msra.mxu0 %v2442
    %2460 = vmatprep.subr.bf16.mxu0 0
    %2461 = vmatpush2.bf16.msra.mxu0 0
    %2462 = vmatprep.subr.bf16.mxu0 0
    %2463 = vmatpush2.bf16.msra.mxu0 0
    %2464 = vmatprep.subr.bf16.mxu0 0
    %2465 = vmatpush2.bf16.msra.mxu0 0
    %2466 = vmatprep.subr.bf16.mxu0 0
    %2467 = vmatpush2.bf16.msra.mxu0 0
    %2468 = vmatprep.subr.bf16.mxu0 0
    %2469 = vmatpush2.bf16.msra.mxu0 0
    %2470 = vmatprep.subr.bf16.mxu0 0
    %2471 = vmatpush2.bf16.msra.mxu0 0
    %2472 = vmatprep.subr.bf16.mxu0 0
    %2473 = vmatpush2.bf16.msra.mxu0 0
    %2474 = vmatprep.subr.bf16.mxu0 0
    %2475 = vmatpush2.bf16.msra.mxu0 0
    %2476 = vmatprep.mubr.bf16.mxu0 0
    %2477 = vmatmul.mubr.bf16.gmra.mxu0 %v2439
    %v2478 = vpop.f32.mrf.mxu0
    %v2479 = vadd.f32 0.0, %v2478
    %v2480 = vpop.f32.mrf.mxu0
    %v2481 = vpop.f32.mrf.mxu0
    %v2482 = vpop.f32.mrf.mxu0
    %2483 = vdwg.mxu0
    %v2485 = vsel %vm1465, %v2333, 0
    %v2488 = vsel %vm1964, %v2341, 0
    %2490 = vmatprep.subr.bf16.mxu0 0
    %2491 = vmatpush1.bf16.msra.mxu0 0
    %2492 = vmatprep.subr.bf16.mxu0 0
    %2493 = vmatpush1.bf16.msra.mxu0 0
    %2494 = vmatprep.subr.bf16.mxu0 0
    %2495 = vmatpush1.bf16.msra.mxu0 0
    %2496 = vmatprep.subr.bf16.mxu0 0
    %2497 = vmatpush1.bf16.msra.mxu0 0
    %2498 = vmatprep.subr.bf16.mxu0 0
    %2499 = vmatpush1.bf16.msra.mxu0 0
    %2500 = vmatprep.subr.bf16.mxu0 0
    %2501 = vmatpush1.bf16.msra.mxu0 0
    %2502 = vmatprep.subr.bf16.mxu0 0
    %2503 = vmatpush1.bf16.msra.mxu0 0
    %2504 = vmatprep.subr.bf16.mxu0 0
    %2505 = vmatpush1.bf16.msra.mxu0 %v2488
    %2506 = vmatprep.subr.bf16.mxu0 0
    %2507 = vmatpush2.bf16.msra.mxu0 0
    %2508 = vmatprep.subr.bf16.mxu0 0
    %2509 = vmatpush2.bf16.msra.mxu0 0
    %2510 = vmatprep.subr.bf16.mxu0 0
    %2511 = vmatpush2.bf16.msra.mxu0 0
    %2512 = vmatprep.subr.bf16.mxu0 0
    %2513 = vmatpush2.bf16.msra.mxu0 0
    %2514 = vmatprep.subr.bf16.mxu0 0
    %2515 = vmatpush2.bf16.msra.mxu0 0
    %2516 = vmatprep.subr.bf16.mxu0 0
    %2517 = vmatpush2.bf16.msra.mxu0 0
    %2518 = vmatprep.subr.bf16.mxu0 0
    %2519 = vmatpush2.bf16.msra.mxu0 0
    %2520 = vmatprep.subr.bf16.mxu0 0
    %2521 = vmatpush2.bf16.msra.mxu0 0
    %2522 = vmatprep.mubr.bf16.mxu0 0
    %2523 = vmatmul.mubr.bf16.gmra.mxu0 %v2485
    %v2524 = vpop.f32.mrf.mxu0
    %v2525 = vadd.f32 0.0, %v2524
    %v2526 = vpop.f32.mrf.mxu0
    %v2527 = vpop.f32.mrf.mxu0
    %v2528 = vpop.f32.mrf.mxu0
    %2529 = vdwg.mxu0
    %v2531 = vsel %vm1465, %v2334, 0
    %v2534 = vsel %vm1964, %v2342, 0
    %2536 = vmatprep.subr.bf16.mxu0 0
    %2537 = vmatpush1.bf16.msra.mxu0 0
    %2538 = vmatprep.subr.bf16.mxu0 0
    %2539 = vmatpush1.bf16.msra.mxu0 0
    %2540 = vmatprep.subr.bf16.mxu0 0
    %2541 = vmatpush1.bf16.msra.mxu0 0
    %2542 = vmatprep.subr.bf16.mxu0 0
    %2543 = vmatpush1.bf16.msra.mxu0 0
    %2544 = vmatprep.subr.bf16.mxu0 0
    %2545 = vmatpush1.bf16.msra.mxu0 0
    %2546 = vmatprep.subr.bf16.mxu0 0
    %2547 = vmatpush1.bf16.msra.mxu0 0
    %2548 = vmatprep.subr.bf16.mxu0 0
    %2549 = vmatpush1.bf16.msra.mxu0 0
    %2550 = vmatprep.subr.bf16.mxu0 0
    %2551 = vmatpush1.bf16.msra.mxu0 %v2534
    %2552 = vmatprep.subr.bf16.mxu0 0
    %2553 = vmatpush2.bf16.msra.mxu0 0
    %2554 = vmatprep.subr.bf16.mxu0 0
    %2555 = vmatpush2.bf16.msra.mxu0 0
    %2556 = vmatprep.subr.bf16.mxu0 0
    %2557 = vmatpush2.bf16.msra.mxu0 0
    %2558 = vmatprep.subr.bf16.mxu0 0
    %2559 = vmatpush2.bf16.msra.mxu0 0
    %2560 = vmatprep.subr.bf16.mxu0 0
    %2561 = vmatpush2.bf16.msra.mxu0 0
    %2562 = vmatprep.subr.bf16.mxu0 0
    %2563 = vmatpush2.bf16.msra.mxu0 0
    %2564 = vmatprep.subr.bf16.mxu0 0
    %2565 = vmatpush2.bf16.msra.mxu0 0
    %2566 = vmatprep.subr.bf16.mxu0 0
    %2567 = vmatpush2.bf16.msra.mxu0 0
    %2568 = vmatprep.mubr.bf16.mxu0 0
    %2569 = vmatmul.mubr.bf16.gmra.mxu0 %v2531
    %v2570 = vpop.f32.mrf.mxu0
    %v2571 = vadd.f32 0.0, %v2570
    %v2572 = vpop.f32.mrf.mxu0
    %v2573 = vpop.f32.mrf.mxu0
    %v2574 = vpop.f32.mrf.mxu0
    %2575 = vdwg.mxu0
    %v2577 = vsel %vm1465, %v2335, 0
    %v2580 = vsel %vm1964, %v2343, 0
    %2582 = vmatprep.subr.bf16.mxu0 0
    %2583 = vmatpush1.bf16.msra.mxu0 0
    %2584 = vmatprep.subr.bf16.mxu0 0
    %2585 = vmatpush1.bf16.msra.mxu0 0
    %2586 = vmatprep.subr.bf16.mxu0 0
    %2587 = vmatpush1.bf16.msra.mxu0 0
    %2588 = vmatprep.subr.bf16.mxu0 0
    %2589 = vmatpush1.bf16.msra.mxu0 0
    %2590 = vmatprep.subr.bf16.mxu0 0
    %2591 = vmatpush1.bf16.msra.mxu0 0
    %2592 = vmatprep.subr.bf16.mxu0 0
    %2593 = vmatpush1.bf16.msra.mxu0 0
    %2594 = vmatprep.subr.bf16.mxu0 0
    %2595 = vmatpush1.bf16.msra.mxu0 0
    %2596 = vmatprep.subr.bf16.mxu0 0
    %2597 = vmatpush1.bf16.msra.mxu0 %v2580
    %2598 = vmatprep.subr.bf16.mxu0 0
    %2599 = vmatpush2.bf16.msra.mxu0 0
    %2600 = vmatprep.subr.bf16.mxu0 0
    %2601 = vmatpush2.bf16.msra.mxu0 0
    %2602 = vmatprep.subr.bf16.mxu0 0
    %2603 = vmatpush2.bf16.msra.mxu0 0
    %2604 = vmatprep.subr.bf16.mxu0 0
    %2605 = vmatpush2.bf16.msra.mxu0 0
    %2606 = vmatprep.subr.bf16.mxu0 0
    %2607 = vmatpush2.bf16.msra.mxu0 0
    %2608 = vmatprep.subr.bf16.mxu0 0
    %2609 = vmatpush2.bf16.msra.mxu0 0
    %2610 = vmatprep.subr.bf16.mxu0 0
    %2611 = vmatpush2.bf16.msra.mxu0 0
    %2612 = vmatprep.subr.bf16.mxu0 0
    %2613 = vmatpush2.bf16.msra.mxu0 0
    %2614 = vmatprep.mubr.bf16.mxu0 0
    %2615 = vmatmul.mubr.bf16.gmra.mxu0 %v2577
    %v2616 = vpop.f32.mrf.mxu0
    %v2617 = vadd.f32 0.0, %v2616
    %v2618 = vpop.f32.mrf.mxu0
    %v2619 = vpop.f32.mrf.mxu0
    %v2620 = vpop.f32.mrf.mxu0
    %2621 = vdwg.mxu0
    %v2623 = vsel %vm1465, %v2336, 0
    %v2626 = vsel %vm1964, %v2344, 0
    %2628 = vmatprep.subr.bf16.mxu0 0
    %2629 = vmatpush1.bf16.msra.mxu0 0
    %2630 = vmatprep.subr.bf16.mxu0 0
    %2631 = vmatpush1.bf16.msra.mxu0 0
    %2632 = vmatprep.subr.bf16.mxu0 0
    %2633 = vmatpush1.bf16.msra.mxu0 0
    %2634 = vmatprep.subr.bf16.mxu0 0
    %2635 = vmatpush1.bf16.msra.mxu0 0
    %2636 = vmatprep.subr.bf16.mxu0 0
    %2637 = vmatpush1.bf16.msra.mxu0 0
    %2638 = vmatprep.subr.bf16.mxu0 0
    %2639 = vmatpush1.bf16.msra.mxu0 0
    %2640 = vmatprep.subr.bf16.mxu0 0
    %2641 = vmatpush1.bf16.msra.mxu0 0
    %2642 = vmatprep.subr.bf16.mxu0 0
    %2643 = vmatpush1.bf16.msra.mxu0 %v2626
    %2644 = vmatprep.subr.bf16.mxu0 0
    %2645 = vmatpush2.bf16.msra.mxu0 0
    %2646 = vmatprep.subr.bf16.mxu0 0
    %2647 = vmatpush2.bf16.msra.mxu0 0
    %2648 = vmatprep.subr.bf16.mxu0 0
    %2649 = vmatpush2.bf16.msra.mxu0 0
    %2650 = vmatprep.subr.bf16.mxu0 0
    %2651 = vmatpush2.bf16.msra.mxu0 0
    %2652 = vmatprep.subr.bf16.mxu0 0
    %2653 = vmatpush2.bf16.msra.mxu0 0
    %2654 = vmatprep.subr.bf16.mxu0 0
    %2655 = vmatpush2.bf16.msra.mxu0 0
    %2656 = vmatprep.subr.bf16.mxu0 0
    %2657 = vmatpush2.bf16.msra.mxu0 0
    %2658 = vmatprep.subr.bf16.mxu0 0
    %2659 = vmatpush2.bf16.msra.mxu0 0
    %2660 = vmatprep.mubr.bf16.mxu0 0
    %2661 = vmatmul.mubr.bf16.gmra.mxu0 %v2623
    %v2662 = vpop.f32.mrf.mxu0
    %v2663 = vadd.f32 0.0, %v2662
    %v2664 = vpop.f32.mrf.mxu0
    %v2665 = vpop.f32.mrf.mxu0
    %v2666 = vpop.f32.mrf.mxu0
    %2667 = vdwg.mxu0
    %v2669 = vsel %vm1465, %v2337, 0
    %v2672 = vsel %vm1964, %v2345, 0
    %2674 = vmatprep.subr.bf16.mxu0 0
    %2675 = vmatpush1.bf16.msra.mxu0 0
    %2676 = vmatprep.subr.bf16.mxu0 0
    %2677 = vmatpush1.bf16.msra.mxu0 0
    %2678 = vmatprep.subr.bf16.mxu0 0
    %2679 = vmatpush1.bf16.msra.mxu0 0
    %2680 = vmatprep.subr.bf16.mxu0 0
    %2681 = vmatpush1.bf16.msra.mxu0 0
    %2682 = vmatprep.subr.bf16.mxu0 0
    %2683 = vmatpush1.bf16.msra.mxu0 0
    %2684 = vmatprep.subr.bf16.mxu0 0
    %2685 = vmatpush1.bf16.msra.mxu0 0
    %2686 = vmatprep.subr.bf16.mxu0 0
    %2687 = vmatpush1.bf16.msra.mxu0 0
    %2688 = vmatprep.subr.bf16.mxu0 0
    %2689 = vmatpush1.bf16.msra.mxu0 %v2672
    %2690 = vmatprep.subr.bf16.mxu0 0
    %2691 = vmatpush2.bf16.msra.mxu0 0
    %2692 = vmatprep.subr.bf16.mxu0 0
    %2693 = vmatpush2.bf16.msra.mxu0 0
    %2694 = vmatprep.subr.bf16.mxu0 0
    %2695 = vmatpush2.bf16.msra.mxu0 0
    %2696 = vmatprep.subr.bf16.mxu0 0
    %2697 = vmatpush2.bf16.msra.mxu0 0
    %2698 = vmatprep.subr.bf16.mxu0 0
    %2699 = vmatpush2.bf16.msra.mxu0 0
    %2700 = vmatprep.subr.bf16.mxu0 0
    %2701 = vmatpush2.bf16.msra.mxu0 0
    %2702 = vmatprep.subr.bf16.mxu0 0
    %2703 = vmatpush2.bf16.msra.mxu0 0
    %2704 = vmatprep.subr.bf16.mxu0 0
    %2705 = vmatpush2.bf16.msra.mxu0 0
    %2706 = vmatprep.mubr.bf16.mxu0 0
    %2707 = vmatmul.mubr.bf16.gmra.mxu0 %v2669
    %v2708 = vpop.f32.mrf.mxu0
    %v2709 = vadd.f32 0.0, %v2708
    %v2710 = vpop.f32.mrf.mxu0
    %v2711 = vpop.f32.mrf.mxu0
    %v2712 = vpop.f32.mrf.mxu0
    %2713 = vdwg.mxu0
    %v2714 = vadd.f32 %v2387, 0.0
    %v2715 = vadd.f32 %v2714, %v2433
    %v2716 = vadd.f32 %v2715, %v2479
    %v2717 = vadd.f32 %v2716, %v2525
    %v2718 = vadd.f32 %v2571, 0.0
    %v2719 = vadd.f32 %v2718, %v2617
    %v2720 = vadd.f32 %v2719, %v2663
    %v2721 = vadd.f32 %v2720, %v2709
    %v2722 = vld [vmem:[%s7] sm:$0x1]
    %v2724 = vlaneseq
    %v2725 = vshrl.u32 %v2724, 7
    %v2726 = vsub.s32 0, %v2725
    %v2727 = vrot.slane %v2722, %v2726
    %v2729 = vadd.f32 %v2717, %v2727
    %v2730 = vadd.f32 %v2721, %v2727
    %v2731 = vadd.f32 %v49, %v2729
    %v2732 = vadd.f32 %v50, %v2730
    %v2733 = vld [vmem:[%s8] sm:$0x1]
    %v2734 = vld [vmem:[%s9] sm:$0x1]
    %v2735 = vsel %vm53, %v2731, 0.0
    %2736 = vadd.xlane.f32.xlu0 %v2735
    %v2737 = vpop.xlane.xlu0 %2736
    %v2738 = vsel %vm53, %v2732, 0.0
    %2739 = vadd.xlane.f32.xlu0 %v2738
    %v2740 = vpop.xlane.xlu0 %2739
    %v2741 = vmul.f32 %v2737, %v60
    %v2742 = vmul.f32 %v2740, %v60
    %v2743 = vsub.f32 %v2731, %v2741
    %v2744 = vsub.f32 %v2732, %v2742
    %v2745 = vmul.f32 %v2743, %v2743
    %v2746 = vmul.f32 %v2744, %v2744
    %v2747 = vsel %vm53, %v2745, 0.0
    %2748 = vadd.xlane.f32.xlu0 %v2747
    %v2749 = vpop.xlane.xlu0 %2748
    %v2750 = vsel %vm53, %v2746, 0.0
    %2751 = vadd.xlane.f32.xlu0 %v2750
    %v2752 = vpop.xlane.xlu0 %2751
    %v2753 = vmul.f32 %v2749, %v60
    %v2754 = vmul.f32 %v2752, %v60
    %v2755 = vadd.f32 %v2753, 1e-05
    %v2756 = vadd.f32 %v2754, 1e-05
    %v2757 = vrsqrt.pop %v2755
    %v2758 = vrsqrt.pop %v2756
    %v2759 = vmul.f32 %v2743, %v2757
    %v2760 = vmul.f32 %v2744, %v2758
    %v2762 = vlaneseq
    %v2763 = vshrl.u32 %v2762, 7
    %v2764 = vsub.s32 0, %v2763
    %v2765 = vrot.slane %v2733, %v2764
    %v2767 = vmul.f32 %v2759, %v2765
    %v2768 = vmul.f32 %v2760, %v2765
    %v2770 = vlaneseq
    %v2771 = vshrl.u32 %v2770, 7
    %v2772 = vsub.s32 0, %v2771
    %v2773 = vrot.slane %v2734, %v2772
    %v2775 = vadd.f32 %v2767, %v2773
    %v2776 = vadd.f32 %v2768, %v2773
    %v2777 = vpack.c.bf16 %v2776, %v2775
    %v2778 = vld [vmem:[%s10] sm:$0xf]
    %v2779 = vld [vmem:[%s10 + $0x4] sm:$0xf]
    %v2780 = vld [vmem:[%s10 + $0x8] sm:$0xf]
    %v2781 = vld [vmem:[%s10 + $0xc] sm:$0xf]
    %v2782 = vld [vmem:[%s11] sm:$0x1]
    %v2784 = vlaneseq
    %v2785 = vshrl.u32 %v2784, 7
    %v2786 = vsub.s32 0, %v2785
    %v2787 = vrot.slane %v2782, %v2786
    %v2793 = vunpack.c.l.b16 %v2778
    %v2794 = vunpack.c.l.b16 %v2779
    %v2795 = vunpack.c.l.b16 %v2780
    %v2796 = vunpack.c.l.b16 %v2781
    %v2797 = vpack.c.b16 %v2794, %v2793
    %v2798 = vpack.c.b16 %v2796, %v2795
    %v2802 = vsel %vm53, %v2777, 0
    %2804 = vmatprep.subr.bf16.mxu0 0
    %2805 = vmatpush1.bf16.msra.mxu0 0
    %2806 = vmatprep.subr.bf16.mxu0 0
    %2807 = vmatpush1.bf16.msra.mxu0 0
    %2808 = vmatprep.subr.bf16.mxu0 0
    %2809 = vmatpush1.bf16.msra.mxu0 0
    %2810 = vmatprep.subr.bf16.mxu0 0
    %2811 = vmatpush1.bf16.msra.mxu0 0
    %2812 = vmatprep.subr.bf16.mxu0 0
    %2813 = vmatpush1.bf16.msra.mxu0 0
    %2814 = vmatprep.subr.bf16.mxu0 0
    %2815 = vmatpush1.bf16.msra.mxu0 0
    %2816 = vmatprep.subr.bf16.mxu0 0
    %2817 = vmatpush1.bf16.msra.mxu0 %v2798
    %2818 = vmatprep.subr.bf16.mxu0 0
    %2819 = vmatpush1.bf16.msra.mxu0 %v2797
    %2820 = vmatprep.subr.bf16.mxu0 0
    %2821 = vmatpush2.bf16.msra.mxu0 0
    %2822 = vmatprep.subr.bf16.mxu0 0
    %2823 = vmatpush2.bf16.msra.mxu0 0
    %2824 = vmatprep.subr.bf16.mxu0 0
    %2825 = vmatpush2.bf16.msra.mxu0 0
    %2826 = vmatprep.subr.bf16.mxu0 0
    %2827 = vmatpush2.bf16.msra.mxu0 0
    %2828 = vmatprep.subr.bf16.mxu0 0
    %2829 = vmatpush2.bf16.msra.mxu0 0
    %2830 = vmatprep.subr.bf16.mxu0 0
    %2831 = vmatpush2.bf16.msra.mxu0 0
    %2832 = vmatprep.subr.bf16.mxu0 0
    %2833 = vmatpush2.bf16.msra.mxu0 0
    %2834 = vmatprep.subr.bf16.mxu0 0
    %2835 = vmatpush2.bf16.msra.mxu0 0
    %2836 = vmatprep.mubr.bf16.mxu0 0
    %2837 = vmatmul.mubr.bf16.gmra.mxu0 %v2802
    %v2838 = vpop.f32.mrf.mxu0
    %v2839 = vadd.f32 %v2787, %v2838
    %v2840 = vpop.f32.mrf.mxu0
    %v2841 = vpop.f32.mrf.mxu0
    %v2842 = vadd.f32 %v2787, %v2841
    %v2843 = vpop.f32.mrf.mxu0
    %2844 = vdwg.mxu0
    %v2845 = vmax.f32 %v2839, 0.0
    %v2846 = vmax.f32 %v2842, 0.0
    %v2847 = vpack.c.bf16 %v2846, %v2845
    %v2848 = vld [vmem:[%s12] sm:$0xf]
    %v2849 = vld [vmem:[%s12 + $0x4] sm:$0xf]
    %v2850 = vld [vmem:[%s12 + $0x8] sm:$0xf]
    %v2851 = vld [vmem:[%s12 + $0xc] sm:$0xf]
    %v2852 = vld [vmem:[%s12 + $0x10] sm:$0xf]
    %v2853 = vld [vmem:[%s12 + $0x14] sm:$0xf]
    %v2854 = vld [vmem:[%s12 + $0x18] sm:$0xf]
    %v2855 = vld [vmem:[%s12 + $0x1c] sm:$0xf]
    %v2856 = vld [vmem:[%s12 + $0x20] sm:$0xf]
    %v2857 = vld [vmem:[%s12 + $0x24] sm:$0xf]
    %v2858 = vld [vmem:[%s12 + $0x28] sm:$0xf]
    %v2859 = vld [vmem:[%s12 + $0x2c] sm:$0xf]
    %v2860 = vld [vmem:[%s12 + $0x30] sm:$0xf]
    %v2861 = vld [vmem:[%s12 + $0x34] sm:$0xf]
    %v2862 = vld [vmem:[%s12 + $0x38] sm:$0xf]
    %v2863 = vld [vmem:[%s12 + $0x3c] sm:$0xf]
    %v2864 = vld [vmem:[%s13] sm:$0x1]
    %v2866 = vlaneseq
    %v2867 = vshrl.u32 %v2866, 7
    %v2868 = vsub.s32 0, %v2867
    %v2869 = vrot.slane %v2864, %v2868
    %v2887 = vunpack.c.l.b16 %v2848
    %v2888 = vunpack.c.l.b16 %v2849
    %v2889 = vunpack.c.l.b16 %v2850
    %v2890 = vunpack.c.l.b16 %v2851
    %v2891 = vunpack.c.l.b16 %v2852
    %v2892 = vunpack.c.l.b16 %v2853
    %v2893 = vunpack.c.l.b16 %v2854
    %v2894 = vunpack.c.l.b16 %v2855
    %v2895 = vunpack.c.l.b16 %v2856
    %v2896 = vunpack.c.l.b16 %v2857
    %v2897 = vunpack.c.l.b16 %v2858
    %v2898 = vunpack.c.l.b16 %v2859
    %v2899 = vunpack.c.l.b16 %v2860
    %v2900 = vunpack.c.l.b16 %v2861
    %v2901 = vunpack.c.l.b16 %v2862
    %v2902 = vunpack.c.l.b16 %v2863
    %v2903 = vpack.c.b16 %v2888, %v2887
    %v2904 = vpack.c.b16 %v2890, %v2889
    %v2905 = vpack.c.b16 %v2892, %v2891
    %v2906 = vpack.c.b16 %v2894, %v2893
    %v2907 = vpack.c.b16 %v2896, %v2895
    %v2908 = vpack.c.b16 %v2898, %v2897
    %v2909 = vpack.c.b16 %v2900, %v2899
    %v2910 = vpack.c.b16 %v2902, %v2901
    %2919 = vmatprep.subr.bf16.mxu0 0
    %2920 = vmatpush1.bf16.msra.mxu0 %v2910
    %2921 = vmatprep.subr.bf16.mxu0 0
    %2922 = vmatpush1.bf16.msra.mxu0 %v2909
    %2923 = vmatprep.subr.bf16.mxu0 0
    %2924 = vmatpush1.bf16.msra.mxu0 %v2908
    %2925 = vmatprep.subr.bf16.mxu0 0
    %2926 = vmatpush1.bf16.msra.mxu0 %v2907
    %2927 = vmatprep.subr.bf16.mxu0 0
    %2928 = vmatpush1.bf16.msra.mxu0 %v2906
    %2929 = vmatprep.subr.bf16.mxu0 0
    %2930 = vmatpush1.bf16.msra.mxu0 %v2905
    %2931 = vmatprep.subr.bf16.mxu0 0
    %2932 = vmatpush1.bf16.msra.mxu0 %v2904
    %2933 = vmatprep.subr.bf16.mxu0 0
    %2934 = vmatpush1.bf16.msra.mxu0 %v2903
    %2935 = vmatprep.subr.bf16.mxu0 0
    %2936 = vmatpush2.bf16.msra.mxu0 0
    %2937 = vmatprep.subr.bf16.mxu0 0
    %2938 = vmatpush2.bf16.msra.mxu0 0
    %2939 = vmatprep.subr.bf16.mxu0 0
    %2940 = vmatpush2.bf16.msra.mxu0 0
    %2941 = vmatprep.subr.bf16.mxu0 0
    %2942 = vmatpush2.bf16.msra.mxu0 0
    %2943 = vmatprep.subr.bf16.mxu0 0
    %2944 = vmatpush2.bf16.msra.mxu0 0
    %2945 = vmatprep.subr.bf16.mxu0 0
    %2946 = vmatpush2.bf16.msra.mxu0 0
    %2947 = vmatprep.subr.bf16.mxu0 0
    %2948 = vmatpush2.bf16.msra.mxu0 0
    %2949 = vmatprep.subr.bf16.mxu0 0
    %2950 = vmatpush2.bf16.msra.mxu0 0
    %2951 = vmatprep.mubr.bf16.mxu0 0
    %2952 = vmatmul.mubr.bf16.gmra.mxu0 %v2847
    %v2953 = vpop.f32.mrf.mxu0
    %v2954 = vadd.f32 %v2869, %v2953
    %v2955 = vpop.f32.mrf.mxu0
    %v2956 = vpop.f32.mrf.mxu0
    %v2957 = vadd.f32 %v2869, %v2956
    %v2958 = vpop.f32.mrf.mxu0
    %2959 = vdwg.mxu0
    %v2960 = vadd.f32 %v2731, %v2954
    %v2961 = vadd.f32 %v2732, %v2957
    %2962 = vst.msk [vmem:[#allocation2] sm:$0xff] %vm53, %v2960
    %2963 = vst.msk [vmem:[#allocation2 + $0x8] sm:$0xff] %vm53, %v2961
    // Predicated region
    $region58: #{tpu_custom_call.1} parent=1 // pred_check
      _
    $region59: #{tpu_custom_call.1} parent=1 // pred_check_branch
      %2965 = sbr.rel (0) target = $region61
    $region60: #{tpu_custom_call.1} parent=1 // pred_region
      %s2967 = ssub.s32 256, 256
      %2968 = vsyncadd [#allocation3], %s2967
      %s2969 = sshll.u32 [#allocation2], 4
      %s2970 = int_to_ptr.vmem [resolvable:$true] %s2969
      %2975 = dma.vmem_to_hbm [thread:$0]  %s2970, 256, %s14, [#allocation3], 128, 128, 8
    $region61: #{tpu_custom_call.1} parent=1 // pred_fallthru
      _
    // Predicated region
    $region62: #{tpu_custom_call.1} parent=1 // pred_check
      _
    $region63: #{tpu_custom_call.1} parent=1 // pred_check_branch
      %2977 = sbr.rel (0) target = $region65
    $region64: #{tpu_custom_call.1} parent=1 // pred_region
      %2978 = dma.done [#allocation3], 256
    $region65: #{tpu_custom_call.1} parent=1 // pred_fallthru
      _
    %2979 = vsyncpa [#allocation3], 1

</llo_original>
